<compile_context>
chip_gen: v6e
topology: v6e:2x2x1
jax: 0.10.0
libtpu: 0.0.40
codegen_flags: <defaults>
</compile_context>

<pallas_src>
import functools
import math

import jax
import jax.numpy as jnp
from jax.experimental import pallas as pl
from jax.experimental.pallas import tpu as pltpu


# ----------------------------- helpers ---------------------------------------

def _vmem_limit_bytes():
    # Generation-aware VMEM budget with ~25% headroom (64 MiB/TC on v7x,
    # 128 MiB on v5e/v6e).  Fallback is safe on every generation.
    try:
        info = pltpu.get_tpu_info()
        cap = int(getattr(info, "vmem_capacity_bytes", 64 * 1024 * 1024))
    except Exception:
        cap = 64 * 1024 * 1024
    return (cap * 3) // 4


def _pick_batch_tile(batch, seq_len):
    # Prefer to (a) stream the stacked weights as few times as possible and
    # (b) fill the MXU M dim (Bt*S >= 256) while keeping >= 2 parallel grid
    # steps for the v7x dual-TensorCore case when the batch allows it.
    for bt in range(batch, 0, -1):
        if batch % bt == 0 and bt * seq_len >= 256 and batch // bt >= 2:
            return bt
    return batch  # small batch: fold everything (weight streaming dominates)


def _pick_vocab_tile(v_pad, bt, seq_len, d_model, vmem_limit):
    # Largest multiple-of-128 divisor of v_pad whose double-buffered working
    # set (fp32 logits block + bf16 embedding tile) stays within ~half the
    # VMEM budget.  v_pad is always a multiple of 128 (padded in prepare).
    budget = vmem_limit // 2
    best = 128
    t = 128
    while t <= v_pad:
        if v_pad % t == 0:
            need = 2 * (bt * seq_len * t * 4 + d_model * t * 2)
            if need <= budget:
                best = t
        t += 128
    return best


def _layer_norm(h, g, b, eps):
    mu = jnp.mean(h, axis=-1, keepdims=True)
    var = jnp.mean((h - mu) ** 2, axis=-1, keepdims=True)
    return (h - mu) * jax.lax.rsqrt(var + eps) * g + b


def _gelu_exact(x):
    # nn.GELU() default = exact erf-based GELU (Python-float constants only).
    return 0.5 * x * (1.0 + jax.lax.erf(x * 0.7071067811865476))


# ----------------------------- kernels ----------------------------------------

def fused_blocks_kernel(
    x_ref,
    ln1_g, ln1_b, w_qkv, b_qkv, w_o, b_o,
    ln2_g, ln2_b, w_ff1, b_ff1, w_ff2, b_ff2,
    lnf_g, lnf_b,
    o_ref,
    x_sc,
    *, n_heads, head_dim, seq_len, eps,
):
    """One grid step == (one batch block, one layer).  The fp32 residual stream
    (Bt*S, D) is carried across the (arbitrary) layer axis in VMEM scratch."""
    layer = pl.program_id(1)

    @pl.when(layer == 0)
    def _():
        x_sc[...] = x_ref[...].reshape(x_sc.shape).astype(jnp.float32)

    x = x_sc[...]                                   # (Bt*S, D) fp32 residual
    m_rows, d_model = x.shape

    # ---- attention sub-block (pre-LN) ----
    h = _layer_norm(x, ln1_g[0], ln1_b[0], eps).astype(jnp.bfloat16)
    qkv = jnp.dot(h, w_qkv[0], preferred_element_type=jnp.float32) + b_qkv[0]
    qkv = qkv.astype(jnp.bfloat16)                  # (Bt*S, 3D) bf16 operands

    # Additive causal bias, built ONCE per grid step (shared by all rows/heads)
    row = jax.lax.broadcasted_iota(jnp.int32, (seq_len, seq_len), 0)
    col = jax.lax.broadcasted_iota(jnp.int32, (seq_len, seq_len), 1)
    bias = (col > row).astype(jnp.float32) * (-1e30)

    wo = w_o[0]                                     # (D, D) bf16
    # TODO(synk): per-(batch-row, head) statically unrolled loop; fine for
    # small Bt*H, for very large head counts a 3-D batched formulation would
    # reduce trace size.
    row_outs = []
    for b in range(m_rows // seq_len):
        r0 = b * seq_len
        acc = jnp.zeros((seq_len, d_model), jnp.float32)
        for hh in range(n_heads):
            c0 = hh * head_dim
            q_h = qkv[r0:r0 + seq_len, c0:c0 + head_dim]
            k_h = qkv[r0:r0 + seq_len, d_model + c0:d_model + c0 + head_dim]
            v_h = qkv[r0:r0 + seq_len,
                      2 * d_model + c0:2 * d_model + c0 + head_dim]
            # 1/sqrt(head_dim) is pre-folded into the Q columns of w_qkv/b_qkv.
            s = jax.lax.dot_general(
                q_h, k_h, dimension_numbers=(((1,), (1,)), ((), ())),
                preferred_element_type=jnp.float32)          # (S, S), no k.T
            s = s + bias
            mx = jnp.max(s, axis=-1, keepdims=True)
            p = jnp.exp(s - mx)
            l_sum = jnp.sum(p, axis=-1, keepdims=True)
            ho = jnp.dot(p.astype(jnp.bfloat16), v_h,
                         preferred_element_type=jnp.float32)  # (S, hd)
            # Deferred softmax normalization: scale the (S, hd) output.
            ho = (ho * pl.reciprocal(l_sum, approx=True)).astype(jnp.bfloat16)
            # Per-head W_O accumulation (no lane concat, bounded live ranges).
            acc = acc + jnp.dot(ho, wo[c0:c0 + head_dim, :],
                                preferred_element_type=jnp.float32)
        row_outs.append(acc)
    attn = row_outs[0] if len(row_outs) == 1 else jnp.concatenate(row_outs, 0)
    x = x + attn + b_o[0]                           # residual + output bias

    # ---- feed-forward sub-block (pre-LN) ----
    h2 = _layer_norm(x, ln2_g[0], ln2_b[0], eps).astype(jnp.bfloat16)
    f = jnp.dot(h2, w_ff1[0], preferred_element_type=jnp.float32) + b_ff1[0]
    f = _gelu_exact(f).astype(jnp.bfloat16)
    f = jnp.dot(f, w_ff2[0], preferred_element_type=jnp.float32) + b_ff2[0]
    x = x + f                                       # residual

    x_sc[...] = x

    @pl.when(layer == pl.num_programs(1) - 1)
    def _():
        # Final LayerNorm fused here; emit bf16 hidden states for the lm_head.
        y = _layer_norm(x, lnf_g[...], lnf_b[...], eps)
        o_ref[...] = y.reshape(o_ref.shape).astype(o_ref.dtype)


def lm_head_kernel(x_ref, emb_ref, o_ref):
    # x_ref: (Bt, S, D) bf16 (final LN already applied); emb_ref: (D, TILE_V)
    bt, s, d = x_ref.shape
    h = x_ref[...].reshape(bt * s, d)
    logits = jnp.dot(h, emb_ref[...], preferred_element_type=jnp.float32)
    o_ref[...] = logits.reshape(o_ref.shape)


# ----------------------------- wrappers ----------------------------------------

def run_fused_blocks(x, sp, lnf_g, lnf_b, *, n_heads, head_dim, eps,
                     vmem_limit):
    B, S, D = x.shape
    L = sp["w_qkv"].shape[0]
    bt = _pick_batch_tile(B, S)

    def wspec(shape):
        n_rest = len(shape) - 1
        return pl.BlockSpec((1,) + tuple(shape[1:]),
                            lambda b, l, n=n_rest: (l,) + (0,) * n)

    param_list = [
        sp["ln1_g"], sp["ln1_b"], sp["w_qkv"], sp["b_qkv"],
        sp["w_o"], sp["b_o"], sp["ln2_g"], sp["ln2_b"],
        sp["w_ff1"], sp["b_ff1"], sp["w_ff2"], sp["b_ff2"],
    ]
    kernel = functools.partial(
        fused_blocks_kernel,
        n_heads=n_heads, head_dim=head_dim, seq_len=S, eps=eps)
    return pl.pallas_call(
        kernel,
        out_shape=jax.ShapeDtypeStruct((B, S, D), jnp.bfloat16),
        grid=(B // bt, L),
        in_specs=[pl.BlockSpec((bt, S, D), lambda b, l: (b, 0, 0))]
        + [wspec(w.shape) for w in param_list]
        + [pl.BlockSpec(lnf_g.shape, lambda b, l: (0, 0)),
           pl.BlockSpec(lnf_b.shape, lambda b, l: (0, 0))],
        out_specs=pl.BlockSpec((bt, S, D), lambda b, l: (b, 0, 0)),
        scratch_shapes=[pltpu.VMEM((bt * S, D), jnp.float32)],
        compiler_params=pltpu.CompilerParams(
            dimension_semantics=("parallel", "arbitrary"),
            vmem_limit_bytes=vmem_limit),
    )(x, *param_list, lnf_g, lnf_b)


def run_lm_head(x_bf16, emb_t_bf16, vocab_size, *, vmem_limit):
    B, S, D = x_bf16.shape
    V_pad = emb_t_bf16.shape[1]
    bt = B  # small x block; fold batch so the emb tile is reused across it
    tile_v = _pick_vocab_tile(V_pad, bt, S, D, vmem_limit)
    logits = pl.pallas_call(
        lm_head_kernel,
        out_shape=jax.ShapeDtypeStruct((B, S, V_pad), jnp.float32),
        grid=(B // bt, V_pad // tile_v),
        in_specs=[
            pl.BlockSpec((bt, S, D), lambda b, vi: (b, 0, 0)),
            pl.BlockSpec((D, tile_v), lambda b, vi: (0, vi)),
        ],
        out_specs=pl.BlockSpec((bt, S, tile_v), lambda b, vi: (b, 0, vi)),
        compiler_params=pltpu.CompilerParams(
            dimension_semantics=("parallel", "parallel"),
            vmem_limit_bytes=vmem_limit),
    )(x_bf16, emb_t_bf16)
    return logits[..., :vocab_size]


def prepare_params(raw, cfg):
    """Stack per-layer weights on a leading layer axis; fuse QKV (with the
    1/sqrt(head_dim) scale folded into the Q columns); cast matmul weights to
    bf16; pad + transpose the tied embedding once for the lm_head."""
    blocks = raw["blocks"]
    scale = 1.0 / math.sqrt(cfg["head_dim"])

    def stack(name, dtype=None):
        a = jnp.stack([b[name] for b in blocks], axis=0)
        return a.astype(dtype) if dtype is not None else a

    w_qkv = jnp.stack(
        [jnp.concatenate([b["wq"] * scale, b["wk"], b["wv"]], axis=1)
         for b in blocks], axis=0).astype(jnp.bfloat16)
    b_qkv = jnp.stack(
        [jnp.concatenate([b["bq"] * scale, b["bk"], b["bv"]], axis=1)
         for b in blocks], axis=0)
    stacked = dict(
        ln1_g=stack("ln1_g"), ln1_b=stack("ln1_b"),
        w_qkv=w_qkv, b_qkv=b_qkv,
        w_o=stack("wo", jnp.bfloat16), b_o=stack("bo"),
        ln2_g=stack("ln2_g"), ln2_b=stack("ln2_b"),
        w_ff1=stack("w1", jnp.bfloat16), b_ff1=stack("b1"),
        w_ff2=stack("w2", jnp.bfloat16), b_ff2=stack("b2"),
    )

    tok_emb = raw["tok_emb"]
    V, D = tok_emb.shape
    V_pad = ((V + 127) // 128) * 128
    emb_pad = jnp.pad(tok_emb, ((0, V_pad - V), (0, 0)))
    emb_t_bf16 = jnp.transpose(emb_pad).astype(jnp.bfloat16)   # (D, V_pad)

    return dict(
        tok_emb=tok_emb,
        emb_t_bf16=emb_t_bf16,
        vocab_size=V,
        pos_emb=raw["pos_emb"],
        lnf_g=raw["lnf_g"], lnf_b=raw["lnf_b"],
        stacked=stacked,
    )


def decoder_only_transformer_forward(input_ids, params, cfg):
    """Full forward: (B, S) int32 token ids -> (B, S, vocab) fp32 logits."""
    B, S = input_ids.shape
    vmem_limit = _vmem_limit_bytes()
    # glue: embedding gathers (dropout is identity in eval mode)
    x = jnp.take(params["tok_emb"], input_ids, axis=0)        # (B, S, D) fp32
    x = x + params["pos_emb"][:S][None, :, :]
    h = run_fused_blocks(
        x, params["stacked"], params["lnf_g"], params["lnf_b"],
        n_heads=cfg["n_heads"], head_dim=cfg["head_dim"], eps=cfg["eps"],
        vmem_limit=vmem_limit)
    logits = run_lm_head(
        h, params["emb_t_bf16"], params["vocab_size"], vmem_limit=vmem_limit)
    return logits


# ----------------------------- reference (pure JAX, fp32) ----------------------

def reference_forward(input_ids, raw, cfg):
    B, S = input_ids.shape
    D = cfg["d_model"]
    H, hd, eps = cfg["n_heads"], cfg["head_dim"], cfg["eps"]
    x = jnp.take(raw["tok_emb"], input_ids, axis=0)
    x = x + raw["pos_emb"][:S][None, :, :]

    def ln(h, g, b):
        mu = jnp.mean(h, -1, keepdims=True)
        var = jnp.mean((h - mu) ** 2, -1, keepdims=True)
        return (h - mu) / jnp.sqrt(var + eps) * g + b

    causal = jnp.triu(jnp.ones((S, S), bool), 1)
    for p in raw["blocks"]:
        h = ln(x, p["ln1_g"], p["ln1_b"])
        q = h @ p["wq"] + p["bq"]
        k = h @ p["wk"] + p["bk"]
        v = h @ p["wv"] + p["bv"]
        q = q.reshape(B, S, H, hd).transpose(0, 2, 1, 3)
        k = k.reshape(B, S, H, hd).transpose(0, 2, 1, 3)
        v = v.reshape(B, S, H, hd).transpose(0, 2, 1, 3)
        s = jnp.einsum("bhqd,bhkd->bhqk", q, k) / math.sqrt(hd)
        s = jnp.where(causal[None, None], -jnp.inf, s)
        w = jax.nn.softmax(s, axis=-1)
        a = jnp.einsum("bhqk,bhkd->bhqd", w, v)
        a = a.transpose(0, 2, 1, 3).reshape(B, S, D)
        x = x + (a @ p["wo"] + p["bo"])
        h2 = ln(x, p["ln2_g"], p["ln2_b"])
        f = h2 @ p["w1"] + p["b1"]
        f = 0.5 * f * (1.0 + jax.lax.erf(f / jnp.sqrt(2.0)))
        x = x + (f @ p["w2"] + p["b2"])
    x = ln(x, raw["lnf_g"], raw["lnf_b"])
    return x @ raw["tok_emb"].T


# ----------------------------- main ---------------------------------------------

if __name__ == "__main__":
    # Small config consistent with the module
    vocab_size, d_model, n_layers, n_heads = 256, 64, 2, 4
    d_ff, max_seq_len = 128, 16
    batch, seq_len = 2, 8
    cfg = dict(d_model=d_model, n_heads=n_heads, head_dim=d_model // n_heads,
               eps=1e-5)
    std = 0.02

    key = jax.random.PRNGKey(0)

    def nrm(k, shape):
        return std * jax.random.normal(k, shape, jnp.float32)

    keys = iter(jax.random.split(key, 64))
    raw = {
        "tok_emb": nrm(next(keys), (vocab_size, d_model)),
        "pos_emb": nrm(next(keys), (max_seq_len, d_model)),
        "lnf_g": jnp.ones((1, d_model), jnp.float32),
        "lnf_b": jnp.zeros((1, d_model), jnp.float32),
        "blocks": [],
    }
    for _ in range(n_layers):
        raw["blocks"].append({
            "ln1_g": jnp.ones((1, d_model), jnp.float32),
            "ln1_b": jnp.zeros((1, d_model), jnp.float32),
            "wq": nrm(next(keys), (d_model, d_model)),
            "bq": jnp.zeros((1, d_model), jnp.float32),
            "wk": nrm(next(keys), (d_model, d_model)),
            "bk": jnp.zeros((1, d_model), jnp.float32),
            "wv": nrm(next(keys), (d_model, d_model)),
            "bv": jnp.zeros((1, d_model), jnp.float32),
            "wo": nrm(next(keys), (d_model, d_model)),
            "bo": jnp.zeros((1, d_model), jnp.float32),
            "ln2_g": jnp.ones((1, d_model), jnp.float32),
            "ln2_b": jnp.zeros((1, d_model), jnp.float32),
            "w1": nrm(next(keys), (d_model, d_ff)),
            "b1": jnp.zeros((1, d_ff), jnp.float32),
            "w2": nrm(next(keys), (d_ff, d_model)),
            "b2": jnp.zeros((1, d_model), jnp.float32),
        })

    params = prepare_params(raw, cfg)
    input_ids = jax.random.randint(jax.random.PRNGKey(1), (batch, seq_len),
                                   0, vocab_size, dtype=jnp.int32)

    logits = decoder_only_transformer_forward(input_ids, params, cfg)
    logits = jax.block_until_ready(logits)

    ref = reference_forward(input_ids, raw, cfg)
    assert logits.shape == (batch, seq_len, vocab_size)
    max_err = float(jnp.max(jnp.abs(logits - ref)))
    # bf16 MXU inputs (fp32 accumulation) => looser tolerance than pure fp32
    assert jnp.allclose(logits, ref, rtol=2e-2, atol=2e-2), max_err

    print("KERNEL_OK")
</pallas_src>

<mosaic_0001>
module attributes {stable_mosaic.version = 11 : i64} {
  func.func @fused_blocks_kernel(%arg0: i32, %arg1: i32, %arg2: memref<2x8x64xf32, #tpu.memory_space<vmem>>, %arg3: memref<1x1x64xf32, #tpu.memory_space<vmem>>, %arg4: memref<1x1x64xf32, #tpu.memory_space<vmem>>, %arg5: memref<1x64x192xbf16, #tpu.memory_space<vmem>>, %arg6: memref<1x1x192xf32, #tpu.memory_space<vmem>>, %arg7: memref<1x64x64xbf16, #tpu.memory_space<vmem>>, %arg8: memref<1x1x64xf32, #tpu.memory_space<vmem>>, %arg9: memref<1x1x64xf32, #tpu.memory_space<vmem>>, %arg10: memref<1x1x64xf32, #tpu.memory_space<vmem>>, %arg11: memref<1x64x128xbf16, #tpu.memory_space<vmem>>, %arg12: memref<1x1x128xf32, #tpu.memory_space<vmem>>, %arg13: memref<1x128x64xbf16, #tpu.memory_space<vmem>>, %arg14: memref<1x1x64xf32, #tpu.memory_space<vmem>>, %arg15: memref<1x64xf32, #tpu.memory_space<vmem>>, %arg16: memref<1x64xf32, #tpu.memory_space<vmem>>, %arg17: memref<2x8x64xbf16, #tpu.memory_space<vmem>>, %arg18: memref<16x64xf32, #tpu.memory_space<vmem>>) attributes {dimension_semantics = [#tpu.dimension_semantics<parallel>, #tpu.dimension_semantics<arbitrary>], iteration_bounds = array<i64: 1, 2>, scalar_prefetch = 0 : i64, scratch_operands = 1 : i64, tpu.core_type = #tpu.core_type<tc>, window_params = [{transform_indices = @transform_0, window_bounds = array<i64: 2, 8, 64>}, {transform_indices = @transform_1, window_bounds = array<i64: 1, 1, 64>}, {transform_indices = @transform_2, window_bounds = array<i64: 1, 1, 64>}, {transform_indices = @transform_3, window_bounds = array<i64: 1, 64, 192>}, {transform_indices = @transform_4, window_bounds = array<i64: 1, 1, 192>}, {transform_indices = @transform_5, window_bounds = array<i64: 1, 64, 64>}, {transform_indices = @transform_6, window_bounds = array<i64: 1, 1, 64>}, {transform_indices = @transform_7, window_bounds = array<i64: 1, 1, 64>}, {transform_indices = @transform_8, window_bounds = array<i64: 1, 1, 64>}, {transform_indices = @transform_9, window_bounds = array<i64: 1, 64, 128>}, {transform_indices = @transform_10, window_bounds = array<i64: 1, 1, 128>}, {transform_indices = @transform_11, window_bounds = array<i64: 1, 128, 64>}, {transform_indices = @transform_12, window_bounds = array<i64: 1, 1, 64>}, {pipeline_mode = #tpu.pipeline_mode<synchronous>, transform_indices = @transform_13, window_bounds = array<i64: 1, 64>}, {pipeline_mode = #tpu.pipeline_mode<synchronous>, transform_indices = @transform_14, window_bounds = array<i64: 1, 64>}, {transform_indices = @transform_15, window_bounds = array<i64: 2, 8, 64>}]} {
    %c0_i32 = arith.constant 0 : i32
    %0 = arith.cmpi eq, %arg1, %c0_i32 : i32
    %1 = arith.extui %0 : i1 to i32
    %c0_i32_0 = arith.constant 0 : i32
    %2 = arith.cmpi ne, %1, %c0_i32_0 : i32
    scf.if %2 {
      %c0_99 = arith.constant 0 : index
      %c0_100 = arith.constant 0 : index
      %c0_101 = arith.constant 0 : index
      %279 = vector.load %arg2[%c0_99, %c0_100, %c0_101] : memref<2x8x64xf32, #tpu.memory_space<vmem>>, vector<2x8x64xf32>
      %280 = vector.shape_cast %279 : vector<2x8x64xf32> to vector<16x64xf32>
      %c0_102 = arith.constant 0 : index
      %c0_103 = arith.constant 0 : index
      %281 = vector.load %arg18[%c0_102, %c0_103] : memref<16x64xf32, #tpu.memory_space<vmem>>, vector<16x64xf32>
      tpu.vector_store %arg18[%c0_102, %c0_103], %280 {strides = array<i32>} : memref<16x64xf32, #tpu.memory_space<vmem>>, vector<16x64xf32>,
    } else {
    }
    %c0 = arith.constant 0 : index
    %c0_1 = arith.constant 0 : index
    %3 = vector.load %arg18[%c0, %c0_1] : memref<16x64xf32, #tpu.memory_space<vmem>>, vector<16x64xf32>
    %c0_2 = arith.constant 0 : index
    %c0_3 = arith.constant 0 : index
    %c0_4 = arith.constant 0 : index
    %4 = vector.load %arg3[%c0_2, %c0_3, %c0_4] : memref<1x1x64xf32, #tpu.memory_space<vmem>>, vector<1x1x64xf32>
    %5 = vector.shape_cast %4 : vector<1x1x64xf32> to vector<1x64xf32>
    %c0_5 = arith.constant 0 : index
    %c0_6 = arith.constant 0 : index
    %c0_7 = arith.constant 0 : index
    %6 = vector.load %arg4[%c0_5, %c0_6, %c0_7] : memref<1x1x64xf32, #tpu.memory_space<vmem>>, vector<1x1x64xf32>
    %7 = vector.shape_cast %6 : vector<1x1x64xf32> to vector<1x64xf32>
    %cst = arith.constant dense<0.000000e+00> : vector<16xf32>
    %8 = vector.multi_reduction <add>, %3, %cst [1] : vector<16x64xf32> to vector<16xf32>
    %9 = vector.shape_cast %8 : vector<16xf32> to vector<16x1xf32>
    %cst_8 = arith.constant 6.400000e+01 : f32
    %10 = vector.broadcast %cst_8 : f32 to vector<16x1xf32>
    %11 = arith.divf %9, %10 : vector<16x1xf32>
    %12 = vector.broadcast %11 : vector<16x1xf32> to vector<16x64xf32>
    %13 = arith.subf %3, %12 : vector<16x64xf32>
    %14 = arith.mulf %13, %13 : vector<16x64xf32>
    %cst_9 = arith.constant dense<0.000000e+00> : vector<16xf32>
    %15 = vector.multi_reduction <add>, %14, %cst_9 [1] : vector<16x64xf32> to vector<16xf32>
    %16 = vector.shape_cast %15 : vector<16xf32> to vector<16x1xf32>
    %cst_10 = arith.constant 6.400000e+01 : f32
    %17 = vector.broadcast %cst_10 : f32 to vector<16x1xf32>
    %18 = arith.divf %16, %17 : vector<16x1xf32>
    %19 = vector.broadcast %11 : vector<16x1xf32> to vector<16x64xf32>
    %20 = arith.subf %3, %19 : vector<16x64xf32>
    %cst_11 = arith.constant 9.99999974E-6 : f32
    %21 = vector.broadcast %cst_11 : f32 to vector<16x1xf32>
    %22 = arith.addf %18, %21 : vector<16x1xf32>
    %23 = math.rsqrt %22 : vector<16x1xf32>
    %24 = vector.broadcast %23 : vector<16x1xf32> to vector<16x64xf32>
    %25 = arith.mulf %20, %24 : vector<16x64xf32>
    %26 = vector.broadcast %5 : vector<1x64xf32> to vector<16x64xf32>
    %27 = arith.mulf %25, %26 : vector<16x64xf32>
    %28 = vector.broadcast %7 : vector<1x64xf32> to vector<16x64xf32>
    %29 = arith.addf %27, %28 : vector<16x64xf32>
    %30 = arith.truncf %29 : vector<16x64xf32> to vector<16x64xbf16>
    %c0_12 = arith.constant 0 : index
    %c0_13 = arith.constant 0 : index
    %c0_14 = arith.constant 0 : index
    %31 = vector.load %arg5[%c0_12, %c0_13, %c0_14] : memref<1x64x192xbf16, #tpu.memory_space<vmem>>, vector<1x64x192xbf16>
    %32 = vector.shape_cast %31 : vector<1x64x192xbf16> to vector<64x192xbf16>
    %cst_15 = arith.constant dense<0.000000e+00> : vector<16x192xf32>
    %33 = tpu.matmul %30, %32, %cst_15 {dimension_numbers = #tpu.dot_dimension_numbers<[1], [0], [0], [1], [0, 0, 1, 1], [], []>} : vector<16x64xbf16>, vector<64x192xbf16>, vector<16x192xf32> -> vector<16x192xf32>
    %c0_16 = arith.constant 0 : index
    %c0_17 = arith.constant 0 : index
    %c0_18 = arith.constant 0 : index
    %34 = vector.load %arg6[%c0_16, %c0_17, %c0_18] : memref<1x1x192xf32, #tpu.memory_space<vmem>>, vector<1x1x192xf32>
    %35 = vector.shape_cast %34 : vector<1x1x192xf32> to vector<1x192xf32>
    %36 = vector.broadcast %35 : vector<1x192xf32> to vector<16x192xf32>
    %37 = arith.addf %33, %36 : vector<16x192xf32>
    %38 = arith.truncf %37 : vector<16x192xf32> to vector<16x192xbf16>
    %39 = tpu.iota {dimensions = array<i32: 0>} : vector<8x8xi32>
    %40 = tpu.iota {dimensions = array<i32: 1>} : vector<8x8xi32>
    %41 = arith.cmpi sgt, %40, %39 : vector<8x8xi32>
    %42 = arith.extui %41 : vector<8x8xi1> to vector<8x8xi32>
    %43 = arith.sitofp %42 : vector<8x8xi32> to vector<8x8xf32>
    %cst_19 = arith.constant -1.000000e+30 : f32
    %44 = vector.broadcast %cst_19 : f32 to vector<8x8xf32>
    %45 = arith.mulf %43, %44 : vector<8x8xf32>
    %c0_20 = arith.constant 0 : index
    %c0_21 = arith.constant 0 : index
    %c0_22 = arith.constant 0 : index
    %46 = vector.load %arg7[%c0_20, %c0_21, %c0_22] : memref<1x64x64xbf16, #tpu.memory_space<vmem>>, vector<1x64x64xbf16>
    %47 = vector.shape_cast %46 : vector<1x64x64xbf16> to vector<64x64xbf16>
    %cst_23 = arith.constant 0.000000e+00 : f32
    %48 = vector.broadcast %cst_23 : f32 to vector<8x64xf32>
    %49 = vector.extract_strided_slice %38 {offsets = [0, 0], sizes = [8, 16], strides = [1, 1]} : vector<16x192xbf16> to vector<8x16xbf16>
    %50 = vector.extract_strided_slice %38 {offsets = [0, 64], sizes = [8, 16], strides = [1, 1]} : vector<16x192xbf16> to vector<8x16xbf16>
    %51 = vector.extract_strided_slice %38 {offsets = [0, 128], sizes = [8, 16], strides = [1, 1]} : vector<16x192xbf16> to vector<8x16xbf16>
    %cst_24 = arith.constant dense<0.000000e+00> : vector<8x8xf32>
    %52 = tpu.matmul %49, %50, %cst_24 {dimension_numbers = #tpu.dot_dimension_numbers<[1], [1], [0], [0], [0, 0, 1, 0], [], []>} : vector<8x16xbf16>, vector<8x16xbf16>, vector<8x8xf32> -> vector<8x8xf32>
    %53 = arith.addf %52, %45 : vector<8x8xf32>
    %cst_25 = arith.constant dense<0xFF800000> : vector<8xf32>
    %54 = vector.multi_reduction <maximumf>, %53, %cst_25 [1] : vector<8x8xf32> to vector<8xf32>
    %55 = vector.shape_cast %54 : vector<8xf32> to vector<8x1xf32>
    %56 = vector.broadcast %55 : vector<8x1xf32> to vector<8x8xf32>
    %57 = arith.subf %53, %56 : vector<8x8xf32>
    %58 = math.exp %57 : vector<8x8xf32>
    %cst_26 = arith.constant dense<0.000000e+00> : vector<8xf32>
    %59 = vector.multi_reduction <add>, %58, %cst_26 [1] : vector<8x8xf32> to vector<8xf32>
    %60 = vector.shape_cast %59 : vector<8xf32> to vector<8x1xf32>
    %61 = arith.truncf %58 : vector<8x8xf32> to vector<8x8xbf16>
    %cst_27 = arith.constant dense<0.000000e+00> : vector<8x16xf32>
    %62 = tpu.matmul %61, %51, %cst_27 {dimension_numbers = #tpu.dot_dimension_numbers<[1], [0], [0], [1], [0, 0, 1, 1], [], []>} : vector<8x8xbf16>, vector<8x16xbf16>, vector<8x16xf32> -> vector<8x16xf32>
    %63 = tpu.reciprocal %60 {approx = true} : vector<8x1xf32> -> vector<8x1xf32>
    %64 = vector.broadcast %63 : vector<8x1xf32> to vector<8x16xf32>
    %65 = arith.mulf %62, %64 : vector<8x16xf32>
    %66 = arith.truncf %65 : vector<8x16xf32> to vector<8x16xbf16>
    %67 = vector.extract_strided_slice %47 {offsets = [0, 0], sizes = [16, 64], strides = [1, 1]} : vector<64x64xbf16> to vector<16x64xbf16>
    %cst_28 = arith.constant dense<0.000000e+00> : vector<8x64xf32>
    %68 = tpu.matmul %66, %67, %cst_28 {dimension_numbers = #tpu.dot_dimension_numbers<[1], [0], [0], [1], [0, 0, 1, 1], [], []>} : vector<8x16xbf16>, vector<16x64xbf16>, vector<8x64xf32> -> vector<8x64xf32>
    %69 = arith.addf %48, %68 : vector<8x64xf32>
    %70 = vector.extract_strided_slice %38 {offsets = [0, 16], sizes = [8, 16], strides = [1, 1]} : vector<16x192xbf16> to vector<8x16xbf16>
    %71 = vector.extract_strided_slice %38 {offsets = [0, 80], sizes = [8, 16], strides = [1, 1]} : vector<16x192xbf16> to vector<8x16xbf16>
    %72 = vector.extract_strided_slice %38 {offsets = [0, 144], sizes = [8, 16], strides = [1, 1]} : vector<16x192xbf16> to vector<8x16xbf16>
    %cst_29 = arith.constant dense<0.000000e+00> : vector<8x8xf32>
    %73 = tpu.matmul %70, %71, %cst_29 {dimension_numbers = #tpu.dot_dimension_numbers<[1], [1], [0], [0], [0, 0, 1, 0], [], []>} : vector<8x16xbf16>, vector<8x16xbf16>, vector<8x8xf32> -> vector<8x8xf32>
    %74 = arith.addf %73, %45 : vector<8x8xf32>
    %cst_30 = arith.constant dense<0xFF800000> : vector<8xf32>
    %75 = vector.multi_reduction <maximumf>, %74, %cst_30 [1] : vector<8x8xf32> to vector<8xf32>
    %76 = vector.shape_cast %75 : vector<8xf32> to vector<8x1xf32>
    %77 = vector.broadcast %76 : vector<8x1xf32> to vector<8x8xf32>
    %78 = arith.subf %74, %77 : vector<8x8xf32>
    %79 = math.exp %78 : vector<8x8xf32>
    %cst_31 = arith.constant dense<0.000000e+00> : vector<8xf32>
    %80 = vector.multi_reduction <add>, %79, %cst_31 [1] : vector<8x8xf32> to vector<8xf32>
    %81 = vector.shape_cast %80 : vector<8xf32> to vector<8x1xf32>
    %82 = arith.truncf %79 : vector<8x8xf32> to vector<8x8xbf16>
    %cst_32 = arith.constant dense<0.000000e+00> : vector<8x16xf32>
    %83 = tpu.matmul %82, %72, %cst_32 {dimension_numbers = #tpu.dot_dimension_numbers<[1], [0], [0], [1], [0, 0, 1, 1], [], []>} : vector<8x8xbf16>, vector<8x16xbf16>, vector<8x16xf32> -> vector<8x16xf32>
    %84 = tpu.reciprocal %81 {approx = true} : vector<8x1xf32> -> vector<8x1xf32>
    %85 = vector.broadcast %84 : vector<8x1xf32> to vector<8x16xf32>
    %86 = arith.mulf %83, %85 : vector<8x16xf32>
    %87 = arith.truncf %86 : vector<8x16xf32> to vector<8x16xbf16>
    %88 = vector.extract_strided_slice %47 {offsets = [16, 0], sizes = [16, 64], strides = [1, 1]} : vector<64x64xbf16> to vector<16x64xbf16>
    %cst_33 = arith.constant dense<0.000000e+00> : vector<8x64xf32>
    %89 = tpu.matmul %87, %88, %cst_33 {dimension_numbers = #tpu.dot_dimension_numbers<[1], [0], [0], [1], [0, 0, 1, 1], [], []>} : vector<8x16xbf16>, vector<16x64xbf16>, vector<8x64xf32> -> vector<8x64xf32>
    %90 = arith.addf %69, %89 : vector<8x64xf32>
    %91 = vector.extract_strided_slice %38 {offsets = [0, 32], sizes = [8, 16], strides = [1, 1]} : vector<16x192xbf16> to vector<8x16xbf16>
    %92 = vector.extract_strided_slice %38 {offsets = [0, 96], sizes = [8, 16], strides = [1, 1]} : vector<16x192xbf16> to vector<8x16xbf16>
    %93 = vector.extract_strided_slice %38 {offsets = [0, 160], sizes = [8, 16], strides = [1, 1]} : vector<16x192xbf16> to vector<8x16xbf16>
    %cst_34 = arith.constant dense<0.000000e+00> : vector<8x8xf32>
    %94 = tpu.matmul %91, %92, %cst_34 {dimension_numbers = #tpu.dot_dimension_numbers<[1], [1], [0], [0], [0, 0, 1, 0], [], []>} : vector<8x16xbf16>, vector<8x16xbf16>, vector<8x8xf32> -> vector<8x8xf32>
    %95 = arith.addf %94, %45 : vector<8x8xf32>
    %cst_35 = arith.constant dense<0xFF800000> : vector<8xf32>
    %96 = vector.multi_reduction <maximumf>, %95, %cst_35 [1] : vector<8x8xf32> to vector<8xf32>
    %97 = vector.shape_cast %96 : vector<8xf32> to vector<8x1xf32>
    %98 = vector.broadcast %97 : vector<8x1xf32> to vector<8x8xf32>
    %99 = arith.subf %95, %98 : vector<8x8xf32>
    %100 = math.exp %99 : vector<8x8xf32>
    %cst_36 = arith.constant dense<0.000000e+00> : vector<8xf32>
    %101 = vector.multi_reduction <add>, %100, %cst_36 [1] : vector<8x8xf32> to vector<8xf32>
    %102 = vector.shape_cast %101 : vector<8xf32> to vector<8x1xf32>
    %103 = arith.truncf %100 : vector<8x8xf32> to vector<8x8xbf16>
    %cst_37 = arith.constant dense<0.000000e+00> : vector<8x16xf32>
    %104 = tpu.matmul %103, %93, %cst_37 {dimension_numbers = #tpu.dot_dimension_numbers<[1], [0], [0], [1], [0, 0, 1, 1], [], []>} : vector<8x8xbf16>, vector<8x16xbf16>, vector<8x16xf32> -> vector<8x16xf32>
    %105 = tpu.reciprocal %102 {approx = true} : vector<8x1xf32> -> vector<8x1xf32>
    %106 = vector.broadcast %105 : vector<8x1xf32> to vector<8x16xf32>
    %107 = arith.mulf %104, %106 : vector<8x16xf32>
    %108 = arith.truncf %107 : vector<8x16xf32> to vector<8x16xbf16>
    %109 = vector.extract_strided_slice %47 {offsets = [32, 0], sizes = [16, 64], strides = [1, 1]} : vector<64x64xbf16> to vector<16x64xbf16>
    %cst_38 = arith.constant dense<0.000000e+00> : vector<8x64xf32>
    %110 = tpu.matmul %108, %109, %cst_38 {dimension_numbers = #tpu.dot_dimension_numbers<[1], [0], [0], [1], [0, 0, 1, 1], [], []>} : vector<8x16xbf16>, vector<16x64xbf16>, vector<8x64xf32> -> vector<8x64xf32>
    %111 = arith.addf %90, %110 : vector<8x64xf32>
    %112 = vector.extract_strided_slice %38 {offsets = [0, 48], sizes = [8, 16], strides = [1, 1]} : vector<16x192xbf16> to vector<8x16xbf16>
    %113 = vector.extract_strided_slice %38 {offsets = [0, 112], sizes = [8, 16], strides = [1, 1]} : vector<16x192xbf16> to vector<8x16xbf16>
    %114 = vector.extract_strided_slice %38 {offsets = [0, 176], sizes = [8, 16], strides = [1, 1]} : vector<16x192xbf16> to vector<8x16xbf16>
    %cst_39 = arith.constant dense<0.000000e+00> : vector<8x8xf32>
    %115 = tpu.matmul %112, %113, %cst_39 {dimension_numbers = #tpu.dot_dimension_numbers<[1], [1], [0], [0], [0, 0, 1, 0], [], []>} : vector<8x16xbf16>, vector<8x16xbf16>, vector<8x8xf32> -> vector<8x8xf32>
    %116 = arith.addf %115, %45 : vector<8x8xf32>
    %cst_40 = arith.constant dense<0xFF800000> : vector<8xf32>
    %117 = vector.multi_reduction <maximumf>, %116, %cst_40 [1] : vector<8x8xf32> to vector<8xf32>
    %118 = vector.shape_cast %117 : vector<8xf32> to vector<8x1xf32>
    %119 = vector.broadcast %118 : vector<8x1xf32> to vector<8x8xf32>
    %120 = arith.subf %116, %119 : vector<8x8xf32>
    %121 = math.exp %120 : vector<8x8xf32>
    %cst_41 = arith.constant dense<0.000000e+00> : vector<8xf32>
    %122 = vector.multi_reduction <add>, %121, %cst_41 [1] : vector<8x8xf32> to vector<8xf32>
    %123 = vector.shape_cast %122 : vector<8xf32> to vector<8x1xf32>
    %124 = arith.truncf %121 : vector<8x8xf32> to vector<8x8xbf16>
    %cst_42 = arith.constant dense<0.000000e+00> : vector<8x16xf32>
    %125 = tpu.matmul %124, %114, %cst_42 {dimension_numbers = #tpu.dot_dimension_numbers<[1], [0], [0], [1], [0, 0, 1, 1], [], []>} : vector<8x8xbf16>, vector<8x16xbf16>, vector<8x16xf32> -> vector<8x16xf32>
    %126 = tpu.reciprocal %123 {approx = true} : vector<8x1xf32> -> vector<8x1xf32>
    %127 = vector.broadcast %126 : vector<8x1xf32> to vector<8x16xf32>
    %128 = arith.mulf %125, %127 : vector<8x16xf32>
    %129 = arith.truncf %128 : vector<8x16xf32> to vector<8x16xbf16>
    %130 = vector.extract_strided_slice %47 {offsets = [48, 0], sizes = [16, 64], strides = [1, 1]} : vector<64x64xbf16> to vector<16x64xbf16>
    %cst_43 = arith.constant dense<0.000000e+00> : vector<8x64xf32>
    %131 = tpu.matmul %129, %130, %cst_43 {dimension_numbers = #tpu.dot_dimension_numbers<[1], [0], [0], [1], [0, 0, 1, 1], [], []>} : vector<8x16xbf16>, vector<16x64xbf16>, vector<8x64xf32> -> vector<8x64xf32>
    %132 = arith.addf %111, %131 : vector<8x64xf32>
    %cst_44 = arith.constant 0.000000e+00 : f32
    %133 = vector.broadcast %cst_44 : f32 to vector<8x64xf32>
    %134 = vector.extract_strided_slice %38 {offsets = [8, 0], sizes = [8, 16], strides = [1, 1]} : vector<16x192xbf16> to vector<8x16xbf16>
    %135 = vector.extract_strided_slice %38 {offsets = [8, 64], sizes = [8, 16], strides = [1, 1]} : vector<16x192xbf16> to vector<8x16xbf16>
    %136 = vector.extract_strided_slice %38 {offsets = [8, 128], sizes = [8, 16], strides = [1, 1]} : vector<16x192xbf16> to vector<8x16xbf16>
    %cst_45 = arith.constant dense<0.000000e+00> : vector<8x8xf32>
    %137 = tpu.matmul %134, %135, %cst_45 {dimension_numbers = #tpu.dot_dimension_numbers<[1], [1], [0], [0], [0, 0, 1, 0], [], []>} : vector<8x16xbf16>, vector<8x16xbf16>, vector<8x8xf32> -> vector<8x8xf32>
    %138 = arith.addf %137, %45 : vector<8x8xf32>
    %cst_46 = arith.constant dense<0xFF800000> : vector<8xf32>
    %139 = vector.multi_reduction <maximumf>, %138, %cst_46 [1] : vector<8x8xf32> to vector<8xf32>
    %140 = vector.shape_cast %139 : vector<8xf32> to vector<8x1xf32>
    %141 = vector.broadcast %140 : vector<8x1xf32> to vector<8x8xf32>
    %142 = arith.subf %138, %141 : vector<8x8xf32>
    %143 = math.exp %142 : vector<8x8xf32>
    %cst_47 = arith.constant dense<0.000000e+00> : vector<8xf32>
    %144 = vector.multi_reduction <add>, %143, %cst_47 [1] : vector<8x8xf32> to vector<8xf32>
    %145 = vector.shape_cast %144 : vector<8xf32> to vector<8x1xf32>
    %146 = arith.truncf %143 : vector<8x8xf32> to vector<8x8xbf16>
    %cst_48 = arith.constant dense<0.000000e+00> : vector<8x16xf32>
    %147 = tpu.matmul %146, %136, %cst_48 {dimension_numbers = #tpu.dot_dimension_numbers<[1], [0], [0], [1], [0, 0, 1, 1], [], []>} : vector<8x8xbf16>, vector<8x16xbf16>, vector<8x16xf32> -> vector<8x16xf32>
    %148 = tpu.reciprocal %145 {approx = true} : vector<8x1xf32> -> vector<8x1xf32>
    %149 = vector.broadcast %148 : vector<8x1xf32> to vector<8x16xf32>
    %150 = arith.mulf %147, %149 : vector<8x16xf32>
    %151 = arith.truncf %150 : vector<8x16xf32> to vector<8x16xbf16>
    %152 = vector.extract_strided_slice %47 {offsets = [0, 0], sizes = [16, 64], strides = [1, 1]} : vector<64x64xbf16> to vector<16x64xbf16>
    %cst_49 = arith.constant dense<0.000000e+00> : vector<8x64xf32>
    %153 = tpu.matmul %151, %152, %cst_49 {dimension_numbers = #tpu.dot_dimension_numbers<[1], [0], [0], [1], [0, 0, 1, 1], [], []>} : vector<8x16xbf16>, vector<16x64xbf16>, vector<8x64xf32> -> vector<8x64xf32>
    %154 = arith.addf %133, %153 : vector<8x64xf32>
    %155 = vector.extract_strided_slice %38 {offsets = [8, 16], sizes = [8, 16], strides = [1, 1]} : vector<16x192xbf16> to vector<8x16xbf16>
    %156 = vector.extract_strided_slice %38 {offsets = [8, 80], sizes = [8, 16], strides = [1, 1]} : vector<16x192xbf16> to vector<8x16xbf16>
    %157 = vector.extract_strided_slice %38 {offsets = [8, 144], sizes = [8, 16], strides = [1, 1]} : vector<16x192xbf16> to vector<8x16xbf16>
    %cst_50 = arith.constant dense<0.000000e+00> : vector<8x8xf32>
    %158 = tpu.matmul %155, %156, %cst_50 {dimension_numbers = #tpu.dot_dimension_numbers<[1], [1], [0], [0], [0, 0, 1, 0], [], []>} : vector<8x16xbf16>, vector<8x16xbf16>, vector<8x8xf32> -> vector<8x8xf32>
    %159 = arith.addf %158, %45 : vector<8x8xf32>
    %cst_51 = arith.constant dense<0xFF800000> : vector<8xf32>
    %160 = vector.multi_reduction <maximumf>, %159, %cst_51 [1] : vector<8x8xf32> to vector<8xf32>
    %161 = vector.shape_cast %160 : vector<8xf32> to vector<8x1xf32>
    %162 = vector.broadcast %161 : vector<8x1xf32> to vector<8x8xf32>
    %163 = arith.subf %159, %162 : vector<8x8xf32>
    %164 = math.exp %163 : vector<8x8xf32>
    %cst_52 = arith.constant dense<0.000000e+00> : vector<8xf32>
    %165 = vector.multi_reduction <add>, %164, %cst_52 [1] : vector<8x8xf32> to vector<8xf32>
    %166 = vector.shape_cast %165 : vector<8xf32> to vector<8x1xf32>
    %167 = arith.truncf %164 : vector<8x8xf32> to vector<8x8xbf16>
    %cst_53 = arith.constant dense<0.000000e+00> : vector<8x16xf32>
    %168 = tpu.matmul %167, %157, %cst_53 {dimension_numbers = #tpu.dot_dimension_numbers<[1], [0], [0], [1], [0, 0, 1, 1], [], []>} : vector<8x8xbf16>, vector<8x16xbf16>, vector<8x16xf32> -> vector<8x16xf32>
    %169 = tpu.reciprocal %166 {approx = true} : vector<8x1xf32> -> vector<8x1xf32>
    %170 = vector.broadcast %169 : vector<8x1xf32> to vector<8x16xf32>
    %171 = arith.mulf %168, %170 : vector<8x16xf32>
    %172 = arith.truncf %171 : vector<8x16xf32> to vector<8x16xbf16>
    %173 = vector.extract_strided_slice %47 {offsets = [16, 0], sizes = [16, 64], strides = [1, 1]} : vector<64x64xbf16> to vector<16x64xbf16>
    %cst_54 = arith.constant dense<0.000000e+00> : vector<8x64xf32>
    %174 = tpu.matmul %172, %173, %cst_54 {dimension_numbers = #tpu.dot_dimension_numbers<[1], [0], [0], [1], [0, 0, 1, 1], [], []>} : vector<8x16xbf16>, vector<16x64xbf16>, vector<8x64xf32> -> vector<8x64xf32>
    %175 = arith.addf %154, %174 : vector<8x64xf32>
    %176 = vector.extract_strided_slice %38 {offsets = [8, 32], sizes = [8, 16], strides = [1, 1]} : vector<16x192xbf16> to vector<8x16xbf16>
    %177 = vector.extract_strided_slice %38 {offsets = [8, 96], sizes = [8, 16], strides = [1, 1]} : vector<16x192xbf16> to vector<8x16xbf16>
    %178 = vector.extract_strided_slice %38 {offsets = [8, 160], sizes = [8, 16], strides = [1, 1]} : vector<16x192xbf16> to vector<8x16xbf16>
    %cst_55 = arith.constant dense<0.000000e+00> : vector<8x8xf32>
    %179 = tpu.matmul %176, %177, %cst_55 {dimension_numbers = #tpu.dot_dimension_numbers<[1], [1], [0], [0], [0, 0, 1, 0], [], []>} : vector<8x16xbf16>, vector<8x16xbf16>, vector<8x8xf32> -> vector<8x8xf32>
    %180 = arith.addf %179, %45 : vector<8x8xf32>
    %cst_56 = arith.constant dense<0xFF800000> : vector<8xf32>
    %181 = vector.multi_reduction <maximumf>, %180, %cst_56 [1] : vector<8x8xf32> to vector<8xf32>
    %182 = vector.shape_cast %181 : vector<8xf32> to vector<8x1xf32>
    %183 = vector.broadcast %182 : vector<8x1xf32> to vector<8x8xf32>
    %184 = arith.subf %180, %183 : vector<8x8xf32>
    %185 = math.exp %184 : vector<8x8xf32>
    %cst_57 = arith.constant dense<0.000000e+00> : vector<8xf32>
    %186 = vector.multi_reduction <add>, %185, %cst_57 [1] : vector<8x8xf32> to vector<8xf32>
    %187 = vector.shape_cast %186 : vector<8xf32> to vector<8x1xf32>
    %188 = arith.truncf %185 : vector<8x8xf32> to vector<8x8xbf16>
    %cst_58 = arith.constant dense<0.000000e+00> : vector<8x16xf32>
    %189 = tpu.matmul %188, %178, %cst_58 {dimension_numbers = #tpu.dot_dimension_numbers<[1], [0], [0], [1], [0, 0, 1, 1], [], []>} : vector<8x8xbf16>, vector<8x16xbf16>, vector<8x16xf32> -> vector<8x16xf32>
    %190 = tpu.reciprocal %187 {approx = true} : vector<8x1xf32> -> vector<8x1xf32>
    %191 = vector.broadcast %190 : vector<8x1xf32> to vector<8x16xf32>
    %192 = arith.mulf %189, %191 : vector<8x16xf32>
    %193 = arith.truncf %192 : vector<8x16xf32> to vector<8x16xbf16>
    %194 = vector.extract_strided_slice %47 {offsets = [32, 0], sizes = [16, 64], strides = [1, 1]} : vector<64x64xbf16> to vector<16x64xbf16>
    %cst_59 = arith.constant dense<0.000000e+00> : vector<8x64xf32>
    %195 = tpu.matmul %193, %194, %cst_59 {dimension_numbers = #tpu.dot_dimension_numbers<[1], [0], [0], [1], [0, 0, 1, 1], [], []>} : vector<8x16xbf16>, vector<16x64xbf16>, vector<8x64xf32> -> vector<8x64xf32>
    %196 = arith.addf %175, %195 : vector<8x64xf32>
    %197 = vector.extract_strided_slice %38 {offsets = [8, 48], sizes = [8, 16], strides = [1, 1]} : vector<16x192xbf16> to vector<8x16xbf16>
    %198 = vector.extract_strided_slice %38 {offsets = [8, 112], sizes = [8, 16], strides = [1, 1]} : vector<16x192xbf16> to vector<8x16xbf16>
    %199 = vector.extract_strided_slice %38 {offsets = [8, 176], sizes = [8, 16], strides = [1, 1]} : vector<16x192xbf16> to vector<8x16xbf16>
    %cst_60 = arith.constant dense<0.000000e+00> : vector<8x8xf32>
    %200 = tpu.matmul %197, %198, %cst_60 {dimension_numbers = #tpu.dot_dimension_numbers<[1], [1], [0], [0], [0, 0, 1, 0], [], []>} : vector<8x16xbf16>, vector<8x16xbf16>, vector<8x8xf32> -> vector<8x8xf32>
    %201 = arith.addf %200, %45 : vector<8x8xf32>
    %cst_61 = arith.constant dense<0xFF800000> : vector<8xf32>
    %202 = vector.multi_reduction <maximumf>, %201, %cst_61 [1] : vector<8x8xf32> to vector<8xf32>
    %203 = vector.shape_cast %202 : vector<8xf32> to vector<8x1xf32>
    %204 = vector.broadcast %203 : vector<8x1xf32> to vector<8x8xf32>
    %205 = arith.subf %201, %204 : vector<8x8xf32>
    %206 = math.exp %205 : vector<8x8xf32>
    %cst_62 = arith.constant dense<0.000000e+00> : vector<8xf32>
    %207 = vector.multi_reduction <add>, %206, %cst_62 [1] : vector<8x8xf32> to vector<8xf32>
    %208 = vector.shape_cast %207 : vector<8xf32> to vector<8x1xf32>
    %209 = arith.truncf %206 : vector<8x8xf32> to vector<8x8xbf16>
    %cst_63 = arith.constant dense<0.000000e+00> : vector<8x16xf32>
    %210 = tpu.matmul %209, %199, %cst_63 {dimension_numbers = #tpu.dot_dimension_numbers<[1], [0], [0], [1], [0, 0, 1, 1], [], []>} : vector<8x8xbf16>, vector<8x16xbf16>, vector<8x16xf32> -> vector<8x16xf32>
    %211 = tpu.reciprocal %208 {approx = true} : vector<8x1xf32> -> vector<8x1xf32>
    %212 = vector.broadcast %211 : vector<8x1xf32> to vector<8x16xf32>
    %213 = arith.mulf %210, %212 : vector<8x16xf32>
    %214 = arith.truncf %213 : vector<8x16xf32> to vector<8x16xbf16>
    %215 = vector.extract_strided_slice %47 {offsets = [48, 0], sizes = [16, 64], strides = [1, 1]} : vector<64x64xbf16> to vector<16x64xbf16>
    %cst_64 = arith.constant dense<0.000000e+00> : vector<8x64xf32>
    %216 = tpu.matmul %214, %215, %cst_64 {dimension_numbers = #tpu.dot_dimension_numbers<[1], [0], [0], [1], [0, 0, 1, 1], [], []>} : vector<8x16xbf16>, vector<16x64xbf16>, vector<8x64xf32> -> vector<8x64xf32>
    %217 = arith.addf %196, %216 : vector<8x64xf32>
    %218 = tpu.concatenate %132, %217 in 0 : vector<8x64xf32>, vector<8x64xf32> -> vector<16x64xf32>
    %219 = arith.addf %3, %218 : vector<16x64xf32>
    %c0_65 = arith.constant 0 : index
    %c0_66 = arith.constant 0 : index
    %c0_67 = arith.constant 0 : index
    %220 = vector.load %arg8[%c0_65, %c0_66, %c0_67] : memref<1x1x64xf32, #tpu.memory_space<vmem>>, vector<1x1x64xf32>
    %221 = vector.shape_cast %220 : vector<1x1x64xf32> to vector<1x64xf32>
    %222 = vector.broadcast %221 : vector<1x64xf32> to vector<16x64xf32>
    %223 = arith.addf %219, %222 : vector<16x64xf32>
    %c0_68 = arith.constant 0 : index
    %c0_69 = arith.constant 0 : index
    %c0_70 = arith.constant 0 : index
    %224 = vector.load %arg9[%c0_68, %c0_69, %c0_70] : memref<1x1x64xf32, #tpu.memory_space<vmem>>, vector<1x1x64xf32>
    %225 = vector.shape_cast %224 : vector<1x1x64xf32> to vector<1x64xf32>
    %c0_71 = arith.constant 0 : index
    %c0_72 = arith.constant 0 : index
    %c0_73 = arith.constant 0 : index
    %226 = vector.load %arg10[%c0_71, %c0_72, %c0_73] : memref<1x1x64xf32, #tpu.memory_space<vmem>>, vector<1x1x64xf32>
    %227 = vector.shape_cast %226 : vector<1x1x64xf32> to vector<1x64xf32>
    %cst_74 = arith.constant dense<0.000000e+00> : vector<16xf32>
    %228 = vector.multi_reduction <add>, %223, %cst_74 [1] : vector<16x64xf32> to vector<16xf32>
    %229 = vector.shape_cast %228 : vector<16xf32> to vector<16x1xf32>
    %cst_75 = arith.constant 6.400000e+01 : f32
    %230 = vector.broadcast %cst_75 : f32 to vector<16x1xf32>
    %231 = arith.divf %229, %230 : vector<16x1xf32>
    %232 = vector.broadcast %231 : vector<16x1xf32> to vector<16x64xf32>
    %233 = arith.subf %223, %232 : vector<16x64xf32>
    %234 = arith.mulf %233, %233 : vector<16x64xf32>
    %cst_76 = arith.constant dense<0.000000e+00> : vector<16xf32>
    %235 = vector.multi_reduction <add>, %234, %cst_76 [1] : vector<16x64xf32> to vector<16xf32>
    %236 = vector.shape_cast %235 : vector<16xf32> to vector<16x1xf32>
    %cst_77 = arith.constant 6.400000e+01 : f32
    %237 = vector.broadcast %cst_77 : f32 to vector<16x1xf32>
    %238 = arith.divf %236, %237 : vector<16x1xf32>
    %239 = vector.broadcast %231 : vector<16x1xf32> to vector<16x64xf32>
    %240 = arith.subf %223, %239 : vector<16x64xf32>
    %cst_78 = arith.constant 9.99999974E-6 : f32
    %241 = vector.broadcast %cst_78 : f32 to vector<16x1xf32>
    %242 = arith.addf %238, %241 : vector<16x1xf32>
    %243 = math.rsqrt %242 : vector<16x1xf32>
    %244 = vector.broadcast %243 : vector<16x1xf32> to vector<16x64xf32>
    %245 = arith.mulf %240, %244 : vector<16x64xf32>
    %246 = vector.broadcast %225 : vector<1x64xf32> to vector<16x64xf32>
    %247 = arith.mulf %245, %246 : vector<16x64xf32>
    %248 = vector.broadcast %227 : vector<1x64xf32> to vector<16x64xf32>
    %249 = arith.addf %247, %248 : vector<16x64xf32>
    %250 = arith.truncf %249 : vector<16x64xf32> to vector<16x64xbf16>
    %c0_79 = arith.constant 0 : index
    %c0_80 = arith.constant 0 : index
    %c0_81 = arith.constant 0 : index
    %251 = vector.load %arg11[%c0_79, %c0_80, %c0_81] : memref<1x64x128xbf16, #tpu.memory_space<vmem>>, vector<1x64x128xbf16>
    %252 = vector.shape_cast %251 : vector<1x64x128xbf16> to vector<64x128xbf16>
    %cst_82 = arith.constant dense<0.000000e+00> : vector<16x128xf32>
    %253 = tpu.matmul %250, %252, %cst_82 {dimension_numbers = #tpu.dot_dimension_numbers<[1], [0], [0], [1], [0, 0, 1, 1], [], []>} : vector<16x64xbf16>, vector<64x128xbf16>, vector<16x128xf32> -> vector<16x128xf32>
    %c0_83 = arith.constant 0 : index
    %c0_84 = arith.constant 0 : index
    %c0_85 = arith.constant 0 : index
    %254 = vector.load %arg12[%c0_83, %c0_84, %c0_85] : memref<1x1x128xf32, #tpu.memory_space<vmem>>, vector<1x1x128xf32>
    %255 = vector.shape_cast %254 : vector<1x1x128xf32> to vector<1x128xf32>
    %256 = vector.broadcast %255 : vector<1x128xf32> to vector<16x128xf32>
    %257 = arith.addf %253, %256 : vector<16x128xf32>
    %cst_86 = arith.constant 5.000000e-01 : f32
    %258 = vector.broadcast %cst_86 : f32 to vector<16x128xf32>
    %259 = arith.mulf %258, %257 : vector<16x128xf32>
    %cst_87 = arith.constant 0.707106769 : f32
    %260 = vector.broadcast %cst_87 : f32 to vector<16x128xf32>
    %261 = arith.mulf %257, %260 : vector<16x128xf32>
    %262 = math.erf %261 : vector<16x128xf32>
    %cst_88 = arith.constant 1.000000e+00 : f32
    %263 = vector.broadcast %cst_88 : f32 to vector<16x128xf32>
    %264 = arith.addf %263, %262 : vector<16x128xf32>
    %265 = arith.mulf %259, %264 : vector<16x128xf32>
    %266 = arith.truncf %265 : vector<16x128xf32> to vector<16x128xbf16>
    %c0_89 = arith.constant 0 : index
    %c0_90 = arith.constant 0 : index
    %c0_91 = arith.constant 0 : index
    %267 = vector.load %arg13[%c0_89, %c0_90, %c0_91] : memref<1x128x64xbf16, #tpu.memory_space<vmem>>, vector<1x128x64xbf16>
    %268 = vector.shape_cast %267 : vector<1x128x64xbf16> to vector<128x64xbf16>
    %cst_92 = arith.constant dense<0.000000e+00> : vector<16x64xf32>
    %269 = tpu.matmul %266, %268, %cst_92 {dimension_numbers = #tpu.dot_dimension_numbers<[1], [0], [0], [1], [0, 0, 1, 1], [], []>} : vector<16x128xbf16>, vector<128x64xbf16>, vector<16x64xf32> -> vector<16x64xf32>
    %c0_93 = arith.constant 0 : index
    %c0_94 = arith.constant 0 : index
    %c0_95 = arith.constant 0 : index
    %270 = vector.load %arg14[%c0_93, %c0_94, %c0_95] : memref<1x1x64xf32, #tpu.memory_space<vmem>>, vector<1x1x64xf32>
    %271 = vector.shape_cast %270 : vector<1x1x64xf32> to vector<1x64xf32>
    %272 = vector.broadcast %271 : vector<1x64xf32> to vector<16x64xf32>
    %273 = arith.addf %269, %272 : vector<16x64xf32>
    %274 = arith.addf %223, %273 : vector<16x64xf32>
    %c0_96 = arith.constant 0 : index
    %c0_97 = arith.constant 0 : index
    %275 = vector.load %arg18[%c0_96, %c0_97] : memref<16x64xf32, #tpu.memory_space<vmem>>, vector<16x64xf32>
    tpu.vector_store %arg18[%c0_96, %c0_97], %274 {strides = array<i32>} : memref<16x64xf32, #tpu.memory_space<vmem>>, vector<16x64xf32>,
    %c1_i32 = arith.constant 1 : i32
    %276 = arith.cmpi eq, %arg1, %c1_i32 : i32
    %277 = arith.extui %276 : i1 to i32
    %c0_i32_98 = arith.constant 0 : i32
    %278 = arith.cmpi ne, %277, %c0_i32_98 : i32
    scf.if %278 {
      %c0_99 = arith.constant 0 : index
      %c0_100 = arith.constant 0 : index
      %279 = vector.load %arg15[%c0_99, %c0_100] : memref<1x64xf32, #tpu.memory_space<vmem>>, vector<1x64xf32>
      %c0_101 = arith.constant 0 : index
      %c0_102 = arith.constant 0 : index
      %280 = vector.load %arg16[%c0_101, %c0_102] : memref<1x64xf32, #tpu.memory_space<vmem>>, vector<1x64xf32>
      %cst_103 = arith.constant dense<0.000000e+00> : vector<16xf32>
      %281 = vector.multi_reduction <add>, %274, %cst_103 [1] : vector<16x64xf32> to vector<16xf32>
      %282 = vector.shape_cast %281 : vector<16xf32> to vector<16x1xf32>
      %cst_104 = arith.constant 6.400000e+01 : f32
      %283 = vector.broadcast %cst_104 : f32 to vector<16x1xf32>
      %284 = arith.divf %282, %283 : vector<16x1xf32>
      %285 = vector.broadcast %284 : vector<16x1xf32> to vector<16x64xf32>
      %286 = arith.subf %274, %285 : vector<16x64xf32>
      %287 = arith.mulf %286, %286 : vector<16x64xf32>
      %cst_105 = arith.constant dense<0.000000e+00> : vector<16xf32>
      %288 = vector.multi_reduction <add>, %287, %cst_105 [1] : vector<16x64xf32> to vector<16xf32>
      %289 = vector.shape_cast %288 : vector<16xf32> to vector<16x1xf32>
      %cst_106 = arith.constant 6.400000e+01 : f32
      %290 = vector.broadcast %cst_106 : f32 to vector<16x1xf32>
      %291 = arith.divf %289, %290 : vector<16x1xf32>
      %292 = vector.broadcast %284 : vector<16x1xf32> to vector<16x64xf32>
      %293 = arith.subf %274, %292 : vector<16x64xf32>
      %cst_107 = arith.constant 9.99999974E-6 : f32
      %294 = vector.broadcast %cst_107 : f32 to vector<16x1xf32>
      %295 = arith.addf %291, %294 : vector<16x1xf32>
      %296 = math.rsqrt %295 : vector<16x1xf32>
      %297 = vector.broadcast %296 : vector<16x1xf32> to vector<16x64xf32>
      %298 = arith.mulf %293, %297 : vector<16x64xf32>
      %299 = vector.broadcast %279 : vector<1x64xf32> to vector<16x64xf32>
      %300 = arith.mulf %298, %299 : vector<16x64xf32>
      %301 = vector.broadcast %280 : vector<1x64xf32> to vector<16x64xf32>
      %302 = arith.addf %300, %301 : vector<16x64xf32>
      %303 = vector.shape_cast %302 : vector<16x64xf32> to vector<2x8x64xf32>
      %304 = arith.truncf %303 : vector<2x8x64xf32> to vector<2x8x64xbf16>
      %c0_108 = arith.constant 0 : index
      %c0_109 = arith.constant 0 : index
      %c0_110 = arith.constant 0 : index
      %305 = vector.load %arg17[%c0_108, %c0_109, %c0_110] : memref<2x8x64xbf16, #tpu.memory_space<vmem>>, vector<2x8x64xbf16>
      tpu.vector_store %arg17[%c0_108, %c0_109, %c0_110], %304 {strides = array<i32>} : memref<2x8x64xbf16, #tpu.memory_space<vmem>>, vector<2x8x64xbf16>,
    } else {
    }
    return
  }
  func.func @transform_0(%arg0: i32, %arg1: i32) -> (i32, i32, i32) {
    %c0_i32 = arith.constant 0 : i32
    %c0_i32_0 = arith.constant 0 : i32
    %c0_i32_1 = arith.constant 0 : i32
    return %arg0, %c0_i32, %c0_i32_0 : i32, i32, i32
  }
  func.func @transform_1(%arg0: i32, %arg1: i32) -> (i32, i32, i32) {
    %c0_i32 = arith.constant 0 : i32
    %c0_i32_0 = arith.constant 0 : i32
    %c0_i32_1 = arith.constant 0 : i32
    return %arg1, %c0_i32, %c0_i32_0 : i32, i32, i32
  }
  func.func @transform_2(%arg0: i32, %arg1: i32) -> (i32, i32, i32) {
    %c0_i32 = arith.constant 0 : i32
    %c0_i32_0 = arith.constant 0 : i32
    %c0_i32_1 = arith.constant 0 : i32
    return %arg1, %c0_i32, %c0_i32_0 : i32, i32, i32
  }
  func.func @transform_3(%arg0: i32, %arg1: i32) -> (i32, i32, i32) {
    %c0_i32 = arith.constant 0 : i32
    %c0_i32_0 = arith.constant 0 : i32
    %c0_i32_1 = arith.constant 0 : i32
    return %arg1, %c0_i32, %c0_i32_0 : i32, i32, i32
  }
  func.func @transform_4(%arg0: i32, %arg1: i32) -> (i32, i32, i32) {
    %c0_i32 = arith.constant 0 : i32
    %c0_i32_0 = arith.constant 0 : i32
    %c0_i32_1 = arith.constant 0 : i32
    return %arg1, %c0_i32, %c0_i32_0 : i32, i32, i32
  }
  func.func @transform_5(%arg0: i32, %arg1: i32) -> (i32, i32, i32) {
    %c0_i32 = arith.constant 0 : i32
    %c0_i32_0 = arith.constant 0 : i32
    %c0_i32_1 = arith.constant 0 : i32
    return %arg1, %c0_i32, %c0_i32_0 : i32, i32, i32
  }
  func.func @transform_6(%arg0: i32, %arg1: i32) -> (i32, i32, i32) {
    %c0_i32 = arith.constant 0 : i32
    %c0_i32_0 = arith.constant 0 : i32
    %c0_i32_1 = arith.constant 0 : i32
    return %arg1, %c0_i32, %c0_i32_0 : i32, i32, i32
  }
  func.func @transform_7(%arg0: i32, %arg1: i32) -> (i32, i32, i32) {
    %c0_i32 = arith.constant 0 : i32
    %c0_i32_0 = arith.constant 0 : i32
    %c0_i32_1 = arith.constant 0 : i32
    return %arg1, %c0_i32, %c0_i32_0 : i32, i32, i32
  }
  func.func @transform_8(%arg0: i32, %arg1: i32) -> (i32, i32, i32) {
    %c0_i32 = arith.constant 0 : i32
    %c0_i32_0 = arith.constant 0 : i32
    %c0_i32_1 = arith.constant 0 : i32
    return %arg1, %c0_i32, %c0_i32_0 : i32, i32, i32
  }
  func.func @transform_9(%arg0: i32, %arg1: i32) -> (i32, i32, i32) {
    %c0_i32 = arith.constant 0 : i32
    %c0_i32_0 = arith.constant 0 : i32
    %c0_i32_1 = arith.constant 0 : i32
    return %arg1, %c0_i32, %c0_i32_0 : i32, i32, i32
  }
  func.func @transform_10(%arg0: i32, %arg1: i32) -> (i32, i32, i32) {
    %c0_i32 = arith.constant 0 : i32
    %c0_i32_0 = arith.constant 0 : i32
    %c0_i32_1 = arith.constant 0 : i32
    return %arg1, %c0_i32, %c0_i32_0 : i32, i32, i32
  }
  func.func @transform_11(%arg0: i32, %arg1: i32) -> (i32, i32, i32) {
    %c0_i32 = arith.constant 0 : i32
    %c0_i32_0 = arith.constant 0 : i32
    %c0_i32_1 = arith.constant 0 : i32
    return %arg1, %c0_i32, %c0_i32_0 : i32, i32, i32
  }
  func.func @transform_12(%arg0: i32, %arg1: i32) -> (i32, i32, i32) {
    %c0_i32 = arith.constant 0 : i32
    %c0_i32_0 = arith.constant 0 : i32
    %c0_i32_1 = arith.constant 0 : i32
    return %arg1, %c0_i32, %c0_i32_0 : i32, i32, i32
  }
  func.func @transform_13(%arg0: i32, %arg1: i32) -> (i32, i32) {
    %c0_i32 = arith.constant 0 : i32
    %c0_i32_0 = arith.constant 0 : i32
    %c0_i32_1 = arith.constant 0 : i32
    return %c0_i32, %c0_i32_0 : i32, i32
  }
  func.func @transform_14(%arg0: i32, %arg1: i32) -> (i32, i32) {
    %c0_i32 = arith.constant 0 : i32
    %c0_i32_0 = arith.constant 0 : i32
    %c0_i32_1 = arith.constant 0 : i32
    return %c0_i32, %c0_i32_0 : i32, i32
  }
  func.func @transform_15(%arg0: i32, %arg1: i32) -> (i32, i32, i32) {
    %c0_i32 = arith.constant 0 : i32
    %c0_i32_0 = arith.constant 0 : i32
    %c0_i32_1 = arith.constant 0 : i32
    return %arg0, %c0_i32, %c0_i32_0 : i32, i32, i32
  }
}

</mosaic_0001>

<llo_original>
// kernel: tpu_custom_call.1
$region0: #{tpu_custom_call.1}
  #allocation0 [shape = 'u32[]', space=smem, size = 0x4, offset = 0x4, fixed_abs, tag = 'smem constant byte address 0x4 - core index']
  #allocation1 [shape = 'u32[144,128]{1,0:T(1,128)}', space=vmem, size = 0x12000, scoped, tag = 'internal scratch']
  #allocation2 [shape = 'f32[16,64]{1,0:T(8,128)}', space=vmem, size = 0x2000, scoped, tag = 'scratch operand']
  %s0 = inlined_call_operand.hbm [shape: f32[2,8,64], index: 0, kind: input, shape index: {}]
  %s1 = inlined_call_operand.hbm [shape: f32[2,1,64], index: 1, kind: input, shape index: {}]
  %s2 = inlined_call_operand.hbm [shape: f32[2,1,64], index: 2, kind: input, shape index: {}]
  %s3 = inlined_call_operand.vmem [shape: bf16[2,64,192], index: 3, kind: input, shape index: {}]
  %s4 = inlined_call_operand.vmem [shape: f32[2,1,192], index: 4, kind: input, shape index: {}]
  %s5 = inlined_call_operand.vmem [shape: bf16[2,64,64], index: 5, kind: input, shape index: {}]
  %s6 = inlined_call_operand.vmem [shape: f32[2,1,64], index: 6, kind: input, shape index: {}]
  %s7 = inlined_call_operand.vmem [shape: f32[2,1,64], index: 7, kind: input, shape index: {}]
  %s8 = inlined_call_operand.vmem [shape: f32[2,1,64], index: 8, kind: input, shape index: {}]
  %s9 = inlined_call_operand.hbm [shape: bf16[2,64,128], index: 9, kind: input, shape index: {}]
  %s10 = inlined_call_operand.vmem [shape: f32[2,1,128], index: 10, kind: input, shape index: {}]
  %s11 = inlined_call_operand.vmem [shape: bf16[2,128,64], index: 11, kind: input, shape index: {}]
  %s12 = inlined_call_operand.vmem [shape: f32[2,1,64], index: 12, kind: input, shape index: {}]
  %s13 = inlined_call_operand.vmem [shape: f32[1,64], index: 13, kind: input, shape index: {}]
  %s14 = inlined_call_operand.vmem [shape: f32[1,64], index: 14, kind: input, shape index: {}]
  %s15 = inlined_call_operand.hbm [shape: bf16[2,8,64], index: 15, kind: output, shape index: {}]
  %s16 = sld [smem:[#allocation0]]
  $region117: #{tpu_custom_call.1} parent=0
    _
  %s18 = ssub.s32 1, %s16
  %s19 = scalar_select 0, %s18, %s16
  $region1: #{tpu_custom_call.1} parent=0
    #allocation3 [shape = 'u8[8192]{0}', space=vmem, size = 0x2000, scoped, tag = 'input window, operand 0, single buffered']
    #allocation4 [shape = 's32[2]{0}', space=sflag, size = 0x8, scoped, tag = 'scoped memory for tpu_custom_call.1']
    #allocation5 [shape = 's32[2]{0}', space=sflag, size = 0x8, scoped, tag = 'scoped memory for tpu_custom_call.1']
    #allocation6 [shape = 'u8[1024]{0}', space=vmem, size = 0x400, scoped, tag = 'input window, operand 1']
    #allocation7 [shape = 's32[2]{0}', space=sflag, size = 0x8, scoped, tag = 'scoped memory for tpu_custom_call.1']
    #allocation8 [shape = 'u8[1024]{0}', space=vmem, size = 0x400, scoped, tag = 'input window, operand 2']
    #allocation9 [shape = 'u8[32768]{0}', space=vmem, size = 0x8000, scoped, tag = 'input window, operand 9']
    #allocation10 [shape = 's32[2]{0}', space=sflag, size = 0x8, scoped, tag = 'scoped memory for tpu_custom_call.1']
    #allocation11 [shape = 'u8[4096]{0}', space=vmem, size = 0x1000, scoped, tag = 'output window, operand 0, single buffered']
    %20 = vsyncpa [#allocation4], 0
    %21 = vsyncpa [#allocation7], 0
    %s22 = scalar_lea.sflag [#allocation7], 1
    %23 = vsyncpa %s22, 0
    %24 = vsyncpa [#allocation10], 0
    %s25 = scalar_lea.sflag [#allocation10], 1
    %26 = vsyncpa %s25, 0
    %27 = vsyncpa [#allocation5], 0
    loop: start=0, step=1, limit=4
    $region2: #{tpu_custom_call.1} parent=1 // loop_pre_header
      _
    $region3: #{tpu_custom_call.1} parent=1 // loop_header
      %s29 = sphi 0, %s33
      %p30 = scmp.ge.s32.totalorder %s29, 4
      %s36 = sphi 0, %s48
      %s37 = sphi 0, %s44
      %s38 = sphi 0, %s36
      %s39 = sphi 0, %s37
      %s40 = sphi 0, %s38
      %s41 = sphi 0, %s39
      %s51 = sphi 0, %s53
      %s54 = sphi 0, %s51
      %s55 = sphi 0, %s54
      %s71 = sphi 0, %s55
      %s77 = sphi 0, %s79
      %s80 = sphi 0, %s77
      %s81 = sphi 0, %s80
      %s97 = sphi 0, %s81
      %s103 = sphi 0, %s105
      %s106 = sphi 0, %s103
      %s107 = sphi 0, %s106
      %s123 = sphi 0, %s107
      %s129 = sphi 0, %s131
      %s132 = sphi 0, %s129
      %s133 = sphi 0, %s132
      %s149 = sphi 0, %s133
      %s155 = sphi 0, %s157
      %s158 = sphi 0, %s155
      %s159 = sphi 0, %s158
      %s175 = sphi 0, %s159
      %s181 = sphi 0, %s183
      %s184 = sphi 0, %s181
      %s185 = sphi 0, %s184
      %s201 = sphi 0, %s185
      %s207 = sphi 0, %s209
      %s210 = sphi 0, %s207
      %s211 = sphi 0, %s210
      %s227 = sphi 0, %s211
      %s233 = sphi 0, %s235
      %s236 = sphi 0, %s233
      %s237 = sphi 0, %s236
      %s253 = sphi 0, %s237
      %s259 = sphi 0, %s261
      %s262 = sphi 0, %s259
      %s263 = sphi 0, %s262
      %s279 = sphi 0, %s263
      %s285 = sphi 0, %s287
      %s288 = sphi 0, %s285
      %s289 = sphi 0, %s288
      %s305 = sphi 0, %s289
      %s311 = sphi 0, %s313
      %s314 = sphi 0, %s311
      %s315 = sphi 0, %s314
      %s331 = sphi 0, %s315
      %s337 = sphi 0, %s339
      %s340 = sphi 0, %s337
      %s341 = sphi 0, %s340
      %s357 = sphi 0, %s341
      %s363 = sphi 0, %s365
      %s366 = sphi 0, %s363
      %s367 = sphi 0, %s366
      %s383 = sphi 0, %s367
      %s387 = sphi 0, %s387
      %s389 = sphi 0, %s387
      %s390 = sphi 0, %s389
      %s404 = sphi 0, %s390
      %s408 = sphi 0, %s408
      %s410 = sphi 0, %s408
      %s411 = sphi 0, %s410
      %s425 = sphi 0, %s411
      %s431 = sphi 0, %s433
      %s434 = sphi 0, %s431
      %s435 = sphi 0, %s434
      %s451 = sphi 0, %s435
    $region4: #{tpu_custom_call.1} parent=1 // loop_header_branch
      %32 = sbr.rel (%p30) target = $region8
    $region5: #{tpu_custom_call.1} parent=1 // loop_body
      %s34 = ssub.s32 %s29, 1
      %s35 = ssub.s32 %s29, 2
      %s42 = sadd.s32 1, %s37
      %p43 = scmp.ge.s32.totalorder %s42, 2
      %s44 = scalar_select %p43, 0, %s42
      %s45 = sadd.s32 1, %s36
      %s46 = scalar_select %p43, %s45, %s36
      %p47 = scmp.ge.s32.totalorder %s46, 1
      %s48 = scalar_select %p47, 0, %s46
      %s49 = ssub.s32 %s36, %s48
      %p50 = scmp.eq.s32.totalorder %s49, 0
      %s52 = sadd.s32 %s51, 1
      %s53 = scalar_select %p50, %s51, %s52
      %p56 = pneg %p50
      %p57 = scmp.eq.s32.totalorder %s29, 1
      %p58 = por %p56, %p57
      %p59 = scmp.ne.s32.totalorder %s51, %s54
      %p60 = scmp.eq.s32.totalorder %s29, 0
      %p61 = por %p59, %p60
      %p62 = scmp.ne.s32.totalorder %s51, %s54
      %p63 = scmp.eq.s32.totalorder %s34, 1
      %p64 = por %p62, %p63
      %p65 = scmp.ne.s32.totalorder %s54, %s55
      %p66 = scmp.eq.s32.totalorder %s34, 0
      %p67 = por %p65, %p66
      %p68 = scmp.ne.s32.totalorder %s54, %s55
      %p69 = scmp.eq.s32.totalorder %s35, 1
      %p70 = por %p68, %p69
      %p72 = scmp.ne.s32.totalorder %s55, %s71
      %p73 = scmp.eq.s32.totalorder %s35, 0
      %p74 = por %p72, %p73
      %s75 = ssub.s32 %s37, %s44
      %p76 = scmp.eq.s32.totalorder %s75, 0
      %s78 = sadd.s32 %s77, 1
      %s79 = scalar_select %p76, %s77, %s78
      %p82 = pneg %p76
      %p83 = scmp.eq.s32.totalorder %s29, 1
      %p84 = por %p82, %p83
      %p85 = scmp.ne.s32.totalorder %s77, %s80
      %p86 = scmp.eq.s32.totalorder %s29, 0
      %p87 = por %p85, %p86
      %p88 = scmp.ne.s32.totalorder %s77, %s80
      %p89 = scmp.eq.s32.totalorder %s34, 1
      %p90 = por %p88, %p89
      %p91 = scmp.ne.s32.totalorder %s80, %s81
      %p92 = scmp.eq.s32.totalorder %s34, 0
      %p93 = por %p91, %p92
      %p94 = scmp.ne.s32.totalorder %s80, %s81
      %p95 = scmp.eq.s32.totalorder %s35, 1
      %p96 = por %p94, %p95
      %p98 = scmp.ne.s32.totalorder %s81, %s97
      %p99 = scmp.eq.s32.totalorder %s35, 0
      %p100 = por %p98, %p99
      %s101 = ssub.s32 %s37, %s44
      %p102 = scmp.eq.s32.totalorder %s101, 0
      %s104 = sadd.s32 %s103, 1
      %s105 = scalar_select %p102, %s103, %s104
      %p108 = pneg %p102
      %p109 = scmp.eq.s32.totalorder %s29, 1
      %p110 = por %p108, %p109
      %p111 = scmp.ne.s32.totalorder %s103, %s106
      %p112 = scmp.eq.s32.totalorder %s29, 0
      %p113 = por %p111, %p112
      %p114 = scmp.ne.s32.totalorder %s103, %s106
      %p115 = scmp.eq.s32.totalorder %s34, 1
      %p116 = por %p114, %p115
      %p117 = scmp.ne.s32.totalorder %s106, %s107
      %p118 = scmp.eq.s32.totalorder %s34, 0
      %p119 = por %p117, %p118
      %p120 = scmp.ne.s32.totalorder %s106, %s107
      %p121 = scmp.eq.s32.totalorder %s35, 1
      %p122 = por %p120, %p121
      %p124 = scmp.ne.s32.totalorder %s107, %s123
      %p125 = scmp.eq.s32.totalorder %s35, 0
      %p126 = por %p124, %p125
      %s127 = ssub.s32 %s37, %s44
      %p128 = scmp.eq.s32.totalorder %s127, 0
      %s130 = sadd.s32 %s129, 1
      %s131 = scalar_select %p128, %s129, %s130
      %p134 = pneg %p128
      %p135 = scmp.eq.s32.totalorder %s29, 1
      %p136 = por %p134, %p135
      %p137 = scmp.ne.s32.totalorder %s129, %s132
      %p138 = scmp.eq.s32.totalorder %s29, 0
      %p139 = por %p137, %p138
      %p140 = scmp.ne.s32.totalorder %s129, %s132
      %p141 = scmp.eq.s32.totalorder %s34, 1
      %p142 = por %p140, %p141
      %p143 = scmp.ne.s32.totalorder %s132, %s133
      %p144 = scmp.eq.s32.totalorder %s34, 0
      %p145 = por %p143, %p144
      %p146 = scmp.ne.s32.totalorder %s132, %s133
      %p147 = scmp.eq.s32.totalorder %s35, 1
      %p148 = por %p146, %p147
      %p150 = scmp.ne.s32.totalorder %s133, %s149
      %p151 = scmp.eq.s32.totalorder %s35, 0
      %p152 = por %p150, %p151
      %s153 = ssub.s32 %s37, %s44
      %p154 = scmp.eq.s32.totalorder %s153, 0
      %s156 = sadd.s32 %s155, 1
      %s157 = scalar_select %p154, %s155, %s156
      %p160 = pneg %p154
      %p161 = scmp.eq.s32.totalorder %s29, 1
      %p162 = por %p160, %p161
      %p163 = scmp.ne.s32.totalorder %s155, %s158
      %p164 = scmp.eq.s32.totalorder %s29, 0
      %p165 = por %p163, %p164
      %p166 = scmp.ne.s32.totalorder %s155, %s158
      %p167 = scmp.eq.s32.totalorder %s34, 1
      %p168 = por %p166, %p167
      %p169 = scmp.ne.s32.totalorder %s158, %s159
      %p170 = scmp.eq.s32.totalorder %s34, 0
      %p171 = por %p169, %p170
      %p172 = scmp.ne.s32.totalorder %s158, %s159
      %p173 = scmp.eq.s32.totalorder %s35, 1
      %p174 = por %p172, %p173
      %p176 = scmp.ne.s32.totalorder %s159, %s175
      %p177 = scmp.eq.s32.totalorder %s35, 0
      %p178 = por %p176, %p177
      %s179 = ssub.s32 %s37, %s44
      %p180 = scmp.eq.s32.totalorder %s179, 0
      %s182 = sadd.s32 %s181, 1
      %s183 = scalar_select %p180, %s181, %s182
      %p186 = pneg %p180
      %p187 = scmp.eq.s32.totalorder %s29, 1
      %p188 = por %p186, %p187
      %p189 = scmp.ne.s32.totalorder %s181, %s184
      %p190 = scmp.eq.s32.totalorder %s29, 0
      %p191 = por %p189, %p190
      %p192 = scmp.ne.s32.totalorder %s181, %s184
      %p193 = scmp.eq.s32.totalorder %s34, 1
      %p194 = por %p192, %p193
      %p195 = scmp.ne.s32.totalorder %s184, %s185
      %p196 = scmp.eq.s32.totalorder %s34, 0
      %p197 = por %p195, %p196
      %p198 = scmp.ne.s32.totalorder %s184, %s185
      %p199 = scmp.eq.s32.totalorder %s35, 1
      %p200 = por %p198, %p199
      %p202 = scmp.ne.s32.totalorder %s185, %s201
      %p203 = scmp.eq.s32.totalorder %s35, 0
      %p204 = por %p202, %p203
      %s205 = ssub.s32 %s37, %s44
      %p206 = scmp.eq.s32.totalorder %s205, 0
      %s208 = sadd.s32 %s207, 1
      %s209 = scalar_select %p206, %s207, %s208
      %p212 = pneg %p206
      %p213 = scmp.eq.s32.totalorder %s29, 1
      %p214 = por %p212, %p213
      %p215 = scmp.ne.s32.totalorder %s207, %s210
      %p216 = scmp.eq.s32.totalorder %s29, 0
      %p217 = por %p215, %p216
      %p218 = scmp.ne.s32.totalorder %s207, %s210
      %p219 = scmp.eq.s32.totalorder %s34, 1
      %p220 = por %p218, %p219
      %p221 = scmp.ne.s32.totalorder %s210, %s211
      %p222 = scmp.eq.s32.totalorder %s34, 0
      %p223 = por %p221, %p222
      %p224 = scmp.ne.s32.totalorder %s210, %s211
      %p225 = scmp.eq.s32.totalorder %s35, 1
      %p226 = por %p224, %p225
      %p228 = scmp.ne.s32.totalorder %s211, %s227
      %p229 = scmp.eq.s32.totalorder %s35, 0
      %p230 = por %p228, %p229
      %s231 = ssub.s32 %s37, %s44
      %p232 = scmp.eq.s32.totalorder %s231, 0
      %s234 = sadd.s32 %s233, 1
      %s235 = scalar_select %p232, %s233, %s234
      %p238 = pneg %p232
      %p239 = scmp.eq.s32.totalorder %s29, 1
      %p240 = por %p238, %p239
      %p241 = scmp.ne.s32.totalorder %s233, %s236
      %p242 = scmp.eq.s32.totalorder %s29, 0
      %p243 = por %p241, %p242
      %p244 = scmp.ne.s32.totalorder %s233, %s236
      %p245 = scmp.eq.s32.totalorder %s34, 1
      %p246 = por %p244, %p245
      %p247 = scmp.ne.s32.totalorder %s236, %s237
      %p248 = scmp.eq.s32.totalorder %s34, 0
      %p249 = por %p247, %p248
      %p250 = scmp.ne.s32.totalorder %s236, %s237
      %p251 = scmp.eq.s32.totalorder %s35, 1
      %p252 = por %p250, %p251
      %p254 = scmp.ne.s32.totalorder %s237, %s253
      %p255 = scmp.eq.s32.totalorder %s35, 0
      %p256 = por %p254, %p255
      %s257 = ssub.s32 %s37, %s44
      %p258 = scmp.eq.s32.totalorder %s257, 0
      %s260 = sadd.s32 %s259, 1
      %s261 = scalar_select %p258, %s259, %s260
      %p264 = pneg %p258
      %p265 = scmp.eq.s32.totalorder %s29, 1
      %p266 = por %p264, %p265
      %p267 = scmp.ne.s32.totalorder %s259, %s262
      %p268 = scmp.eq.s32.totalorder %s29, 0
      %p269 = por %p267, %p268
      %p270 = scmp.ne.s32.totalorder %s259, %s262
      %p271 = scmp.eq.s32.totalorder %s34, 1
      %p272 = por %p270, %p271
      %p273 = scmp.ne.s32.totalorder %s262, %s263
      %p274 = scmp.eq.s32.totalorder %s34, 0
      %p275 = por %p273, %p274
      %p276 = scmp.ne.s32.totalorder %s262, %s263
      %p277 = scmp.eq.s32.totalorder %s35, 1
      %p278 = por %p276, %p277
      %p280 = scmp.ne.s32.totalorder %s263, %s279
      %p281 = scmp.eq.s32.totalorder %s35, 0
      %p282 = por %p280, %p281
      %s283 = ssub.s32 %s37, %s44
      %p284 = scmp.eq.s32.totalorder %s283, 0
      %s286 = sadd.s32 %s285, 1
      %s287 = scalar_select %p284, %s285, %s286
      %p290 = pneg %p284
      %p291 = scmp.eq.s32.totalorder %s29, 1
      %p292 = por %p290, %p291
      %p293 = scmp.ne.s32.totalorder %s285, %s288
      %p294 = scmp.eq.s32.totalorder %s29, 0
      %p295 = por %p293, %p294
      %p296 = scmp.ne.s32.totalorder %s285, %s288
      %p297 = scmp.eq.s32.totalorder %s34, 1
      %p298 = por %p296, %p297
      %p299 = scmp.ne.s32.totalorder %s288, %s289
      %p300 = scmp.eq.s32.totalorder %s34, 0
      %p301 = por %p299, %p300
      %p302 = scmp.ne.s32.totalorder %s288, %s289
      %p303 = scmp.eq.s32.totalorder %s35, 1
      %p304 = por %p302, %p303
      %p306 = scmp.ne.s32.totalorder %s289, %s305
      %p307 = scmp.eq.s32.totalorder %s35, 0
      %p308 = por %p306, %p307
      %s309 = ssub.s32 %s37, %s44
      %p310 = scmp.eq.s32.totalorder %s309, 0
      %s312 = sadd.s32 %s311, 1
      %s313 = scalar_select %p310, %s311, %s312
      %p316 = pneg %p310
      %p317 = scmp.eq.s32.totalorder %s29, 1
      %p318 = por %p316, %p317
      %p319 = scmp.ne.s32.totalorder %s311, %s314
      %p320 = scmp.eq.s32.totalorder %s29, 0
      %p321 = por %p319, %p320
      %p322 = scmp.ne.s32.totalorder %s311, %s314
      %p323 = scmp.eq.s32.totalorder %s34, 1
      %p324 = por %p322, %p323
      %p325 = scmp.ne.s32.totalorder %s314, %s315
      %p326 = scmp.eq.s32.totalorder %s34, 0
      %p327 = por %p325, %p326
      %p328 = scmp.ne.s32.totalorder %s314, %s315
      %p329 = scmp.eq.s32.totalorder %s35, 1
      %p330 = por %p328, %p329
      %p332 = scmp.ne.s32.totalorder %s315, %s331
      %p333 = scmp.eq.s32.totalorder %s35, 0
      %p334 = por %p332, %p333
      %s335 = ssub.s32 %s37, %s44
      %p336 = scmp.eq.s32.totalorder %s335, 0
      %s338 = sadd.s32 %s337, 1
      %s339 = scalar_select %p336, %s337, %s338
      %p342 = pneg %p336
      %p343 = scmp.eq.s32.totalorder %s29, 1
      %p344 = por %p342, %p343
      %p345 = scmp.ne.s32.totalorder %s337, %s340
      %p346 = scmp.eq.s32.totalorder %s29, 0
      %p347 = por %p345, %p346
      %p348 = scmp.ne.s32.totalorder %s337, %s340
      %p349 = scmp.eq.s32.totalorder %s34, 1
      %p350 = por %p348, %p349
      %p351 = scmp.ne.s32.totalorder %s340, %s341
      %p352 = scmp.eq.s32.totalorder %s34, 0
      %p353 = por %p351, %p352
      %p354 = scmp.ne.s32.totalorder %s340, %s341
      %p355 = scmp.eq.s32.totalorder %s35, 1
      %p356 = por %p354, %p355
      %p358 = scmp.ne.s32.totalorder %s341, %s357
      %p359 = scmp.eq.s32.totalorder %s35, 0
      %p360 = por %p358, %p359
      %s361 = ssub.s32 %s37, %s44
      %p362 = scmp.eq.s32.totalorder %s361, 0
      %s364 = sadd.s32 %s363, 1
      %s365 = scalar_select %p362, %s363, %s364
      %p368 = pneg %p362
      %p369 = scmp.eq.s32.totalorder %s29, 1
      %p370 = por %p368, %p369
      %p371 = scmp.ne.s32.totalorder %s363, %s366
      %p372 = scmp.eq.s32.totalorder %s29, 0
      %p373 = por %p371, %p372
      %p374 = scmp.ne.s32.totalorder %s363, %s366
      %p375 = scmp.eq.s32.totalorder %s34, 1
      %p376 = por %p374, %p375
      %p377 = scmp.ne.s32.totalorder %s366, %s367
      %p378 = scmp.eq.s32.totalorder %s34, 0
      %p379 = por %p377, %p378
      %p380 = scmp.ne.s32.totalorder %s366, %s367
      %p381 = scmp.eq.s32.totalorder %s35, 1
      %p382 = por %p380, %p381
      %p384 = scmp.ne.s32.totalorder %s367, %s383
      %p385 = scmp.eq.s32.totalorder %s35, 0
      %p386 = por %p384, %p385
      %s388 = sadd.s32 %s387, 1
      %p391 = scmp.eq.s32.totalorder %s29, 1
      %p392 = scmp.ne.s32.totalorder %s387, %s389
      %p393 = scmp.eq.s32.totalorder %s29, 0
      %p394 = por %p392, %p393
      %p395 = scmp.ne.s32.totalorder %s387, %s389
      %p396 = scmp.eq.s32.totalorder %s34, 1
      %p397 = por %p395, %p396
      %p398 = scmp.ne.s32.totalorder %s389, %s390
      %p399 = scmp.eq.s32.totalorder %s34, 0
      %p400 = por %p398, %p399
      %p401 = scmp.ne.s32.totalorder %s389, %s390
      %p402 = scmp.eq.s32.totalorder %s35, 1
      %p403 = por %p401, %p402
      %p405 = scmp.ne.s32.totalorder %s390, %s404
      %p406 = scmp.eq.s32.totalorder %s35, 0
      %p407 = por %p405, %p406
      %s409 = sadd.s32 %s408, 1
      %p412 = scmp.eq.s32.totalorder %s29, 1
      %p413 = scmp.ne.s32.totalorder %s408, %s410
      %p414 = scmp.eq.s32.totalorder %s29, 0
      %p415 = por %p413, %p414
      %p416 = scmp.ne.s32.totalorder %s408, %s410
      %p417 = scmp.eq.s32.totalorder %s34, 1
      %p418 = por %p416, %p417
      %p419 = scmp.ne.s32.totalorder %s410, %s411
      %p420 = scmp.eq.s32.totalorder %s34, 0
      %p421 = por %p419, %p420
      %p422 = scmp.ne.s32.totalorder %s410, %s411
      %p423 = scmp.eq.s32.totalorder %s35, 1
      %p424 = por %p422, %p423
      %p426 = scmp.ne.s32.totalorder %s411, %s425
      %p427 = scmp.eq.s32.totalorder %s35, 0
      %p428 = por %p426, %p427
      %s429 = ssub.s32 %s36, %s48
      %p430 = scmp.eq.s32.totalorder %s429, 0
      %s432 = sadd.s32 %s431, 1
      %s433 = scalar_select %p430, %s431, %s432
      %p436 = pneg %p430
      %p437 = scmp.eq.s32.totalorder %s29, 1
      %p438 = por %p436, %p437
      %p439 = scmp.ne.s32.totalorder %s431, %s434
      %p440 = scmp.eq.s32.totalorder %s29, 0
      %p441 = por %p439, %p440
      %p442 = scmp.ne.s32.totalorder %s431, %s434
      %p443 = scmp.eq.s32.totalorder %s34, 1
      %p444 = por %p442, %p443
      %p445 = scmp.ne.s32.totalorder %s434, %s435
      %p446 = scmp.eq.s32.totalorder %s34, 0
      %p447 = por %p445, %p446
      %p448 = scmp.ne.s32.totalorder %s434, %s435
      %p449 = scmp.eq.s32.totalorder %s35, 1
      %p450 = por %p448, %p449
      %p452 = scmp.ne.s32.totalorder %s435, %s451
      %p453 = scmp.eq.s32.totalorder %s35, 0
      %p454 = por %p452, %p453
      %p455 = scmp.le.s32.totalorder 1, %s29
      %p456 = scmp.lt.s32.totalorder %s29, 3
      %p457 = pnand %p455, %p456
      %p458 = pneg %p457
      // Predicated region
      $region9: #{tpu_custom_call.1} parent=5 // pred_check
        _
      $region10: #{tpu_custom_call.1} parent=5 // pred_check_branch
        %460 = sbr.rel (%p457) target = $region12
      $region11: #{tpu_custom_call.1} parent=5 // pred_region
        %s461 = ssub.s32 %s29, 1
        // Predicated region
        $region13: #{tpu_custom_call.1} parent=11 // pred_check
          %p462 = pneg %p67
        $region14: #{tpu_custom_call.1} parent=11 // pred_check_branch
          %464 = sbr.rel (%p462) target = $region16
        $region15: #{tpu_custom_call.1} parent=11 // pred_region
          %s465 = smul.u32 2, %s38
          %s467 = ssub.s32 256, 256
          %468 = vsyncadd [#allocation4], %s467
          %s469 = smul.addr %s465, 128
          %s470 = scalar_lea.hbm %s0, %s469
          %s471 = sshll.u32 [#allocation3], 4
          %s472 = int_to_ptr.vmem [resolvable:$true] %s471
          %477 = dma.hbm_to_vmem [thread:$0]  %s470, 256, %s472, [#allocation4], 128, 128, 8
        $region16: #{tpu_custom_call.1} parent=11 // pred_fallthru
          _
        // Predicated region
        $region17: #{tpu_custom_call.1} parent=11 // pred_check
          %p478 = pneg %p400
        $region18: #{tpu_custom_call.1} parent=11 // pred_check_branch
          %480 = sbr.rel (%p478) target = $region20
        $region19: #{tpu_custom_call.1} parent=11 // pred_region
          _
        $region20: #{tpu_custom_call.1} parent=11 // pred_fallthru
          _
        // Predicated region
        $region21: #{tpu_custom_call.1} parent=11 // pred_check
          %p481 = pneg %p421
        $region22: #{tpu_custom_call.1} parent=11 // pred_check_branch
          %483 = sbr.rel (%p481) target = $region24
        $region23: #{tpu_custom_call.1} parent=11 // pred_region
          _
        $region24: #{tpu_custom_call.1} parent=11 // pred_fallthru
          _
      $region12: #{tpu_custom_call.1} parent=5 // pred_fallthru
        _
      %p484 = scmp.lt.s32.totalorder %s29, 2
      // Predicated region
      $region25: #{tpu_custom_call.1} parent=5 // pred_check
        %p485 = pneg %p484
      $region26: #{tpu_custom_call.1} parent=5 // pred_check_branch
        %487 = sbr.rel (%p485) target = $region28
      $region27: #{tpu_custom_call.1} parent=5 // pred_region
        // Predicated region
        $region29: #{tpu_custom_call.1} parent=27 // pred_check
          %p488 = pneg %p87
        $region30: #{tpu_custom_call.1} parent=27 // pred_check_branch
          %490 = sbr.rel (%p488) target = $region32
        $region31: #{tpu_custom_call.1} parent=27 // pred_region
          %s491 = sand.u32 %s29, 1
          %s492 = scalar_lea.sflag [#allocation7], %s491
          %s493 = sand.u32 %s77, 1
          %s494 = scalar_lea.vmem [#allocation6], %s493
          %s496 = ssub.s32 16, 16
          %497 = vsyncadd %s492, %s496
          %s498 = smul.addr %s37, 16
          %s499 = scalar_lea.hbm %s1, %s498
          %s501 = sshll.u32 %s494, 4
          %s502 = int_to_ptr.vmem [resolvable:$true] %s501
          %504 = dma.hbm_to_vmem [thread:$0]  %s499, 16, %s502, %s492
        $region32: #{tpu_custom_call.1} parent=27 // pred_fallthru
          _
        // Predicated region
        $region33: #{tpu_custom_call.1} parent=27 // pred_check
          %p505 = pneg %p113
        $region34: #{tpu_custom_call.1} parent=27 // pred_check_branch
          %507 = sbr.rel (%p505) target = $region36
        $region35: #{tpu_custom_call.1} parent=27 // pred_region
          %s508 = sand.u32 %s29, 1
          %s509 = scalar_lea.sflag [#allocation7], %s508
          %s510 = sand.u32 %s103, 1
          %s511 = scalar_lea.vmem [#allocation8], %s510
          %s513 = ssub.s32 16, 16
          %514 = vsyncadd %s509, %s513
          %s515 = smul.addr %s37, 16
          %s516 = scalar_lea.hbm %s2, %s515
          %s518 = sshll.u32 %s511, 4
          %s519 = int_to_ptr.vmem [resolvable:$true] %s518
          %521 = dma.hbm_to_vmem [thread:$0]  %s516, 16, %s519, %s509
        $region36: #{tpu_custom_call.1} parent=27 // pred_fallthru
          _
        // Predicated region
        $region37: #{tpu_custom_call.1} parent=27 // pred_check
          %p522 = pneg %p139
        $region38: #{tpu_custom_call.1} parent=27 // pred_check_branch
          %524 = sbr.rel (%p522) target = $region40
        $region39: #{tpu_custom_call.1} parent=27 // pred_region
          %p525 = scmp.lt.s32.totalorder %s37, 1
          %s526 = scalar_select %p525, %s37, 1
          %s527 = smul.addr %s526, 16
          %s528 = smul.addr %s527, 4
          %s529 = scalar_lea.vmem %s3, %s528
        $region40: #{tpu_custom_call.1} parent=27 // pred_fallthru
          _
        // Predicated region
        $region41: #{tpu_custom_call.1} parent=27 // pred_check
          %p530 = pneg %p165
        $region42: #{tpu_custom_call.1} parent=27 // pred_check_branch
          %532 = sbr.rel (%p530) target = $region44
        $region43: #{tpu_custom_call.1} parent=27 // pred_region
          %p533 = scmp.lt.s32.totalorder %s37, 1
          %s534 = scalar_select %p533, %s37, 1
          %s535 = smul.addr %s534, 2
          %s536 = scalar_lea.vmem %s4, %s535
        $region44: #{tpu_custom_call.1} parent=27 // pred_fallthru
          _
        // Predicated region
        $region45: #{tpu_custom_call.1} parent=27 // pred_check
          %p537 = pneg %p191
        $region46: #{tpu_custom_call.1} parent=27 // pred_check_branch
          %539 = sbr.rel (%p537) target = $region48
        $region47: #{tpu_custom_call.1} parent=27 // pred_region
          %p540 = scmp.lt.s32.totalorder %s37, 1
          %s541 = scalar_select %p540, %s37, 1
          %s542 = smul.addr %s541, 8
          %s543 = smul.addr %s542, 4
          %s544 = scalar_lea.vmem %s5, %s543
        $region48: #{tpu_custom_call.1} parent=27 // pred_fallthru
          _
        // Predicated region
        $region49: #{tpu_custom_call.1} parent=27 // pred_check
          %p545 = pneg %p217
        $region50: #{tpu_custom_call.1} parent=27 // pred_check_branch
          %547 = sbr.rel (%p545) target = $region52
        $region51: #{tpu_custom_call.1} parent=27 // pred_region
          %p548 = scmp.lt.s32.totalorder %s37, 1
          %s549 = scalar_select %p548, %s37, 1
          %s550 = scalar_lea.vmem %s6, %s549
        $region52: #{tpu_custom_call.1} parent=27 // pred_fallthru
          _
        // Predicated region
        $region53: #{tpu_custom_call.1} parent=27 // pred_check
          %p551 = pneg %p243
        $region54: #{tpu_custom_call.1} parent=27 // pred_check_branch
          %553 = sbr.rel (%p551) target = $region56
        $region55: #{tpu_custom_call.1} parent=27 // pred_region
          %p554 = scmp.lt.s32.totalorder %s37, 1
          %s555 = scalar_select %p554, %s37, 1
          %s556 = scalar_lea.vmem %s7, %s555
        $region56: #{tpu_custom_call.1} parent=27 // pred_fallthru
          _
        // Predicated region
        $region57: #{tpu_custom_call.1} parent=27 // pred_check
          %p557 = pneg %p269
        $region58: #{tpu_custom_call.1} parent=27 // pred_check_branch
          %559 = sbr.rel (%p557) target = $region60
        $region59: #{tpu_custom_call.1} parent=27 // pred_region
          %p560 = scmp.lt.s32.totalorder %s37, 1
          %s561 = scalar_select %p560, %s37, 1
          %s562 = scalar_lea.vmem %s8, %s561
        $region60: #{tpu_custom_call.1} parent=27 // pred_fallthru
          _
        // Predicated region
        $region61: #{tpu_custom_call.1} parent=27 // pred_check
          %p563 = pneg %p295
        $region62: #{tpu_custom_call.1} parent=27 // pred_check_branch
          %565 = sbr.rel (%p563) target = $region64
        $region63: #{tpu_custom_call.1} parent=27 // pred_region
          %s566 = sand.u32 %s285, 1
          %s567 = scalar_lea.sflag [#allocation10], %s566
          %s568 = sand.u32 %s285, 1
          %s569 = smul.addr %s568, 32
          %s570 = scalar_lea.vmem [#allocation9], %s569
          %s572 = ssub.s32 512, 512
          %573 = vsyncadd %s567, %s572
          %s574 = smul.addr %s37, 8
          %s575 = smul.addr %s574, 64
          %s576 = scalar_lea.hbm %s9, %s575
          %s577 = sshll.u32 %s570, 4
          %s578 = int_to_ptr.vmem [resolvable:$true] %s577
          %583 = dma.hbm_to_vmem [thread:$0]  %s576, 512, %s578, %s567, 64, 64, 4
        $region64: #{tpu_custom_call.1} parent=27 // pred_fallthru
          _
        // Predicated region
        $region65: #{tpu_custom_call.1} parent=27 // pred_check
          %p584 = pneg %p321
        $region66: #{tpu_custom_call.1} parent=27 // pred_check_branch
          %586 = sbr.rel (%p584) target = $region68
        $region67: #{tpu_custom_call.1} parent=27 // pred_region
          %p587 = scmp.lt.s32.totalorder %s37, 1
          %s588 = scalar_select %p587, %s37, 1
          %s589 = scalar_lea.vmem %s10, %s588
        $region68: #{tpu_custom_call.1} parent=27 // pred_fallthru
          _
        // Predicated region
        $region69: #{tpu_custom_call.1} parent=27 // pred_check
          %p590 = pneg %p347
        $region70: #{tpu_custom_call.1} parent=27 // pred_check_branch
          %592 = sbr.rel (%p590) target = $region72
        $region71: #{tpu_custom_call.1} parent=27 // pred_region
          %p593 = scmp.lt.s32.totalorder %s37, 1
          %s594 = scalar_select %p593, %s37, 1
          %s595 = smul.addr %s594, 16
          %s596 = smul.addr %s595, 4
          %s597 = scalar_lea.vmem %s11, %s596
        $region72: #{tpu_custom_call.1} parent=27 // pred_fallthru
          _
        // Predicated region
        $region73: #{tpu_custom_call.1} parent=27 // pred_check
          %p598 = pneg %p373
        $region74: #{tpu_custom_call.1} parent=27 // pred_check_branch
          %600 = sbr.rel (%p598) target = $region76
        $region75: #{tpu_custom_call.1} parent=27 // pred_region
          %p601 = scmp.lt.s32.totalorder %s37, 1
          %s602 = scalar_select %p601, %s37, 1
          %s603 = scalar_lea.vmem %s12, %s602
        $region76: #{tpu_custom_call.1} parent=27 // pred_fallthru
          _
      $region28: #{tpu_custom_call.1} parent=5 // pred_fallthru
        _
      %p604 = scmp.le.s32.totalorder 1, %s29
      %p605 = scmp.lt.s32.totalorder %s29, 3
      %p606 = pnand %p604, %p605
      %p607 = pneg %p606
      // Predicated region
      $region77: #{tpu_custom_call.1} parent=5 // pred_check
        _
      $region78: #{tpu_custom_call.1} parent=5 // pred_check_branch
        %609 = sbr.rel (%p606) target = $region80
      $region79: #{tpu_custom_call.1} parent=5 // pred_region
        %s610 = ssub.s32 %s29, 1
        // Predicated region
        $region81: #{tpu_custom_call.1} parent=79 // pred_check
          %p611 = pneg %p67
        $region82: #{tpu_custom_call.1} parent=79 // pred_check_branch
          %613 = sbr.rel (%p611) target = $region84
        $region83: #{tpu_custom_call.1} parent=79 // pred_region
          %614 = dma.done [#allocation4], 256
        $region84: #{tpu_custom_call.1} parent=79 // pred_fallthru
          _
        %s615 = sand.u32 %s34, 1
        %s616 = scalar_lea.sflag [#allocation7], %s615
        %s617 = sand.u32 %s80, 1
        %s618 = scalar_lea.vmem [#allocation6], %s617
        // Predicated region
        $region85: #{tpu_custom_call.1} parent=79 // pred_check
          %p619 = pneg %p93
        $region86: #{tpu_custom_call.1} parent=79 // pred_check_branch
          %621 = sbr.rel (%p619) target = $region88
        $region87: #{tpu_custom_call.1} parent=79 // pred_region
          %622 = dma.done %s616, 16
        $region88: #{tpu_custom_call.1} parent=79 // pred_fallthru
          _
        %s623 = sand.u32 %s34, 1
        %s624 = scalar_lea.sflag [#allocation7], %s623
        %s625 = sand.u32 %s106, 1
        %s626 = scalar_lea.vmem [#allocation8], %s625
        // Predicated region
        $region89: #{tpu_custom_call.1} parent=79 // pred_check
          %p627 = pneg %p119
        $region90: #{tpu_custom_call.1} parent=79 // pred_check_branch
          %629 = sbr.rel (%p627) target = $region92
        $region91: #{tpu_custom_call.1} parent=79 // pred_region
          %630 = dma.done %s624, 16
        $region92: #{tpu_custom_call.1} parent=79 // pred_fallthru
          _
        %s631 = sand.u32 %s288, 1
        %s632 = scalar_lea.sflag [#allocation10], %s631
        %s633 = sand.u32 %s288, 1
        %s634 = smul.addr %s633, 32
        %s635 = scalar_lea.vmem [#allocation9], %s634
        // Predicated region
        $region93: #{tpu_custom_call.1} parent=79 // pred_check
          %p636 = pneg %p301
        $region94: #{tpu_custom_call.1} parent=79 // pred_check_branch
          %638 = sbr.rel (%p636) target = $region96
        $region95: #{tpu_custom_call.1} parent=79 // pred_region
          %639 = dma.done %s632, 512
        $region96: #{tpu_custom_call.1} parent=79 // pred_fallthru
          _
        %p640 = pneg %p67
        %p641 = pneg %p64
        %s642 = sand.u32 %s34, 1
        %s643 = scalar_lea.sflag [#allocation7], %s642
        %s644 = sand.u32 %s80, 1
        %s645 = scalar_lea.vmem [#allocation6], %s644
        %p646 = pneg %p93
        %p647 = pneg %p90
        %s648 = sand.u32 %s34, 1
        %s649 = scalar_lea.sflag [#allocation7], %s648
        %s650 = sand.u32 %s106, 1
        %s651 = scalar_lea.vmem [#allocation8], %s650
        %p652 = pneg %p119
        %p653 = pneg %p116
        %p654 = scmp.lt.s32.totalorder %s39, 1
        %s655 = scalar_select %p654, %s39, 1
        %s656 = smul.addr %s655, 16
        %s657 = smul.addr %s656, 4
        %s658 = scalar_lea.vmem %s3, %s657
        %p659 = pneg %p145
        %p660 = pneg %p142
        %p661 = scmp.lt.s32.totalorder %s39, 1
        %s662 = scalar_select %p661, %s39, 1
        %s663 = smul.addr %s662, 2
        %s664 = scalar_lea.vmem %s4, %s663
        %p665 = pneg %p171
        %p666 = pneg %p168
        %p667 = scmp.lt.s32.totalorder %s39, 1
        %s668 = scalar_select %p667, %s39, 1
        %s669 = smul.addr %s668, 8
        %s670 = smul.addr %s669, 4
        %s671 = scalar_lea.vmem %s5, %s670
        %p672 = pneg %p197
        %p673 = pneg %p194
        %p674 = scmp.lt.s32.totalorder %s39, 1
        %s675 = scalar_select %p674, %s39, 1
        %s676 = scalar_lea.vmem %s6, %s675
        %p677 = pneg %p223
        %p678 = pneg %p220
        %p679 = scmp.lt.s32.totalorder %s39, 1
        %s680 = scalar_select %p679, %s39, 1
        %s681 = scalar_lea.vmem %s7, %s680
        %p682 = pneg %p249
        %p683 = pneg %p246
        %p684 = scmp.lt.s32.totalorder %s39, 1
        %s685 = scalar_select %p684, %s39, 1
        %s686 = scalar_lea.vmem %s8, %s685
        %p687 = pneg %p275
        %p688 = pneg %p272
        %s689 = sand.u32 %s288, 1
        %s690 = scalar_lea.sflag [#allocation10], %s689
        %s691 = sand.u32 %s288, 1
        %s692 = smul.addr %s691, 32
        %s693 = scalar_lea.vmem [#allocation9], %s692
        %p694 = pneg %p301
        %p695 = pneg %p298
        %p696 = scmp.lt.s32.totalorder %s39, 1
        %s697 = scalar_select %p696, %s39, 1
        %s698 = scalar_lea.vmem %s10, %s697
        %p699 = pneg %p327
        %p700 = pneg %p324
        %p701 = scmp.lt.s32.totalorder %s39, 1
        %s702 = scalar_select %p701, %s39, 1
        %s703 = smul.addr %s702, 16
        %s704 = smul.addr %s703, 4
        %s705 = scalar_lea.vmem %s11, %s704
        %p706 = pneg %p353
        %p707 = pneg %p350
        %p708 = scmp.lt.s32.totalorder %s39, 1
        %s709 = scalar_select %p708, %s39, 1
        %s710 = scalar_lea.vmem %s12, %s709
        %p711 = pneg %p379
        %p712 = pneg %p376
        %p713 = pneg %p400
        %p714 = pneg %p397
        %p715 = pneg %p421
        %p716 = pneg %p418
        %p717 = pneg %p447
        %p718 = pneg %p444
        %s719 = smul.u32 2, %s38
        %p720 = scmp.lt.s32.totalorder %s39, 1
        %s721 = scalar_select %p720, %s39, 1
        %s722 = smul.addr %s721, 16
        %s723 = smul.addr %s722, 4
        %s724 = scalar_lea.vmem %s3, %s723
        %p725 = scmp.lt.s32.totalorder %s39, 1
        %s726 = scalar_select %p725, %s39, 1
        %s727 = smul.addr %s726, 2
        %s728 = scalar_lea.vmem %s4, %s727
        %p729 = scmp.lt.s32.totalorder %s39, 1
        %s730 = scalar_select %p729, %s39, 1
        %s731 = smul.addr %s730, 8
        %s732 = smul.addr %s731, 4
        %s733 = scalar_lea.vmem %s5, %s732
        %p734 = scmp.lt.s32.totalorder %s39, 1
        %s735 = scalar_select %p734, %s39, 1
        %s736 = scalar_lea.vmem %s6, %s735
        %p737 = scmp.lt.s32.totalorder %s39, 1
        %s738 = scalar_select %p737, %s39, 1
        %s739 = scalar_lea.vmem %s7, %s738
        %p740 = scmp.lt.s32.totalorder %s39, 1
        %s741 = scalar_select %p740, %s39, 1
        %s742 = scalar_lea.vmem %s8, %s741
        %p743 = scmp.lt.s32.totalorder %s39, 1
        %s744 = scalar_select %p743, %s39, 1
        %s745 = scalar_lea.vmem %s10, %s744
        %p746 = scmp.lt.s32.totalorder %s39, 1
        %s747 = scalar_select %p746, %s39, 1
        %s748 = smul.addr %s747, 16
        %s749 = smul.addr %s748, 4
        %s750 = scalar_lea.vmem %s11, %s749
        %p751 = scmp.lt.s32.totalorder %s39, 1
        %s752 = scalar_select %p751, %s39, 1
        %s753 = scalar_lea.vmem %s12, %s752
        %s754 = smul.u32 2, %s38
        %p756 = scmp.eq.s32.totalorder %s39, 0
        // Predicated region
        $region97: #{tpu_custom_call.1} parent=79 // pred_check
          %p757 = pneg %p756
        $region98: #{tpu_custom_call.1} parent=79 // pred_check_branch
          %759 = sbr.rel (%p757) target = $region100
        $region99: #{tpu_custom_call.1} parent=79 // pred_region
          %v760 = vld [vmem:[#allocation3] sm:$0xff]
          %v761 = vld [vmem:[#allocation3 + $0x8] sm:$0xff]
          %vm762 = vcmask 523264
          %763 = vst.msk [vmem:[#allocation2] sm:$0xff] %vm762, %v760
          %764 = vst.msk [vmem:[#allocation2 + $0x8] sm:$0xff] %vm762, %v761
        $region100: #{tpu_custom_call.1} parent=79 // pred_fallthru
          _
        %v765 = vld [vmem:[#allocation2] sm:$0xff]
        %v766 = vld [vmem:[#allocation2 + $0x8] sm:$0xff]
        %v767 = vld [vmem:[%s618] sm:$0x1]
        %v768 = vld [vmem:[%s626] sm:$0x1]
        %vm769 = vcmask 523264
        %v770 = vsel %vm769, %v765, 0.0
        %771 = vadd.xlane.f32.xlu0 %v770
        %v772 = vpop.xlane.xlu0 %771
        %v773 = vsel %vm769, %v766, 0.0
        %774 = vadd.xlane.f32.xlu0 %v773
        %v775 = vpop.xlane.xlu0 %774
        %v776 = vrcp.pop 64.0
        %v777 = vmul.f32 %v772, %v776
        %v778 = vmul.f32 %v775, %v776
        %v779 = vsub.f32 %v765, %v777
        %v780 = vsub.f32 %v766, %v778
        %v781 = vmul.f32 %v779, %v779
        %v782 = vmul.f32 %v780, %v780
        %v783 = vsel %vm769, %v781, 0.0
        %784 = vadd.xlane.f32.xlu0 %v783
        %v785 = vpop.xlane.xlu0 %784
        %v786 = vsel %vm769, %v782, 0.0
        %787 = vadd.xlane.f32.xlu0 %v786
        %v788 = vpop.xlane.xlu0 %787
        %v789 = vmul.f32 %v785, %v776
        %v790 = vmul.f32 %v788, %v776
        %v791 = vadd.f32 %v789, 1e-05
        %v792 = vadd.f32 %v790, 1e-05
        %v793 = vrsqrt.pop %v791
        %v794 = vrsqrt.pop %v792
        %v795 = vmul.f32 %v779, %v793
        %v796 = vmul.f32 %v780, %v794
        %v798 = vlaneseq
        %v799 = vshrl.u32 %v798, 7
        %v800 = vsub.s32 0, %v799
        %v801 = vrot.slane %v767, %v800
        %v803 = vmul.f32 %v795, %v801
        %v804 = vmul.f32 %v796, %v801
        %v806 = vlaneseq
        %v807 = vshrl.u32 %v806, 7
        %v808 = vsub.s32 0, %v807
        %v809 = vrot.slane %v768, %v808
        %v811 = vadd.f32 %v803, %v809
        %v812 = vadd.f32 %v804, %v809
        %v813 = vpack.c.bf16 %v812, %v811
        %v814 = vld [vmem:[%s724] sm:$0xff]
        %v815 = vld [vmem:[%s724 + $0x8] sm:$0xff]
        %v816 = vld [vmem:[%s724 + $0x10] sm:$0xff]
        %v817 = vld [vmem:[%s724 + $0x18] sm:$0xff]
        %v818 = vld [vmem:[%s724 + $0x20] sm:$0xff]
        %v819 = vld [vmem:[%s724 + $0x28] sm:$0xff]
        %v820 = vld [vmem:[%s724 + $0x30] sm:$0xff]
        %v821 = vld [vmem:[%s724 + $0x38] sm:$0xff]
        %v822 = vld [vmem:[%s728] sm:$0x3]
        %v824 = vlaneseq
        %v825 = vshrl.u32 %v824, 7
        %v826 = vsub.s32 0, %v825
        %v827 = vrot.slane %v822, %v826
        %v828 = vlaneseq
        %v829 = vshrl.u32 %v828, 7
        %v830 = vsub.s32 1, %v829
        %v831 = vrot.slane %v822, %v830
        %v842 = vunpack.c.l.b16 %v814
        %v843 = vunpack.c.h.b16 %v814
        %v844 = vunpack.c.l.b16 %v815
        %v845 = vunpack.c.h.b16 %v815
        %v846 = vunpack.c.l.b16 %v816
        %v847 = vunpack.c.h.b16 %v816
        %v848 = vunpack.c.l.b16 %v817
        %v849 = vunpack.c.h.b16 %v817
        %v850 = vunpack.c.l.b16 %v818
        %v851 = vunpack.c.h.b16 %v818
        %v852 = vunpack.c.l.b16 %v819
        %v853 = vunpack.c.h.b16 %v819
        %v854 = vunpack.c.l.b16 %v820
        %v855 = vunpack.c.h.b16 %v820
        %v856 = vunpack.c.l.b16 %v821
        %v857 = vunpack.c.h.b16 %v821
        %v858 = vpack.c.b16 %v844, %v842
        %v859 = vpack.c.b16 %v845, %v843
        %v860 = vpack.c.b16 %v848, %v846
        %v861 = vpack.c.b16 %v849, %v847
        %v862 = vpack.c.b16 %v852, %v850
        %v863 = vpack.c.b16 %v853, %v851
        %v864 = vpack.c.b16 %v856, %v854
        %v865 = vpack.c.b16 %v857, %v855
        %v875 = vsel %vm769, %v813, 0
        %877 = vmatprep.subr.bf16.mxu0 0
        %878 = vmatpush1.bf16.msra.mxu0 0
        %879 = vmatprep.subr.bf16.mxu0 0
        %880 = vmatpush1.bf16.msra.mxu0 0
        %881 = vmatprep.subr.bf16.mxu0 0
        %882 = vmatpush1.bf16.msra.mxu0 0
        %883 = vmatprep.subr.bf16.mxu0 0
        %884 = vmatpush1.bf16.msra.mxu0 0
        %885 = vmatprep.subr.bf16.mxu0 %v865
        %886 = vmatpush1.bf16.msra.mxu0 %v864
        %887 = vmatprep.subr.bf16.mxu0 %v863
        %888 = vmatpush1.bf16.msra.mxu0 %v862
        %889 = vmatprep.subr.bf16.mxu0 %v861
        %890 = vmatpush1.bf16.msra.mxu0 %v860
        %891 = vmatprep.subr.bf16.mxu0 %v859
        %892 = vmatpush1.bf16.msra.mxu0 %v858
        %893 = vmatprep.subr.bf16.mxu0 0
        %894 = vmatpush2.bf16.msra.mxu0 0
        %895 = vmatprep.subr.bf16.mxu0 0
        %896 = vmatpush2.bf16.msra.mxu0 0
        %897 = vmatprep.subr.bf16.mxu0 0
        %898 = vmatpush2.bf16.msra.mxu0 0
        %899 = vmatprep.subr.bf16.mxu0 0
        %900 = vmatpush2.bf16.msra.mxu0 0
        %901 = vmatprep.subr.bf16.mxu0 0
        %902 = vmatpush2.bf16.msra.mxu0 0
        %903 = vmatprep.subr.bf16.mxu0 0
        %904 = vmatpush2.bf16.msra.mxu0 0
        %905 = vmatprep.subr.bf16.mxu0 0
        %906 = vmatpush2.bf16.msra.mxu0 0
        %907 = vmatprep.subr.bf16.mxu0 0
        %908 = vmatpush2.bf16.msra.mxu0 0
        %909 = vmatprep.mubr.bf16.mxu0 0
        %910 = vmatmul.mubr.bf16.gmra.mxu0 %v875
        %v911 = vpop.f32.mrf.mxu0
        %v912 = vadd.f32 %v827, %v911
        %v913 = vpop.f32.mrf.mxu0
        %v914 = vadd.f32 %v831, %v913
        %v915 = vpop.f32.mrf.mxu0
        %v916 = vadd.f32 %v827, %v915
        %v917 = vpop.f32.mrf.mxu0
        %v918 = vadd.f32 %v831, %v917
        %919 = vdwg.mxu0
        %v920 = vpack.c.bf16 %v916, %v912
        %v921 = vpack.c.bf16 %v918, %v914
        %v922 = vlaneseq
        %v923 = vshrl.u32 %v922, 7
        %v924 = vlaneseq
        %v925 = vand.u32 %v924, 127
        %vm926 = vcmp.gt.s32.totalorder %v925, %v923
        %v927 = vsel %vm926, 1, 0
        %v928 = vcvt.s32.f32 %v927
        %v929 = vmul.f32 %v928, -1e+30
        %v930 = vld [vmem:[%s733] sm:$0xf]
        %v931 = vld [vmem:[%s733 + $0x4] sm:$0xf]
        %v932 = vld [vmem:[%s733 + $0x8] sm:$0xf]
        %v933 = vld [vmem:[%s733 + $0xc] sm:$0xf]
        %v934 = vld [vmem:[%s733 + $0x10] sm:$0xf]
        %v935 = vld [vmem:[%s733 + $0x14] sm:$0xf]
        %v936 = vld [vmem:[%s733 + $0x18] sm:$0xf]
        %v937 = vld [vmem:[%s733 + $0x1c] sm:$0xf]
        %939 = vrot.lane.b32.xlu0 %v920, 64
        %v940 = vpop.permute.xlu0 %939
        %vm941 = vcmask 130048
        %v943 = vsel %vm941, %v920, 0
        %v946 = vsel %vm941, %v940, 0
        %948 = vmatprep.subr.bf16.mxu0 0
        %949 = vmatpush1.bf16.xpose.msra.mxu0 0
        %950 = vmatprep.subr.bf16.mxu0 0
        %951 = vmatpush1.bf16.xpose.msra.mxu0 0
        %952 = vmatprep.subr.bf16.mxu0 0
        %953 = vmatpush1.bf16.xpose.msra.mxu0 0
        %954 = vmatprep.subr.bf16.mxu0 0
        %955 = vmatpush1.bf16.xpose.msra.mxu0 0
        %956 = vmatprep.subr.bf16.mxu0 0
        %957 = vmatpush1.bf16.xpose.msra.mxu0 0
        %958 = vmatprep.subr.bf16.mxu0 0
        %959 = vmatpush1.bf16.xpose.msra.mxu0 0
        %960 = vmatprep.subr.bf16.mxu0 0
        %961 = vmatpush1.bf16.xpose.msra.mxu0 0
        %962 = vmatprep.subr.bf16.mxu0 0
        %963 = vmatpush1.bf16.xpose.msra.mxu0 %v946
        %964 = vmatprep.subr.bf16.mxu0 0
        %965 = vmatpush2.bf16.xpose.msra.mxu0 0
        %966 = vmatprep.subr.bf16.mxu0 0
        %967 = vmatpush2.bf16.xpose.msra.mxu0 0
        %968 = vmatprep.subr.bf16.mxu0 0
        %969 = vmatpush2.bf16.xpose.msra.mxu0 0
        %970 = vmatprep.subr.bf16.mxu0 0
        %971 = vmatpush2.bf16.xpose.msra.mxu0 0
        %972 = vmatprep.subr.bf16.mxu0 0
        %973 = vmatpush2.bf16.xpose.msra.mxu0 0
        %974 = vmatprep.subr.bf16.mxu0 0
        %975 = vmatpush2.bf16.xpose.msra.mxu0 0
        %976 = vmatprep.subr.bf16.mxu0 0
        %977 = vmatpush2.bf16.xpose.msra.mxu0 0
        %978 = vmatprep.subr.bf16.mxu0 0
        %979 = vmatpush2.bf16.xpose.msra.mxu0 0
        %980 = vmatprep.mubr.bf16.mxu0 0
        %981 = vmatmul.mubr.bf16.gmra.mxu0 %v943
        %v982 = vpop.f32.mrf.mxu0
        %v983 = vadd.f32 %v929, %v982
        %v984 = vpop.f32.mrf.mxu0
        %v985 = vpop.f32.mrf.mxu0
        %v986 = vpop.f32.mrf.mxu0
        %987 = vdwg.mxu0
        %vm988 = vcmask 64512
        %v989 = vsel %vm988, %v983, -inf
        %990 = vmax.xlane.f32.xlu0 %v989
        %v991 = vpop.xlane.xlu0 %990
        %v992 = vsub.f32 %v983, %v991
        %v993 = vmul.f32 %v992, 1.442695
        %v994 = vpow.pop %v993
        %v995 = vsel %vm988, %v994, 0.0
        %996 = vadd.xlane.f32.xlu0 %v995
        %v997 = vpop.xlane.xlu0 %996
        %v998 = vpack.c.bf16 %v994, %v994
        %v1000 = vsel %vm988, %v998, 0
        %vm1002 = vcmask 1043456
        %v1004 = vsel %vm1002, %v921, 0
        %1006 = vmatprep.subr.bf16.mxu0 0
        %1007 = vmatpush1.bf16.msra.mxu0 0
        %1008 = vmatprep.subr.bf16.mxu0 0
        %1009 = vmatpush1.bf16.msra.mxu0 0
        %1010 = vmatprep.subr.bf16.mxu0 0
        %1011 = vmatpush1.bf16.msra.mxu0 0
        %1012 = vmatprep.subr.bf16.mxu0 0
        %1013 = vmatpush1.bf16.msra.mxu0 0
        %1014 = vmatprep.subr.bf16.mxu0 0
        %1015 = vmatpush1.bf16.msra.mxu0 0
        %1016 = vmatprep.subr.bf16.mxu0 0
        %1017 = vmatpush1.bf16.msra.mxu0 0
        %1018 = vmatprep.subr.bf16.mxu0 0
        %1019 = vmatpush1.bf16.msra.mxu0 0
        %1020 = vmatprep.subr.bf16.mxu0 0
        %1021 = vmatpush1.bf16.msra.mxu0 %v1004
        %1022 = vmatprep.subr.bf16.mxu0 0
        %1023 = vmatpush2.bf16.msra.mxu0 0
        %1024 = vmatprep.subr.bf16.mxu0 0
        %1025 = vmatpush2.bf16.msra.mxu0 0
        %1026 = vmatprep.subr.bf16.mxu0 0
        %1027 = vmatpush2.bf16.msra.mxu0 0
        %1028 = vmatprep.subr.bf16.mxu0 0
        %1029 = vmatpush2.bf16.msra.mxu0 0
        %1030 = vmatprep.subr.bf16.mxu0 0
        %1031 = vmatpush2.bf16.msra.mxu0 0
        %1032 = vmatprep.subr.bf16.mxu0 0
        %1033 = vmatpush2.bf16.msra.mxu0 0
        %1034 = vmatprep.subr.bf16.mxu0 0
        %1035 = vmatpush2.bf16.msra.mxu0 0
        %1036 = vmatprep.subr.bf16.mxu0 0
        %1037 = vmatpush2.bf16.msra.mxu0 0
        %1038 = vmatprep.mubr.bf16.mxu0 0
        %1039 = vmatmul.mubr.bf16.gmra.mxu0 %v1000
        %v1040 = vpop.f32.mrf.mxu0
        %v1041 = vadd.f32 0.0, %v1040
        %v1042 = vpop.f32.mrf.mxu0
        %v1043 = vpop.f32.mrf.mxu0
        %v1044 = vpop.f32.mrf.mxu0
        %1045 = vdwg.mxu0
        %v1046 = vrcp.pop %v997
        %v1047 = vmul.f32 %v1041, %v1046
        %v1048 = vpack.c.bf16 %v1047, %v1047
        %1049 = vrot.lane.b32.xlu0 %v920, 112
        %v1050 = vpop.permute.xlu0 %1049
        %1051 = vrot.lane.b32.xlu0 %v920, 48
        %v1052 = vpop.permute.xlu0 %1051
        %v1054 = vsel %vm941, %v1050, 0
        %v1057 = vsel %vm941, %v1052, 0
        %1059 = vmatprep.subr.bf16.mxu0 0
        %1060 = vmatpush1.bf16.xpose.msra.mxu0 0
        %1061 = vmatprep.subr.bf16.mxu0 0
        %1062 = vmatpush1.bf16.xpose.msra.mxu0 0
        %1063 = vmatprep.subr.bf16.mxu0 0
        %1064 = vmatpush1.bf16.xpose.msra.mxu0 0
        %1065 = vmatprep.subr.bf16.mxu0 0
        %1066 = vmatpush1.bf16.xpose.msra.mxu0 0
        %1067 = vmatprep.subr.bf16.mxu0 0
        %1068 = vmatpush1.bf16.xpose.msra.mxu0 0
        %1069 = vmatprep.subr.bf16.mxu0 0
        %1070 = vmatpush1.bf16.xpose.msra.mxu0 0
        %1071 = vmatprep.subr.bf16.mxu0 0
        %1072 = vmatpush1.bf16.xpose.msra.mxu0 0
        %1073 = vmatprep.subr.bf16.mxu0 0
        %1074 = vmatpush1.bf16.xpose.msra.mxu0 %v1057
        %1075 = vmatprep.subr.bf16.mxu0 0
        %1076 = vmatpush2.bf16.xpose.msra.mxu0 0
        %1077 = vmatprep.subr.bf16.mxu0 0
        %1078 = vmatpush2.bf16.xpose.msra.mxu0 0
        %1079 = vmatprep.subr.bf16.mxu0 0
        %1080 = vmatpush2.bf16.xpose.msra.mxu0 0
        %1081 = vmatprep.subr.bf16.mxu0 0
        %1082 = vmatpush2.bf16.xpose.msra.mxu0 0
        %1083 = vmatprep.subr.bf16.mxu0 0
        %1084 = vmatpush2.bf16.xpose.msra.mxu0 0
        %1085 = vmatprep.subr.bf16.mxu0 0
        %1086 = vmatpush2.bf16.xpose.msra.mxu0 0
        %1087 = vmatprep.subr.bf16.mxu0 0
        %1088 = vmatpush2.bf16.xpose.msra.mxu0 0
        %1089 = vmatprep.subr.bf16.mxu0 0
        %1090 = vmatpush2.bf16.xpose.msra.mxu0 0
        %1091 = vmatprep.mubr.bf16.mxu0 0
        %1092 = vmatmul.mubr.bf16.gmra.mxu0 %v1054
        %v1093 = vpop.f32.mrf.mxu0
        %v1094 = vadd.f32 %v929, %v1093
        %v1095 = vpop.f32.mrf.mxu0
        %v1096 = vpop.f32.mrf.mxu0
        %v1097 = vpop.f32.mrf.mxu0
        %1098 = vdwg.mxu0
        %v1099 = vsel %vm988, %v1094, -inf
        %1100 = vmax.xlane.f32.xlu0 %v1099
        %v1101 = vpop.xlane.xlu0 %1100
        %v1102 = vsub.f32 %v1094, %v1101
        %v1103 = vmul.f32 %v1102, 1.442695
        %v1104 = vpow.pop %v1103
        %v1105 = vsel %vm988, %v1104, 0.0
        %1106 = vadd.xlane.f32.xlu0 %v1105
        %v1107 = vpop.xlane.xlu0 %1106
        %v1108 = vpack.c.bf16 %v1104, %v1104
        %1110 = vrot.lane.b32.xlu0 %v921, 112
        %v1111 = vpop.permute.xlu0 %1110
        %v1113 = vsel %vm988, %v1108, 0
        %v1116 = vsel %vm1002, %v1111, 0
        %1118 = vmatprep.subr.bf16.mxu0 0
        %1119 = vmatpush1.bf16.msra.mxu0 0
        %1120 = vmatprep.subr.bf16.mxu0 0
        %1121 = vmatpush1.bf16.msra.mxu0 0
        %1122 = vmatprep.subr.bf16.mxu0 0
        %1123 = vmatpush1.bf16.msra.mxu0 0
        %1124 = vmatprep.subr.bf16.mxu0 0
        %1125 = vmatpush1.bf16.msra.mxu0 0
        %1126 = vmatprep.subr.bf16.mxu0 0
        %1127 = vmatpush1.bf16.msra.mxu0 0
        %1128 = vmatprep.subr.bf16.mxu0 0
        %1129 = vmatpush1.bf16.msra.mxu0 0
        %1130 = vmatprep.subr.bf16.mxu0 0
        %1131 = vmatpush1.bf16.msra.mxu0 0
        %1132 = vmatprep.subr.bf16.mxu0 0
        %1133 = vmatpush1.bf16.msra.mxu0 %v1116
        %1134 = vmatprep.subr.bf16.mxu0 0
        %1135 = vmatpush2.bf16.msra.mxu0 0
        %1136 = vmatprep.subr.bf16.mxu0 0
        %1137 = vmatpush2.bf16.msra.mxu0 0
        %1138 = vmatprep.subr.bf16.mxu0 0
        %1139 = vmatpush2.bf16.msra.mxu0 0
        %1140 = vmatprep.subr.bf16.mxu0 0
        %1141 = vmatpush2.bf16.msra.mxu0 0
        %1142 = vmatprep.subr.bf16.mxu0 0
        %1143 = vmatpush2.bf16.msra.mxu0 0
        %1144 = vmatprep.subr.bf16.mxu0 0
        %1145 = vmatpush2.bf16.msra.mxu0 0
        %1146 = vmatprep.subr.bf16.mxu0 0
        %1147 = vmatpush2.bf16.msra.mxu0 0
        %1148 = vmatprep.subr.bf16.mxu0 0
        %1149 = vmatpush2.bf16.msra.mxu0 0
        %1150 = vmatprep.mubr.bf16.mxu0 0
        %1151 = vmatmul.mubr.bf16.gmra.mxu0 %v1113
        %v1152 = vpop.f32.mrf.mxu0
        %v1153 = vadd.f32 0.0, %v1152
        %v1154 = vpop.f32.mrf.mxu0
        %v1155 = vpop.f32.mrf.mxu0
        %v1156 = vpop.f32.mrf.mxu0
        %1157 = vdwg.mxu0
        %v1158 = vrcp.pop %v1107
        %v1159 = vmul.f32 %v1153, %v1158
        %v1160 = vpack.c.bf16 %v1159, %v1159
        %v1163 = vunpack.c.l.b16 %v932
        %v1164 = vunpack.c.l.b16 %v933
        %v1165 = vpack.c.b16 %v1164, %v1163
        %v1168 = vsel %vm941, %v1160, 0
        %1170 = vmatprep.subr.bf16.mxu0 0
        %1171 = vmatpush1.bf16.msra.mxu0 0
        %1172 = vmatprep.subr.bf16.mxu0 0
        %1173 = vmatpush1.bf16.msra.mxu0 0
        %1174 = vmatprep.subr.bf16.mxu0 0
        %1175 = vmatpush1.bf16.msra.mxu0 0
        %1176 = vmatprep.subr.bf16.mxu0 0
        %1177 = vmatpush1.bf16.msra.mxu0 0
        %1178 = vmatprep.subr.bf16.mxu0 0
        %1179 = vmatpush1.bf16.msra.mxu0 0
        %1180 = vmatprep.subr.bf16.mxu0 0
        %1181 = vmatpush1.bf16.msra.mxu0 0
        %1182 = vmatprep.subr.bf16.mxu0 0
        %1183 = vmatpush1.bf16.msra.mxu0 0
        %1184 = vmatprep.subr.bf16.mxu0 0
        %1185 = vmatpush1.bf16.msra.mxu0 %v1165
        %1186 = vmatprep.subr.bf16.mxu0 0
        %1187 = vmatpush2.bf16.msra.mxu0 0
        %1188 = vmatprep.subr.bf16.mxu0 0
        %1189 = vmatpush2.bf16.msra.mxu0 0
        %1190 = vmatprep.subr.bf16.mxu0 0
        %1191 = vmatpush2.bf16.msra.mxu0 0
        %1192 = vmatprep.subr.bf16.mxu0 0
        %1193 = vmatpush2.bf16.msra.mxu0 0
        %1194 = vmatprep.subr.bf16.mxu0 0
        %1195 = vmatpush2.bf16.msra.mxu0 0
        %1196 = vmatprep.subr.bf16.mxu0 0
        %1197 = vmatpush2.bf16.msra.mxu0 0
        %1198 = vmatprep.subr.bf16.mxu0 0
        %1199 = vmatpush2.bf16.msra.mxu0 0
        %1200 = vmatprep.subr.bf16.mxu0 0
        %1201 = vmatpush2.bf16.msra.mxu0 0
        %1202 = vmatprep.mubr.bf16.mxu0 0
        %1203 = vmatmul.mubr.bf16.gmra.mxu0 %v1168
        %v1204 = vpop.f32.mrf.mxu0
        %v1205 = vadd.f32 0.0, %v1204
        %v1206 = vpop.f32.mrf.mxu0
        %v1207 = vpop.f32.mrf.mxu0
        %v1208 = vpop.f32.mrf.mxu0
        %1209 = vdwg.mxu0
        %v1212 = vunpack.c.l.b16 %v930
        %v1213 = vunpack.c.l.b16 %v931
        %v1214 = vpack.c.b16 %v1213, %v1212
        %v1217 = vsel %vm941, %v1048, 0
        %1219 = vmatprep.subr.bf16.mxu0 0
        %1220 = vmatpush1.bf16.msra.mxu0 0
        %1221 = vmatprep.subr.bf16.mxu0 0
        %1222 = vmatpush1.bf16.msra.mxu0 0
        %1223 = vmatprep.subr.bf16.mxu0 0
        %1224 = vmatpush1.bf16.msra.mxu0 0
        %1225 = vmatprep.subr.bf16.mxu0 0
        %1226 = vmatpush1.bf16.msra.mxu0 0
        %1227 = vmatprep.subr.bf16.mxu0 0
        %1228 = vmatpush1.bf16.msra.mxu0 0
        %1229 = vmatprep.subr.bf16.mxu0 0
        %1230 = vmatpush1.bf16.msra.mxu0 0
        %1231 = vmatprep.subr.bf16.mxu0 0
        %1232 = vmatpush1.bf16.msra.mxu0 0
        %1233 = vmatprep.subr.bf16.mxu0 0
        %1234 = vmatpush1.bf16.msra.mxu0 %v1214
        %1235 = vmatprep.subr.bf16.mxu0 0
        %1236 = vmatpush2.bf16.msra.mxu0 0
        %1237 = vmatprep.subr.bf16.mxu0 0
        %1238 = vmatpush2.bf16.msra.mxu0 0
        %1239 = vmatprep.subr.bf16.mxu0 0
        %1240 = vmatpush2.bf16.msra.mxu0 0
        %1241 = vmatprep.subr.bf16.mxu0 0
        %1242 = vmatpush2.bf16.msra.mxu0 0
        %1243 = vmatprep.subr.bf16.mxu0 0
        %1244 = vmatpush2.bf16.msra.mxu0 0
        %1245 = vmatprep.subr.bf16.mxu0 0
        %1246 = vmatpush2.bf16.msra.mxu0 0
        %1247 = vmatprep.subr.bf16.mxu0 0
        %1248 = vmatpush2.bf16.msra.mxu0 0
        %1249 = vmatprep.subr.bf16.mxu0 0
        %1250 = vmatpush2.bf16.msra.mxu0 0
        %1251 = vmatprep.mubr.bf16.mxu0 0
        %1252 = vmatmul.mubr.bf16.gmra.mxu0 %v1217
        %v1253 = vpop.f32.mrf.mxu0
        %v1254 = vadd.f32 %v1205, %v1253
        %v1255 = vpop.f32.mrf.mxu0
        %v1256 = vpop.f32.mrf.mxu0
        %v1257 = vpop.f32.mrf.mxu0
        %1258 = vdwg.mxu0
        %1259 = vrot.lane.b32.xlu0 %v920, 96
        %v1260 = vpop.permute.xlu0 %1259
        %1261 = vrot.lane.b32.xlu0 %v920, 32
        %v1262 = vpop.permute.xlu0 %1261
        %v1264 = vsel %vm941, %v1260, 0
        %v1267 = vsel %vm941, %v1262, 0
        %1269 = vmatprep.subr.bf16.mxu0 0
        %1270 = vmatpush1.bf16.xpose.msra.mxu0 0
        %1271 = vmatprep.subr.bf16.mxu0 0
        %1272 = vmatpush1.bf16.xpose.msra.mxu0 0
        %1273 = vmatprep.subr.bf16.mxu0 0
        %1274 = vmatpush1.bf16.xpose.msra.mxu0 0
        %1275 = vmatprep.subr.bf16.mxu0 0
        %1276 = vmatpush1.bf16.xpose.msra.mxu0 0
        %1277 = vmatprep.subr.bf16.mxu0 0
        %1278 = vmatpush1.bf16.xpose.msra.mxu0 0
        %1279 = vmatprep.subr.bf16.mxu0 0
        %1280 = vmatpush1.bf16.xpose.msra.mxu0 0
        %1281 = vmatprep.subr.bf16.mxu0 0
        %1282 = vmatpush1.bf16.xpose.msra.mxu0 0
        %1283 = vmatprep.subr.bf16.mxu0 0
        %1284 = vmatpush1.bf16.xpose.msra.mxu0 %v1267
        %1285 = vmatprep.subr.bf16.mxu0 0
        %1286 = vmatpush2.bf16.xpose.msra.mxu0 0
        %1287 = vmatprep.subr.bf16.mxu0 0
        %1288 = vmatpush2.bf16.xpose.msra.mxu0 0
        %1289 = vmatprep.subr.bf16.mxu0 0
        %1290 = vmatpush2.bf16.xpose.msra.mxu0 0
        %1291 = vmatprep.subr.bf16.mxu0 0
        %1292 = vmatpush2.bf16.xpose.msra.mxu0 0
        %1293 = vmatprep.subr.bf16.mxu0 0
        %1294 = vmatpush2.bf16.xpose.msra.mxu0 0
        %1295 = vmatprep.subr.bf16.mxu0 0
        %1296 = vmatpush2.bf16.xpose.msra.mxu0 0
        %1297 = vmatprep.subr.bf16.mxu0 0
        %1298 = vmatpush2.bf16.xpose.msra.mxu0 0
        %1299 = vmatprep.subr.bf16.mxu0 0
        %1300 = vmatpush2.bf16.xpose.msra.mxu0 0
        %1301 = vmatprep.mubr.bf16.mxu0 0
        %1302 = vmatmul.mubr.bf16.gmra.mxu0 %v1264
        %v1303 = vpop.f32.mrf.mxu0
        %v1304 = vadd.f32 %v929, %v1303
        %v1305 = vpop.f32.mrf.mxu0
        %v1306 = vpop.f32.mrf.mxu0
        %v1307 = vpop.f32.mrf.mxu0
        %1308 = vdwg.mxu0
        %v1309 = vsel %vm988, %v1304, -inf
        %1310 = vmax.xlane.f32.xlu0 %v1309
        %v1311 = vpop.xlane.xlu0 %1310
        %v1312 = vsub.f32 %v1304, %v1311
        %v1313 = vmul.f32 %v1312, 1.442695
        %v1314 = vpow.pop %v1313
        %v1315 = vsel %vm988, %v1314, 0.0
        %1316 = vadd.xlane.f32.xlu0 %v1315
        %v1317 = vpop.xlane.xlu0 %1316
        %v1318 = vpack.c.bf16 %v1314, %v1314
        %1319 = vrot.lane.b32.xlu0 %v921, 96
        %v1320 = vpop.permute.xlu0 %1319
        %v1322 = vsel %vm988, %v1318, 0
        %v1325 = vsel %vm1002, %v1320, 0
        %1327 = vmatprep.subr.bf16.mxu0 0
        %1328 = vmatpush1.bf16.msra.mxu0 0
        %1329 = vmatprep.subr.bf16.mxu0 0
        %1330 = vmatpush1.bf16.msra.mxu0 0
        %1331 = vmatprep.subr.bf16.mxu0 0
        %1332 = vmatpush1.bf16.msra.mxu0 0
        %1333 = vmatprep.subr.bf16.mxu0 0
        %1334 = vmatpush1.bf16.msra.mxu0 0
        %1335 = vmatprep.subr.bf16.mxu0 0
        %1336 = vmatpush1.bf16.msra.mxu0 0
        %1337 = vmatprep.subr.bf16.mxu0 0
        %1338 = vmatpush1.bf16.msra.mxu0 0
        %1339 = vmatprep.subr.bf16.mxu0 0
        %1340 = vmatpush1.bf16.msra.mxu0 0
        %1341 = vmatprep.subr.bf16.mxu0 0
        %1342 = vmatpush1.bf16.msra.mxu0 %v1325
        %1343 = vmatprep.subr.bf16.mxu0 0
        %1344 = vmatpush2.bf16.msra.mxu0 0
        %1345 = vmatprep.subr.bf16.mxu0 0
        %1346 = vmatpush2.bf16.msra.mxu0 0
        %1347 = vmatprep.subr.bf16.mxu0 0
        %1348 = vmatpush2.bf16.msra.mxu0 0
        %1349 = vmatprep.subr.bf16.mxu0 0
        %1350 = vmatpush2.bf16.msra.mxu0 0
        %1351 = vmatprep.subr.bf16.mxu0 0
        %1352 = vmatpush2.bf16.msra.mxu0 0
        %1353 = vmatprep.subr.bf16.mxu0 0
        %1354 = vmatpush2.bf16.msra.mxu0 0
        %1355 = vmatprep.subr.bf16.mxu0 0
        %1356 = vmatpush2.bf16.msra.mxu0 0
        %1357 = vmatprep.subr.bf16.mxu0 0
        %1358 = vmatpush2.bf16.msra.mxu0 0
        %1359 = vmatprep.mubr.bf16.mxu0 0
        %1360 = vmatmul.mubr.bf16.gmra.mxu0 %v1322
        %v1361 = vpop.f32.mrf.mxu0
        %v1362 = vadd.f32 0.0, %v1361
        %v1363 = vpop.f32.mrf.mxu0
        %v1364 = vpop.f32.mrf.mxu0
        %v1365 = vpop.f32.mrf.mxu0
        %1366 = vdwg.mxu0
        %v1367 = vrcp.pop %v1317
        %v1368 = vmul.f32 %v1362, %v1367
        %v1369 = vpack.c.bf16 %v1368, %v1368
        %v1372 = vunpack.c.l.b16 %v934
        %v1373 = vunpack.c.l.b16 %v935
        %v1374 = vpack.c.b16 %v1373, %v1372
        %v1377 = vsel %vm941, %v1369, 0
        %1379 = vmatprep.subr.bf16.mxu0 0
        %1380 = vmatpush1.bf16.msra.mxu0 0
        %1381 = vmatprep.subr.bf16.mxu0 0
        %1382 = vmatpush1.bf16.msra.mxu0 0
        %1383 = vmatprep.subr.bf16.mxu0 0
        %1384 = vmatpush1.bf16.msra.mxu0 0
        %1385 = vmatprep.subr.bf16.mxu0 0
        %1386 = vmatpush1.bf16.msra.mxu0 0
        %1387 = vmatprep.subr.bf16.mxu0 0
        %1388 = vmatpush1.bf16.msra.mxu0 0
        %1389 = vmatprep.subr.bf16.mxu0 0
        %1390 = vmatpush1.bf16.msra.mxu0 0
        %1391 = vmatprep.subr.bf16.mxu0 0
        %1392 = vmatpush1.bf16.msra.mxu0 0
        %1393 = vmatprep.subr.bf16.mxu0 0
        %1394 = vmatpush1.bf16.msra.mxu0 %v1374
        %1395 = vmatprep.subr.bf16.mxu0 0
        %1396 = vmatpush2.bf16.msra.mxu0 0
        %1397 = vmatprep.subr.bf16.mxu0 0
        %1398 = vmatpush2.bf16.msra.mxu0 0
        %1399 = vmatprep.subr.bf16.mxu0 0
        %1400 = vmatpush2.bf16.msra.mxu0 0
        %1401 = vmatprep.subr.bf16.mxu0 0
        %1402 = vmatpush2.bf16.msra.mxu0 0
        %1403 = vmatprep.subr.bf16.mxu0 0
        %1404 = vmatpush2.bf16.msra.mxu0 0
        %1405 = vmatprep.subr.bf16.mxu0 0
        %1406 = vmatpush2.bf16.msra.mxu0 0
        %1407 = vmatprep.subr.bf16.mxu0 0
        %1408 = vmatpush2.bf16.msra.mxu0 0
        %1409 = vmatprep.subr.bf16.mxu0 0
        %1410 = vmatpush2.bf16.msra.mxu0 0
        %1411 = vmatprep.mubr.bf16.mxu0 0
        %1412 = vmatmul.mubr.bf16.gmra.mxu0 %v1377
        %v1413 = vpop.f32.mrf.mxu0
        %v1414 = vadd.f32 0.0, %v1413
        %v1415 = vpop.f32.mrf.mxu0
        %v1416 = vpop.f32.mrf.mxu0
        %v1417 = vpop.f32.mrf.mxu0
        %1418 = vdwg.mxu0
        %v1419 = vadd.f32 %v1254, %v1414
        %1420 = vrot.lane.b32.xlu0 %v920, 80
        %v1421 = vpop.permute.xlu0 %1420
        %1422 = vrot.lane.b32.xlu0 %v920, 16
        %v1423 = vpop.permute.xlu0 %1422
        %v1425 = vsel %vm941, %v1421, 0
        %v1428 = vsel %vm941, %v1423, 0
        %1430 = vmatprep.subr.bf16.mxu0 0
        %1431 = vmatpush1.bf16.xpose.msra.mxu0 0
        %1432 = vmatprep.subr.bf16.mxu0 0
        %1433 = vmatpush1.bf16.xpose.msra.mxu0 0
        %1434 = vmatprep.subr.bf16.mxu0 0
        %1435 = vmatpush1.bf16.xpose.msra.mxu0 0
        %1436 = vmatprep.subr.bf16.mxu0 0
        %1437 = vmatpush1.bf16.xpose.msra.mxu0 0
        %1438 = vmatprep.subr.bf16.mxu0 0
        %1439 = vmatpush1.bf16.xpose.msra.mxu0 0
        %1440 = vmatprep.subr.bf16.mxu0 0
        %1441 = vmatpush1.bf16.xpose.msra.mxu0 0
        %1442 = vmatprep.subr.bf16.mxu0 0
        %1443 = vmatpush1.bf16.xpose.msra.mxu0 0
        %1444 = vmatprep.subr.bf16.mxu0 0
        %1445 = vmatpush1.bf16.xpose.msra.mxu0 %v1428
        %1446 = vmatprep.subr.bf16.mxu0 0
        %1447 = vmatpush2.bf16.xpose.msra.mxu0 0
        %1448 = vmatprep.subr.bf16.mxu0 0
        %1449 = vmatpush2.bf16.xpose.msra.mxu0 0
        %1450 = vmatprep.subr.bf16.mxu0 0
        %1451 = vmatpush2.bf16.xpose.msra.mxu0 0
        %1452 = vmatprep.subr.bf16.mxu0 0
        %1453 = vmatpush2.bf16.xpose.msra.mxu0 0
        %1454 = vmatprep.subr.bf16.mxu0 0
        %1455 = vmatpush2.bf16.xpose.msra.mxu0 0
        %1456 = vmatprep.subr.bf16.mxu0 0
        %1457 = vmatpush2.bf16.xpose.msra.mxu0 0
        %1458 = vmatprep.subr.bf16.mxu0 0
        %1459 = vmatpush2.bf16.xpose.msra.mxu0 0
        %1460 = vmatprep.subr.bf16.mxu0 0
        %1461 = vmatpush2.bf16.xpose.msra.mxu0 0
        %1462 = vmatprep.mubr.bf16.mxu0 0
        %1463 = vmatmul.mubr.bf16.gmra.mxu0 %v1425
        %v1464 = vpop.f32.mrf.mxu0
        %v1465 = vadd.f32 %v929, %v1464
        %v1466 = vpop.f32.mrf.mxu0
        %v1467 = vpop.f32.mrf.mxu0
        %v1468 = vpop.f32.mrf.mxu0
        %1469 = vdwg.mxu0
        %v1470 = vsel %vm988, %v1465, -inf
        %1471 = vmax.xlane.f32.xlu0 %v1470
        %v1472 = vpop.xlane.xlu0 %1471
        %v1473 = vsub.f32 %v1465, %v1472
        %v1474 = vmul.f32 %v1473, 1.442695
        %v1475 = vpow.pop %v1474
        %v1476 = vsel %vm988, %v1475, 0.0
        %1477 = vadd.xlane.f32.xlu0 %v1476
        %v1478 = vpop.xlane.xlu0 %1477
        %v1479 = vpack.c.bf16 %v1475, %v1475
        %1480 = vrot.lane.b32.xlu0 %v921, 80
        %v1481 = vpop.permute.xlu0 %1480
        %v1483 = vsel %vm988, %v1479, 0
        %v1486 = vsel %vm1002, %v1481, 0
        %1488 = vmatprep.subr.bf16.mxu0 0
        %1489 = vmatpush1.bf16.msra.mxu0 0
        %1490 = vmatprep.subr.bf16.mxu0 0
        %1491 = vmatpush1.bf16.msra.mxu0 0
        %1492 = vmatprep.subr.bf16.mxu0 0
        %1493 = vmatpush1.bf16.msra.mxu0 0
        %1494 = vmatprep.subr.bf16.mxu0 0
        %1495 = vmatpush1.bf16.msra.mxu0 0
        %1496 = vmatprep.subr.bf16.mxu0 0
        %1497 = vmatpush1.bf16.msra.mxu0 0
        %1498 = vmatprep.subr.bf16.mxu0 0
        %1499 = vmatpush1.bf16.msra.mxu0 0
        %1500 = vmatprep.subr.bf16.mxu0 0
        %1501 = vmatpush1.bf16.msra.mxu0 0
        %1502 = vmatprep.subr.bf16.mxu0 0
        %1503 = vmatpush1.bf16.msra.mxu0 %v1486
        %1504 = vmatprep.subr.bf16.mxu0 0
        %1505 = vmatpush2.bf16.msra.mxu0 0
        %1506 = vmatprep.subr.bf16.mxu0 0
        %1507 = vmatpush2.bf16.msra.mxu0 0
        %1508 = vmatprep.subr.bf16.mxu0 0
        %1509 = vmatpush2.bf16.msra.mxu0 0
        %1510 = vmatprep.subr.bf16.mxu0 0
        %1511 = vmatpush2.bf16.msra.mxu0 0
        %1512 = vmatprep.subr.bf16.mxu0 0
        %1513 = vmatpush2.bf16.msra.mxu0 0
        %1514 = vmatprep.subr.bf16.mxu0 0
        %1515 = vmatpush2.bf16.msra.mxu0 0
        %1516 = vmatprep.subr.bf16.mxu0 0
        %1517 = vmatpush2.bf16.msra.mxu0 0
        %1518 = vmatprep.subr.bf16.mxu0 0
        %1519 = vmatpush2.bf16.msra.mxu0 0
        %1520 = vmatprep.mubr.bf16.mxu0 0
        %1521 = vmatmul.mubr.bf16.gmra.mxu0 %v1483
        %v1522 = vpop.f32.mrf.mxu0
        %v1523 = vadd.f32 0.0, %v1522
        %v1524 = vpop.f32.mrf.mxu0
        %v1525 = vpop.f32.mrf.mxu0
        %v1526 = vpop.f32.mrf.mxu0
        %1527 = vdwg.mxu0
        %v1528 = vrcp.pop %v1478
        %v1529 = vmul.f32 %v1523, %v1528
        %v1530 = vpack.c.bf16 %v1529, %v1529
        %v1533 = vunpack.c.l.b16 %v936
        %v1534 = vunpack.c.l.b16 %v937
        %v1535 = vpack.c.b16 %v1534, %v1533
        %v1538 = vsel %vm941, %v1530, 0
        %1540 = vmatprep.subr.bf16.mxu0 0
        %1541 = vmatpush1.bf16.msra.mxu0 0
        %1542 = vmatprep.subr.bf16.mxu0 0
        %1543 = vmatpush1.bf16.msra.mxu0 0
        %1544 = vmatprep.subr.bf16.mxu0 0
        %1545 = vmatpush1.bf16.msra.mxu0 0
        %1546 = vmatprep.subr.bf16.mxu0 0
        %1547 = vmatpush1.bf16.msra.mxu0 0
        %1548 = vmatprep.subr.bf16.mxu0 0
        %1549 = vmatpush1.bf16.msra.mxu0 0
        %1550 = vmatprep.subr.bf16.mxu0 0
        %1551 = vmatpush1.bf16.msra.mxu0 0
        %1552 = vmatprep.subr.bf16.mxu0 0
        %1553 = vmatpush1.bf16.msra.mxu0 0
        %1554 = vmatprep.subr.bf16.mxu0 0
        %1555 = vmatpush1.bf16.msra.mxu0 %v1535
        %1556 = vmatprep.subr.bf16.mxu0 0
        %1557 = vmatpush2.bf16.msra.mxu0 0
        %1558 = vmatprep.subr.bf16.mxu0 0
        %1559 = vmatpush2.bf16.msra.mxu0 0
        %1560 = vmatprep.subr.bf16.mxu0 0
        %1561 = vmatpush2.bf16.msra.mxu0 0
        %1562 = vmatprep.subr.bf16.mxu0 0
        %1563 = vmatpush2.bf16.msra.mxu0 0
        %1564 = vmatprep.subr.bf16.mxu0 0
        %1565 = vmatpush2.bf16.msra.mxu0 0
        %1566 = vmatprep.subr.bf16.mxu0 0
        %1567 = vmatpush2.bf16.msra.mxu0 0
        %1568 = vmatprep.subr.bf16.mxu0 0
        %1569 = vmatpush2.bf16.msra.mxu0 0
        %1570 = vmatprep.subr.bf16.mxu0 0
        %1571 = vmatpush2.bf16.msra.mxu0 0
        %1572 = vmatprep.mubr.bf16.mxu0 0
        %1573 = vmatmul.mubr.bf16.gmra.mxu0 %v1538
        %v1574 = vpop.f32.mrf.mxu0
        %v1575 = vadd.f32 0.0, %v1574
        %v1576 = vpop.f32.mrf.mxu0
        %v1577 = vpop.f32.mrf.mxu0
        %v1578 = vpop.f32.mrf.mxu0
        %1579 = vdwg.mxu0
        %v1580 = vadd.f32 %v1419, %v1575
        %v1581 = vrot.slane %v920, 4
        %1582 = vrot.lane.b32.xlu0 %v1581, 64
        %v1583 = vpop.permute.xlu0 %1582
        %v1585 = vsel %vm941, %v1581, 0
        %v1588 = vsel %vm941, %v1583, 0
        %1590 = vmatprep.subr.bf16.mxu0 0
        %1591 = vmatpush1.bf16.xpose.msra.mxu0 0
        %1592 = vmatprep.subr.bf16.mxu0 0
        %1593 = vmatpush1.bf16.xpose.msra.mxu0 0
        %1594 = vmatprep.subr.bf16.mxu0 0
        %1595 = vmatpush1.bf16.xpose.msra.mxu0 0
        %1596 = vmatprep.subr.bf16.mxu0 0
        %1597 = vmatpush1.bf16.xpose.msra.mxu0 0
        %1598 = vmatprep.subr.bf16.mxu0 0
        %1599 = vmatpush1.bf16.xpose.msra.mxu0 0
        %1600 = vmatprep.subr.bf16.mxu0 0
        %1601 = vmatpush1.bf16.xpose.msra.mxu0 0
        %1602 = vmatprep.subr.bf16.mxu0 0
        %1603 = vmatpush1.bf16.xpose.msra.mxu0 0
        %1604 = vmatprep.subr.bf16.mxu0 0
        %1605 = vmatpush1.bf16.xpose.msra.mxu0 %v1588
        %1606 = vmatprep.subr.bf16.mxu0 0
        %1607 = vmatpush2.bf16.xpose.msra.mxu0 0
        %1608 = vmatprep.subr.bf16.mxu0 0
        %1609 = vmatpush2.bf16.xpose.msra.mxu0 0
        %1610 = vmatprep.subr.bf16.mxu0 0
        %1611 = vmatpush2.bf16.xpose.msra.mxu0 0
        %1612 = vmatprep.subr.bf16.mxu0 0
        %1613 = vmatpush2.bf16.xpose.msra.mxu0 0
        %1614 = vmatprep.subr.bf16.mxu0 0
        %1615 = vmatpush2.bf16.xpose.msra.mxu0 0
        %1616 = vmatprep.subr.bf16.mxu0 0
        %1617 = vmatpush2.bf16.xpose.msra.mxu0 0
        %1618 = vmatprep.subr.bf16.mxu0 0
        %1619 = vmatpush2.bf16.xpose.msra.mxu0 0
        %1620 = vmatprep.subr.bf16.mxu0 0
        %1621 = vmatpush2.bf16.xpose.msra.mxu0 0
        %1622 = vmatprep.mubr.bf16.mxu0 0
        %1623 = vmatmul.mubr.bf16.gmra.mxu0 %v1585
        %v1624 = vpop.f32.mrf.mxu0
        %v1625 = vadd.f32 %v929, %v1624
        %v1626 = vpop.f32.mrf.mxu0
        %v1627 = vpop.f32.mrf.mxu0
        %v1628 = vpop.f32.mrf.mxu0
        %1629 = vdwg.mxu0
        %v1630 = vsel %vm988, %v1625, -inf
        %1631 = vmax.xlane.f32.xlu0 %v1630
        %v1632 = vpop.xlane.xlu0 %1631
        %v1633 = vsub.f32 %v1625, %v1632
        %v1634 = vmul.f32 %v1633, 1.442695
        %v1635 = vpow.pop %v1634
        %v1636 = vsel %vm988, %v1635, 0.0
        %1637 = vadd.xlane.f32.xlu0 %v1636
        %v1638 = vpop.xlane.xlu0 %1637
        %v1639 = vpack.c.bf16 %v1635, %v1635
        %v1640 = vrot.slane %v921, 4
        %v1642 = vsel %vm988, %v1639, 0
        %v1645 = vsel %vm1002, %v1640, 0
        %1647 = vmatprep.subr.bf16.mxu0 0
        %1648 = vmatpush1.bf16.msra.mxu0 0
        %1649 = vmatprep.subr.bf16.mxu0 0
        %1650 = vmatpush1.bf16.msra.mxu0 0
        %1651 = vmatprep.subr.bf16.mxu0 0
        %1652 = vmatpush1.bf16.msra.mxu0 0
        %1653 = vmatprep.subr.bf16.mxu0 0
        %1654 = vmatpush1.bf16.msra.mxu0 0
        %1655 = vmatprep.subr.bf16.mxu0 0
        %1656 = vmatpush1.bf16.msra.mxu0 0
        %1657 = vmatprep.subr.bf16.mxu0 0
        %1658 = vmatpush1.bf16.msra.mxu0 0
        %1659 = vmatprep.subr.bf16.mxu0 0
        %1660 = vmatpush1.bf16.msra.mxu0 0
        %1661 = vmatprep.subr.bf16.mxu0 0
        %1662 = vmatpush1.bf16.msra.mxu0 %v1645
        %1663 = vmatprep.subr.bf16.mxu0 0
        %1664 = vmatpush2.bf16.msra.mxu0 0
        %1665 = vmatprep.subr.bf16.mxu0 0
        %1666 = vmatpush2.bf16.msra.mxu0 0
        %1667 = vmatprep.subr.bf16.mxu0 0
        %1668 = vmatpush2.bf16.msra.mxu0 0
        %1669 = vmatprep.subr.bf16.mxu0 0
        %1670 = vmatpush2.bf16.msra.mxu0 0
        %1671 = vmatprep.subr.bf16.mxu0 0
        %1672 = vmatpush2.bf16.msra.mxu0 0
        %1673 = vmatprep.subr.bf16.mxu0 0
        %1674 = vmatpush2.bf16.msra.mxu0 0
        %1675 = vmatprep.subr.bf16.mxu0 0
        %1676 = vmatpush2.bf16.msra.mxu0 0
        %1677 = vmatprep.subr.bf16.mxu0 0
        %1678 = vmatpush2.bf16.msra.mxu0 0
        %1679 = vmatprep.mubr.bf16.mxu0 0
        %1680 = vmatmul.mubr.bf16.gmra.mxu0 %v1642
        %v1681 = vpop.f32.mrf.mxu0
        %v1682 = vadd.f32 0.0, %v1681
        %v1683 = vpop.f32.mrf.mxu0
        %v1684 = vpop.f32.mrf.mxu0
        %v1685 = vpop.f32.mrf.mxu0
        %1686 = vdwg.mxu0
        %v1687 = vrcp.pop %v1638
        %v1688 = vmul.f32 %v1682, %v1687
        %v1689 = vpack.c.bf16 %v1688, %v1688
        %1690 = vrot.lane.b32.xlu0 %v1581, 112
        %v1691 = vpop.permute.xlu0 %1690
        %1692 = vrot.lane.b32.xlu0 %v1581, 48
        %v1693 = vpop.permute.xlu0 %1692
        %v1695 = vsel %vm941, %v1691, 0
        %v1698 = vsel %vm941, %v1693, 0
        %1700 = vmatprep.subr.bf16.mxu0 0
        %1701 = vmatpush1.bf16.xpose.msra.mxu0 0
        %1702 = vmatprep.subr.bf16.mxu0 0
        %1703 = vmatpush1.bf16.xpose.msra.mxu0 0
        %1704 = vmatprep.subr.bf16.mxu0 0
        %1705 = vmatpush1.bf16.xpose.msra.mxu0 0
        %1706 = vmatprep.subr.bf16.mxu0 0
        %1707 = vmatpush1.bf16.xpose.msra.mxu0 0
        %1708 = vmatprep.subr.bf16.mxu0 0
        %1709 = vmatpush1.bf16.xpose.msra.mxu0 0
        %1710 = vmatprep.subr.bf16.mxu0 0
        %1711 = vmatpush1.bf16.xpose.msra.mxu0 0
        %1712 = vmatprep.subr.bf16.mxu0 0
        %1713 = vmatpush1.bf16.xpose.msra.mxu0 0
        %1714 = vmatprep.subr.bf16.mxu0 0
        %1715 = vmatpush1.bf16.xpose.msra.mxu0 %v1698
        %1716 = vmatprep.subr.bf16.mxu0 0
        %1717 = vmatpush2.bf16.xpose.msra.mxu0 0
        %1718 = vmatprep.subr.bf16.mxu0 0
        %1719 = vmatpush2.bf16.xpose.msra.mxu0 0
        %1720 = vmatprep.subr.bf16.mxu0 0
        %1721 = vmatpush2.bf16.xpose.msra.mxu0 0
        %1722 = vmatprep.subr.bf16.mxu0 0
        %1723 = vmatpush2.bf16.xpose.msra.mxu0 0
        %1724 = vmatprep.subr.bf16.mxu0 0
        %1725 = vmatpush2.bf16.xpose.msra.mxu0 0
        %1726 = vmatprep.subr.bf16.mxu0 0
        %1727 = vmatpush2.bf16.xpose.msra.mxu0 0
        %1728 = vmatprep.subr.bf16.mxu0 0
        %1729 = vmatpush2.bf16.xpose.msra.mxu0 0
        %1730 = vmatprep.subr.bf16.mxu0 0
        %1731 = vmatpush2.bf16.xpose.msra.mxu0 0
        %1732 = vmatprep.mubr.bf16.mxu0 0
        %1733 = vmatmul.mubr.bf16.gmra.mxu0 %v1695
        %v1734 = vpop.f32.mrf.mxu0
        %v1735 = vadd.f32 %v929, %v1734
        %v1736 = vpop.f32.mrf.mxu0
        %v1737 = vpop.f32.mrf.mxu0
        %v1738 = vpop.f32.mrf.mxu0
        %1739 = vdwg.mxu0
        %v1740 = vsel %vm988, %v1735, -inf
        %1741 = vmax.xlane.f32.xlu0 %v1740
        %v1742 = vpop.xlane.xlu0 %1741
        %v1743 = vsub.f32 %v1735, %v1742
        %v1744 = vmul.f32 %v1743, 1.442695
        %v1745 = vpow.pop %v1744
        %v1746 = vsel %vm988, %v1745, 0.0
        %1747 = vadd.xlane.f32.xlu0 %v1746
        %v1748 = vpop.xlane.xlu0 %1747
        %v1749 = vpack.c.bf16 %v1745, %v1745
        %1750 = vrot.lane.b32.xlu0 %v1640, 112
        %v1751 = vpop.permute.xlu0 %1750
        %v1753 = vsel %vm988, %v1749, 0
        %v1756 = vsel %vm1002, %v1751, 0
        %1758 = vmatprep.subr.bf16.mxu0 0
        %1759 = vmatpush1.bf16.msra.mxu0 0
        %1760 = vmatprep.subr.bf16.mxu0 0
        %1761 = vmatpush1.bf16.msra.mxu0 0
        %1762 = vmatprep.subr.bf16.mxu0 0
        %1763 = vmatpush1.bf16.msra.mxu0 0
        %1764 = vmatprep.subr.bf16.mxu0 0
        %1765 = vmatpush1.bf16.msra.mxu0 0
        %1766 = vmatprep.subr.bf16.mxu0 0
        %1767 = vmatpush1.bf16.msra.mxu0 0
        %1768 = vmatprep.subr.bf16.mxu0 0
        %1769 = vmatpush1.bf16.msra.mxu0 0
        %1770 = vmatprep.subr.bf16.mxu0 0
        %1771 = vmatpush1.bf16.msra.mxu0 0
        %1772 = vmatprep.subr.bf16.mxu0 0
        %1773 = vmatpush1.bf16.msra.mxu0 %v1756
        %1774 = vmatprep.subr.bf16.mxu0 0
        %1775 = vmatpush2.bf16.msra.mxu0 0
        %1776 = vmatprep.subr.bf16.mxu0 0
        %1777 = vmatpush2.bf16.msra.mxu0 0
        %1778 = vmatprep.subr.bf16.mxu0 0
        %1779 = vmatpush2.bf16.msra.mxu0 0
        %1780 = vmatprep.subr.bf16.mxu0 0
        %1781 = vmatpush2.bf16.msra.mxu0 0
        %1782 = vmatprep.subr.bf16.mxu0 0
        %1783 = vmatpush2.bf16.msra.mxu0 0
        %1784 = vmatprep.subr.bf16.mxu0 0
        %1785 = vmatpush2.bf16.msra.mxu0 0
        %1786 = vmatprep.subr.bf16.mxu0 0
        %1787 = vmatpush2.bf16.msra.mxu0 0
        %1788 = vmatprep.subr.bf16.mxu0 0
        %1789 = vmatpush2.bf16.msra.mxu0 0
        %1790 = vmatprep.mubr.bf16.mxu0 0
        %1791 = vmatmul.mubr.bf16.gmra.mxu0 %v1753
        %v1792 = vpop.f32.mrf.mxu0
        %v1793 = vadd.f32 0.0, %v1792
        %v1794 = vpop.f32.mrf.mxu0
        %v1795 = vpop.f32.mrf.mxu0
        %v1796 = vpop.f32.mrf.mxu0
        %1797 = vdwg.mxu0
        %v1798 = vrcp.pop %v1748
        %v1799 = vmul.f32 %v1793, %v1798
        %v1800 = vpack.c.bf16 %v1799, %v1799
        %v1802 = vsel %vm941, %v1800, 0
        %1804 = vmatprep.subr.bf16.mxu0 0
        %1805 = vmatpush1.bf16.msra.mxu0 0
        %1806 = vmatprep.subr.bf16.mxu0 0
        %1807 = vmatpush1.bf16.msra.mxu0 0
        %1808 = vmatprep.subr.bf16.mxu0 0
        %1809 = vmatpush1.bf16.msra.mxu0 0
        %1810 = vmatprep.subr.bf16.mxu0 0
        %1811 = vmatpush1.bf16.msra.mxu0 0
        %1812 = vmatprep.subr.bf16.mxu0 0
        %1813 = vmatpush1.bf16.msra.mxu0 0
        %1814 = vmatprep.subr.bf16.mxu0 0
        %1815 = vmatpush1.bf16.msra.mxu0 0
        %1816 = vmatprep.subr.bf16.mxu0 0
        %1817 = vmatpush1.bf16.msra.mxu0 0
        %1818 = vmatprep.subr.bf16.mxu0 0
        %1819 = vmatpush1.bf16.msra.mxu0 %v1165
        %1820 = vmatprep.subr.bf16.mxu0 0
        %1821 = vmatpush2.bf16.msra.mxu0 0
        %1822 = vmatprep.subr.bf16.mxu0 0
        %1823 = vmatpush2.bf16.msra.mxu0 0
        %1824 = vmatprep.subr.bf16.mxu0 0
        %1825 = vmatpush2.bf16.msra.mxu0 0
        %1826 = vmatprep.subr.bf16.mxu0 0
        %1827 = vmatpush2.bf16.msra.mxu0 0
        %1828 = vmatprep.subr.bf16.mxu0 0
        %1829 = vmatpush2.bf16.msra.mxu0 0
        %1830 = vmatprep.subr.bf16.mxu0 0
        %1831 = vmatpush2.bf16.msra.mxu0 0
        %1832 = vmatprep.subr.bf16.mxu0 0
        %1833 = vmatpush2.bf16.msra.mxu0 0
        %1834 = vmatprep.subr.bf16.mxu0 0
        %1835 = vmatpush2.bf16.msra.mxu0 0
        %1836 = vmatprep.mubr.bf16.mxu0 0
        %1837 = vmatmul.mubr.bf16.gmra.mxu0 %v1802
        %v1838 = vpop.f32.mrf.mxu0
        %v1839 = vadd.f32 0.0, %v1838
        %v1840 = vpop.f32.mrf.mxu0
        %v1841 = vpop.f32.mrf.mxu0
        %v1842 = vpop.f32.mrf.mxu0
        %1843 = vdwg.mxu0
        %v1845 = vsel %vm941, %v1689, 0
        %1847 = vmatprep.subr.bf16.mxu0 0
        %1848 = vmatpush1.bf16.msra.mxu0 0
        %1849 = vmatprep.subr.bf16.mxu0 0
        %1850 = vmatpush1.bf16.msra.mxu0 0
        %1851 = vmatprep.subr.bf16.mxu0 0
        %1852 = vmatpush1.bf16.msra.mxu0 0
        %1853 = vmatprep.subr.bf16.mxu0 0
        %1854 = vmatpush1.bf16.msra.mxu0 0
        %1855 = vmatprep.subr.bf16.mxu0 0
        %1856 = vmatpush1.bf16.msra.mxu0 0
        %1857 = vmatprep.subr.bf16.mxu0 0
        %1858 = vmatpush1.bf16.msra.mxu0 0
        %1859 = vmatprep.subr.bf16.mxu0 0
        %1860 = vmatpush1.bf16.msra.mxu0 0
        %1861 = vmatprep.subr.bf16.mxu0 0
        %1862 = vmatpush1.bf16.msra.mxu0 %v1214
        %1863 = vmatprep.subr.bf16.mxu0 0
        %1864 = vmatpush2.bf16.msra.mxu0 0
        %1865 = vmatprep.subr.bf16.mxu0 0
        %1866 = vmatpush2.bf16.msra.mxu0 0
        %1867 = vmatprep.subr.bf16.mxu0 0
        %1868 = vmatpush2.bf16.msra.mxu0 0
        %1869 = vmatprep.subr.bf16.mxu0 0
        %1870 = vmatpush2.bf16.msra.mxu0 0
        %1871 = vmatprep.subr.bf16.mxu0 0
        %1872 = vmatpush2.bf16.msra.mxu0 0
        %1873 = vmatprep.subr.bf16.mxu0 0
        %1874 = vmatpush2.bf16.msra.mxu0 0
        %1875 = vmatprep.subr.bf16.mxu0 0
        %1876 = vmatpush2.bf16.msra.mxu0 0
        %1877 = vmatprep.subr.bf16.mxu0 0
        %1878 = vmatpush2.bf16.msra.mxu0 0
        %1879 = vmatprep.mubr.bf16.mxu0 0
        %1880 = vmatmul.mubr.bf16.gmra.mxu0 %v1845
        %v1881 = vpop.f32.mrf.mxu0
        %v1882 = vadd.f32 %v1839, %v1881
        %v1883 = vpop.f32.mrf.mxu0
        %v1884 = vpop.f32.mrf.mxu0
        %v1885 = vpop.f32.mrf.mxu0
        %1886 = vdwg.mxu0
        %1887 = vrot.lane.b32.xlu0 %v1581, 96
        %v1888 = vpop.permute.xlu0 %1887
        %1889 = vrot.lane.b32.xlu0 %v1581, 32
        %v1890 = vpop.permute.xlu0 %1889
        %v1892 = vsel %vm941, %v1888, 0
        %v1895 = vsel %vm941, %v1890, 0
        %1897 = vmatprep.subr.bf16.mxu0 0
        %1898 = vmatpush1.bf16.xpose.msra.mxu0 0
        %1899 = vmatprep.subr.bf16.mxu0 0
        %1900 = vmatpush1.bf16.xpose.msra.mxu0 0
        %1901 = vmatprep.subr.bf16.mxu0 0
        %1902 = vmatpush1.bf16.xpose.msra.mxu0 0
        %1903 = vmatprep.subr.bf16.mxu0 0
        %1904 = vmatpush1.bf16.xpose.msra.mxu0 0
        %1905 = vmatprep.subr.bf16.mxu0 0
        %1906 = vmatpush1.bf16.xpose.msra.mxu0 0
        %1907 = vmatprep.subr.bf16.mxu0 0
        %1908 = vmatpush1.bf16.xpose.msra.mxu0 0
        %1909 = vmatprep.subr.bf16.mxu0 0
        %1910 = vmatpush1.bf16.xpose.msra.mxu0 0
        %1911 = vmatprep.subr.bf16.mxu0 0
        %1912 = vmatpush1.bf16.xpose.msra.mxu0 %v1895
        %1913 = vmatprep.subr.bf16.mxu0 0
        %1914 = vmatpush2.bf16.xpose.msra.mxu0 0
        %1915 = vmatprep.subr.bf16.mxu0 0
        %1916 = vmatpush2.bf16.xpose.msra.mxu0 0
        %1917 = vmatprep.subr.bf16.mxu0 0
        %1918 = vmatpush2.bf16.xpose.msra.mxu0 0
        %1919 = vmatprep.subr.bf16.mxu0 0
        %1920 = vmatpush2.bf16.xpose.msra.mxu0 0
        %1921 = vmatprep.subr.bf16.mxu0 0
        %1922 = vmatpush2.bf16.xpose.msra.mxu0 0
        %1923 = vmatprep.subr.bf16.mxu0 0
        %1924 = vmatpush2.bf16.xpose.msra.mxu0 0
        %1925 = vmatprep.subr.bf16.mxu0 0
        %1926 = vmatpush2.bf16.xpose.msra.mxu0 0
        %1927 = vmatprep.subr.bf16.mxu0 0
        %1928 = vmatpush2.bf16.xpose.msra.mxu0 0
        %1929 = vmatprep.mubr.bf16.mxu0 0
        %1930 = vmatmul.mubr.bf16.gmra.mxu0 %v1892
        %v1931 = vpop.f32.mrf.mxu0
        %v1932 = vadd.f32 %v929, %v1931
        %v1933 = vpop.f32.mrf.mxu0
        %v1934 = vpop.f32.mrf.mxu0
        %v1935 = vpop.f32.mrf.mxu0
        %1936 = vdwg.mxu0
        %v1937 = vsel %vm988, %v1932, -inf
        %1938 = vmax.xlane.f32.xlu0 %v1937
        %v1939 = vpop.xlane.xlu0 %1938
        %v1940 = vsub.f32 %v1932, %v1939
        %v1941 = vmul.f32 %v1940, 1.442695
        %v1942 = vpow.pop %v1941
        %v1943 = vsel %vm988, %v1942, 0.0
        %1944 = vadd.xlane.f32.xlu0 %v1943
        %v1945 = vpop.xlane.xlu0 %1944
        %v1946 = vpack.c.bf16 %v1942, %v1942
        %1947 = vrot.lane.b32.xlu0 %v1640, 96
        %v1948 = vpop.permute.xlu0 %1947
        %v1950 = vsel %vm988, %v1946, 0
        %v1953 = vsel %vm1002, %v1948, 0
        %1955 = vmatprep.subr.bf16.mxu0 0
        %1956 = vmatpush1.bf16.msra.mxu0 0
        %1957 = vmatprep.subr.bf16.mxu0 0
        %1958 = vmatpush1.bf16.msra.mxu0 0
        %1959 = vmatprep.subr.bf16.mxu0 0
        %1960 = vmatpush1.bf16.msra.mxu0 0
        %1961 = vmatprep.subr.bf16.mxu0 0
        %1962 = vmatpush1.bf16.msra.mxu0 0
        %1963 = vmatprep.subr.bf16.mxu0 0
        %1964 = vmatpush1.bf16.msra.mxu0 0
        %1965 = vmatprep.subr.bf16.mxu0 0
        %1966 = vmatpush1.bf16.msra.mxu0 0
        %1967 = vmatprep.subr.bf16.mxu0 0
        %1968 = vmatpush1.bf16.msra.mxu0 0
        %1969 = vmatprep.subr.bf16.mxu0 0
        %1970 = vmatpush1.bf16.msra.mxu0 %v1953
        %1971 = vmatprep.subr.bf16.mxu0 0
        %1972 = vmatpush2.bf16.msra.mxu0 0
        %1973 = vmatprep.subr.bf16.mxu0 0
        %1974 = vmatpush2.bf16.msra.mxu0 0
        %1975 = vmatprep.subr.bf16.mxu0 0
        %1976 = vmatpush2.bf16.msra.mxu0 0
        %1977 = vmatprep.subr.bf16.mxu0 0
        %1978 = vmatpush2.bf16.msra.mxu0 0
        %1979 = vmatprep.subr.bf16.mxu0 0
        %1980 = vmatpush2.bf16.msra.mxu0 0
        %1981 = vmatprep.subr.bf16.mxu0 0
        %1982 = vmatpush2.bf16.msra.mxu0 0
        %1983 = vmatprep.subr.bf16.mxu0 0
        %1984 = vmatpush2.bf16.msra.mxu0 0
        %1985 = vmatprep.subr.bf16.mxu0 0
        %1986 = vmatpush2.bf16.msra.mxu0 0
        %1987 = vmatprep.mubr.bf16.mxu0 0
        %1988 = vmatmul.mubr.bf16.gmra.mxu0 %v1950
        %v1989 = vpop.f32.mrf.mxu0
        %v1990 = vadd.f32 0.0, %v1989
        %v1991 = vpop.f32.mrf.mxu0
        %v1992 = vpop.f32.mrf.mxu0
        %v1993 = vpop.f32.mrf.mxu0
        %1994 = vdwg.mxu0
        %v1995 = vrcp.pop %v1945
        %v1996 = vmul.f32 %v1990, %v1995
        %v1997 = vpack.c.bf16 %v1996, %v1996
        %v1999 = vsel %vm941, %v1997, 0
        %2001 = vmatprep.subr.bf16.mxu0 0
        %2002 = vmatpush1.bf16.msra.mxu0 0
        %2003 = vmatprep.subr.bf16.mxu0 0
        %2004 = vmatpush1.bf16.msra.mxu0 0
        %2005 = vmatprep.subr.bf16.mxu0 0
        %2006 = vmatpush1.bf16.msra.mxu0 0
        %2007 = vmatprep.subr.bf16.mxu0 0
        %2008 = vmatpush1.bf16.msra.mxu0 0
        %2009 = vmatprep.subr.bf16.mxu0 0
        %2010 = vmatpush1.bf16.msra.mxu0 0
        %2011 = vmatprep.subr.bf16.mxu0 0
        %2012 = vmatpush1.bf16.msra.mxu0 0
        %2013 = vmatprep.subr.bf16.mxu0 0
        %2014 = vmatpush1.bf16.msra.mxu0 0
        %2015 = vmatprep.subr.bf16.mxu0 0
        %2016 = vmatpush1.bf16.msra.mxu0 %v1374
        %2017 = vmatprep.subr.bf16.mxu0 0
        %2018 = vmatpush2.bf16.msra.mxu0 0
        %2019 = vmatprep.subr.bf16.mxu0 0
        %2020 = vmatpush2.bf16.msra.mxu0 0
        %2021 = vmatprep.subr.bf16.mxu0 0
        %2022 = vmatpush2.bf16.msra.mxu0 0
        %2023 = vmatprep.subr.bf16.mxu0 0
        %2024 = vmatpush2.bf16.msra.mxu0 0
        %2025 = vmatprep.subr.bf16.mxu0 0
        %2026 = vmatpush2.bf16.msra.mxu0 0
        %2027 = vmatprep.subr.bf16.mxu0 0
        %2028 = vmatpush2.bf16.msra.mxu0 0
        %2029 = vmatprep.subr.bf16.mxu0 0
        %2030 = vmatpush2.bf16.msra.mxu0 0
        %2031 = vmatprep.subr.bf16.mxu0 0
        %2032 = vmatpush2.bf16.msra.mxu0 0
        %2033 = vmatprep.mubr.bf16.mxu0 0
        %2034 = vmatmul.mubr.bf16.gmra.mxu0 %v1999
        %v2035 = vpop.f32.mrf.mxu0
        %v2036 = vadd.f32 0.0, %v2035
        %v2037 = vpop.f32.mrf.mxu0
        %v2038 = vpop.f32.mrf.mxu0
        %v2039 = vpop.f32.mrf.mxu0
        %2040 = vdwg.mxu0
        %v2041 = vadd.f32 %v1882, %v2036
        %2042 = vrot.lane.b32.xlu0 %v1581, 80
        %v2043 = vpop.permute.xlu0 %2042
        %2044 = vrot.lane.b32.xlu0 %v1581, 16
        %v2045 = vpop.permute.xlu0 %2044
        %v2047 = vsel %vm941, %v2043, 0
        %v2050 = vsel %vm941, %v2045, 0
        %2052 = vmatprep.subr.bf16.mxu0 0
        %2053 = vmatpush1.bf16.xpose.msra.mxu0 0
        %2054 = vmatprep.subr.bf16.mxu0 0
        %2055 = vmatpush1.bf16.xpose.msra.mxu0 0
        %2056 = vmatprep.subr.bf16.mxu0 0
        %2057 = vmatpush1.bf16.xpose.msra.mxu0 0
        %2058 = vmatprep.subr.bf16.mxu0 0
        %2059 = vmatpush1.bf16.xpose.msra.mxu0 0
        %2060 = vmatprep.subr.bf16.mxu0 0
        %2061 = vmatpush1.bf16.xpose.msra.mxu0 0
        %2062 = vmatprep.subr.bf16.mxu0 0
        %2063 = vmatpush1.bf16.xpose.msra.mxu0 0
        %2064 = vmatprep.subr.bf16.mxu0 0
        %2065 = vmatpush1.bf16.xpose.msra.mxu0 0
        %2066 = vmatprep.subr.bf16.mxu0 0
        %2067 = vmatpush1.bf16.xpose.msra.mxu0 %v2050
        %2068 = vmatprep.subr.bf16.mxu0 0
        %2069 = vmatpush2.bf16.xpose.msra.mxu0 0
        %2070 = vmatprep.subr.bf16.mxu0 0
        %2071 = vmatpush2.bf16.xpose.msra.mxu0 0
        %2072 = vmatprep.subr.bf16.mxu0 0
        %2073 = vmatpush2.bf16.xpose.msra.mxu0 0
        %2074 = vmatprep.subr.bf16.mxu0 0
        %2075 = vmatpush2.bf16.xpose.msra.mxu0 0
        %2076 = vmatprep.subr.bf16.mxu0 0
        %2077 = vmatpush2.bf16.xpose.msra.mxu0 0
        %2078 = vmatprep.subr.bf16.mxu0 0
        %2079 = vmatpush2.bf16.xpose.msra.mxu0 0
        %2080 = vmatprep.subr.bf16.mxu0 0
        %2081 = vmatpush2.bf16.xpose.msra.mxu0 0
        %2082 = vmatprep.subr.bf16.mxu0 0
        %2083 = vmatpush2.bf16.xpose.msra.mxu0 0
        %2084 = vmatprep.mubr.bf16.mxu0 0
        %2085 = vmatmul.mubr.bf16.gmra.mxu0 %v2047
        %v2086 = vpop.f32.mrf.mxu0
        %v2087 = vadd.f32 %v929, %v2086
        %v2088 = vpop.f32.mrf.mxu0
        %v2089 = vpop.f32.mrf.mxu0
        %v2090 = vpop.f32.mrf.mxu0
        %2091 = vdwg.mxu0
        %v2092 = vsel %vm988, %v2087, -inf
        %2093 = vmax.xlane.f32.xlu0 %v2092
        %v2094 = vpop.xlane.xlu0 %2093
        %v2095 = vsub.f32 %v2087, %v2094
        %v2096 = vmul.f32 %v2095, 1.442695
        %v2097 = vpow.pop %v2096
        %v2098 = vsel %vm988, %v2097, 0.0
        %2099 = vadd.xlane.f32.xlu0 %v2098
        %v2100 = vpop.xlane.xlu0 %2099
        %v2101 = vpack.c.bf16 %v2097, %v2097
        %2102 = vrot.lane.b32.xlu0 %v1640, 80
        %v2103 = vpop.permute.xlu0 %2102
        %v2105 = vsel %vm988, %v2101, 0
        %v2108 = vsel %vm1002, %v2103, 0
        %2110 = vmatprep.subr.bf16.mxu0 0
        %2111 = vmatpush1.bf16.msra.mxu0 0
        %2112 = vmatprep.subr.bf16.mxu0 0
        %2113 = vmatpush1.bf16.msra.mxu0 0
        %2114 = vmatprep.subr.bf16.mxu0 0
        %2115 = vmatpush1.bf16.msra.mxu0 0
        %2116 = vmatprep.subr.bf16.mxu0 0
        %2117 = vmatpush1.bf16.msra.mxu0 0
        %2118 = vmatprep.subr.bf16.mxu0 0
        %2119 = vmatpush1.bf16.msra.mxu0 0
        %2120 = vmatprep.subr.bf16.mxu0 0
        %2121 = vmatpush1.bf16.msra.mxu0 0
        %2122 = vmatprep.subr.bf16.mxu0 0
        %2123 = vmatpush1.bf16.msra.mxu0 0
        %2124 = vmatprep.subr.bf16.mxu0 0
        %2125 = vmatpush1.bf16.msra.mxu0 %v2108
        %2126 = vmatprep.subr.bf16.mxu0 0
        %2127 = vmatpush2.bf16.msra.mxu0 0
        %2128 = vmatprep.subr.bf16.mxu0 0
        %2129 = vmatpush2.bf16.msra.mxu0 0
        %2130 = vmatprep.subr.bf16.mxu0 0
        %2131 = vmatpush2.bf16.msra.mxu0 0
        %2132 = vmatprep.subr.bf16.mxu0 0
        %2133 = vmatpush2.bf16.msra.mxu0 0
        %2134 = vmatprep.subr.bf16.mxu0 0
        %2135 = vmatpush2.bf16.msra.mxu0 0
        %2136 = vmatprep.subr.bf16.mxu0 0
        %2137 = vmatpush2.bf16.msra.mxu0 0
        %2138 = vmatprep.subr.bf16.mxu0 0
        %2139 = vmatpush2.bf16.msra.mxu0 0
        %2140 = vmatprep.subr.bf16.mxu0 0
        %2141 = vmatpush2.bf16.msra.mxu0 0
        %2142 = vmatprep.mubr.bf16.mxu0 0
        %2143 = vmatmul.mubr.bf16.gmra.mxu0 %v2105
        %v2144 = vpop.f32.mrf.mxu0
        %v2145 = vadd.f32 0.0, %v2144
        %v2146 = vpop.f32.mrf.mxu0
        %v2147 = vpop.f32.mrf.mxu0
        %v2148 = vpop.f32.mrf.mxu0
        %2149 = vdwg.mxu0
        %v2150 = vrcp.pop %v2100
        %v2151 = vmul.f32 %v2145, %v2150
        %v2152 = vpack.c.bf16 %v2151, %v2151
        %v2154 = vsel %vm941, %v2152, 0
        %2156 = vmatprep.subr.bf16.mxu0 0
        %2157 = vmatpush1.bf16.msra.mxu0 0
        %2158 = vmatprep.subr.bf16.mxu0 0
        %2159 = vmatpush1.bf16.msra.mxu0 0
        %2160 = vmatprep.subr.bf16.mxu0 0
        %2161 = vmatpush1.bf16.msra.mxu0 0
        %2162 = vmatprep.subr.bf16.mxu0 0
        %2163 = vmatpush1.bf16.msra.mxu0 0
        %2164 = vmatprep.subr.bf16.mxu0 0
        %2165 = vmatpush1.bf16.msra.mxu0 0
        %2166 = vmatprep.subr.bf16.mxu0 0
        %2167 = vmatpush1.bf16.msra.mxu0 0
        %2168 = vmatprep.subr.bf16.mxu0 0
        %2169 = vmatpush1.bf16.msra.mxu0 0
        %2170 = vmatprep.subr.bf16.mxu0 0
        %2171 = vmatpush1.bf16.msra.mxu0 %v1535
        %2172 = vmatprep.subr.bf16.mxu0 0
        %2173 = vmatpush2.bf16.msra.mxu0 0
        %2174 = vmatprep.subr.bf16.mxu0 0
        %2175 = vmatpush2.bf16.msra.mxu0 0
        %2176 = vmatprep.subr.bf16.mxu0 0
        %2177 = vmatpush2.bf16.msra.mxu0 0
        %2178 = vmatprep.subr.bf16.mxu0 0
        %2179 = vmatpush2.bf16.msra.mxu0 0
        %2180 = vmatprep.subr.bf16.mxu0 0
        %2181 = vmatpush2.bf16.msra.mxu0 0
        %2182 = vmatprep.subr.bf16.mxu0 0
        %2183 = vmatpush2.bf16.msra.mxu0 0
        %2184 = vmatprep.subr.bf16.mxu0 0
        %2185 = vmatpush2.bf16.msra.mxu0 0
        %2186 = vmatprep.subr.bf16.mxu0 0
        %2187 = vmatpush2.bf16.msra.mxu0 0
        %2188 = vmatprep.mubr.bf16.mxu0 0
        %2189 = vmatmul.mubr.bf16.gmra.mxu0 %v2154
        %v2190 = vpop.f32.mrf.mxu0
        %v2191 = vadd.f32 0.0, %v2190
        %v2192 = vpop.f32.mrf.mxu0
        %v2193 = vpop.f32.mrf.mxu0
        %v2194 = vpop.f32.mrf.mxu0
        %2195 = vdwg.mxu0
        %v2196 = vadd.f32 %v2041, %v2191
        %v2197 = vadd.f32 %v765, %v1580
        %v2198 = vadd.f32 %v766, %v2196
        %v2199 = vld [vmem:[%s736] sm:$0x1]
        %v2201 = vlaneseq
        %v2202 = vshrl.u32 %v2201, 7
        %v2203 = vsub.s32 0, %v2202
        %v2204 = vrot.slane %v2199, %v2203
        %v2206 = vadd.f32 %v2197, %v2204
        %v2207 = vadd.f32 %v2198, %v2204
        %v2208 = vld [vmem:[%s739] sm:$0x1]
        %v2209 = vld [vmem:[%s742] sm:$0x1]
        %v2210 = vsel %vm769, %v2206, 0.0
        %2211 = vadd.xlane.f32.xlu0 %v2210
        %v2212 = vpop.xlane.xlu0 %2211
        %v2213 = vsel %vm769, %v2207, 0.0
        %2214 = vadd.xlane.f32.xlu0 %v2213
        %v2215 = vpop.xlane.xlu0 %2214
        %v2216 = vmul.f32 %v2212, %v776
        %v2217 = vmul.f32 %v2215, %v776
        %v2218 = vsub.f32 %v2206, %v2216
        %v2219 = vsub.f32 %v2207, %v2217
        %v2220 = vmul.f32 %v2218, %v2218
        %v2221 = vmul.f32 %v2219, %v2219
        %v2222 = vsel %vm769, %v2220, 0.0
        %2223 = vadd.xlane.f32.xlu0 %v2222
        %v2224 = vpop.xlane.xlu0 %2223
        %v2225 = vsel %vm769, %v2221, 0.0
        %2226 = vadd.xlane.f32.xlu0 %v2225
        %v2227 = vpop.xlane.xlu0 %2226
        %v2228 = vmul.f32 %v2224, %v776
        %v2229 = vmul.f32 %v2227, %v776
        %v2230 = vadd.f32 %v2228, 1e-05
        %v2231 = vadd.f32 %v2229, 1e-05
        %v2232 = vrsqrt.pop %v2230
        %v2233 = vrsqrt.pop %v2231
        %v2234 = vmul.f32 %v2218, %v2232
        %v2235 = vmul.f32 %v2219, %v2233
        %v2237 = vlaneseq
        %v2238 = vshrl.u32 %v2237, 7
        %v2239 = vsub.s32 0, %v2238
        %v2240 = vrot.slane %v2208, %v2239
        %v2242 = vmul.f32 %v2234, %v2240
        %v2243 = vmul.f32 %v2235, %v2240
        %v2245 = vlaneseq
        %v2246 = vshrl.u32 %v2245, 7
        %v2247 = vsub.s32 0, %v2246
        %v2248 = vrot.slane %v2209, %v2247
        %v2250 = vadd.f32 %v2242, %v2248
        %v2251 = vadd.f32 %v2243, %v2248
        %v2252 = vpack.c.bf16 %v2251, %v2250
        %v2253 = vld [vmem:[%s635] sm:$0xf]
        %v2254 = vld [vmem:[%s635 + $0x4] sm:$0xf]
        %v2255 = vld [vmem:[%s635 + $0x8] sm:$0xf]
        %v2256 = vld [vmem:[%s635 + $0xc] sm:$0xf]
        %v2257 = vld [vmem:[%s635 + $0x10] sm:$0xf]
        %v2258 = vld [vmem:[%s635 + $0x14] sm:$0xf]
        %v2259 = vld [vmem:[%s635 + $0x18] sm:$0xf]
        %v2260 = vld [vmem:[%s635 + $0x1c] sm:$0xf]
        %v2261 = vld [vmem:[%s745] sm:$0x1]
        %v2263 = vlaneseq
        %v2264 = vshrl.u32 %v2263, 7
        %v2265 = vsub.s32 0, %v2264
        %v2266 = vrot.slane %v2261, %v2265
        %v2276 = vunpack.c.l.b16 %v2253
        %v2277 = vunpack.c.l.b16 %v2254
        %v2278 = vunpack.c.l.b16 %v2255
        %v2279 = vunpack.c.l.b16 %v2256
        %v2280 = vunpack.c.l.b16 %v2257
        %v2281 = vunpack.c.l.b16 %v2258
        %v2282 = vunpack.c.l.b16 %v2259
        %v2283 = vunpack.c.l.b16 %v2260
        %v2284 = vpack.c.b16 %v2277, %v2276
        %v2285 = vpack.c.b16 %v2279, %v2278
        %v2286 = vpack.c.b16 %v2281, %v2280
        %v2287 = vpack.c.b16 %v2283, %v2282
        %v2293 = vsel %vm769, %v2252, 0
        %2295 = vmatprep.subr.bf16.mxu0 0
        %2296 = vmatpush1.bf16.msra.mxu0 0
        %2297 = vmatprep.subr.bf16.mxu0 0
        %2298 = vmatpush1.bf16.msra.mxu0 0
        %2299 = vmatprep.subr.bf16.mxu0 0
        %2300 = vmatpush1.bf16.msra.mxu0 0
        %2301 = vmatprep.subr.bf16.mxu0 0
        %2302 = vmatpush1.bf16.msra.mxu0 0
        %2303 = vmatprep.subr.bf16.mxu0 0
        %2304 = vmatpush1.bf16.msra.mxu0 %v2287
        %2305 = vmatprep.subr.bf16.mxu0 0
        %2306 = vmatpush1.bf16.msra.mxu0 %v2286
        %2307 = vmatprep.subr.bf16.mxu0 0
        %2308 = vmatpush1.bf16.msra.mxu0 %v2285
        %2309 = vmatprep.subr.bf16.mxu0 0
        %2310 = vmatpush1.bf16.msra.mxu0 %v2284
        %2311 = vmatprep.subr.bf16.mxu0 0
        %2312 = vmatpush2.bf16.msra.mxu0 0
        %2313 = vmatprep.subr.bf16.mxu0 0
        %2314 = vmatpush2.bf16.msra.mxu0 0
        %2315 = vmatprep.subr.bf16.mxu0 0
        %2316 = vmatpush2.bf16.msra.mxu0 0
        %2317 = vmatprep.subr.bf16.mxu0 0
        %2318 = vmatpush2.bf16.msra.mxu0 0
        %2319 = vmatprep.subr.bf16.mxu0 0
        %2320 = vmatpush2.bf16.msra.mxu0 0
        %2321 = vmatprep.subr.bf16.mxu0 0
        %2322 = vmatpush2.bf16.msra.mxu0 0
        %2323 = vmatprep.subr.bf16.mxu0 0
        %2324 = vmatpush2.bf16.msra.mxu0 0
        %2325 = vmatprep.subr.bf16.mxu0 0
        %2326 = vmatpush2.bf16.msra.mxu0 0
        %2327 = vmatprep.mubr.bf16.mxu0 0
        %2328 = vmatmul.mubr.bf16.gmra.mxu0 %v2293
        %v2329 = vpop.f32.mrf.mxu0
        %v2330 = vadd.f32 %v2266, %v2329
        %v2331 = vpop.f32.mrf.mxu0
        %v2332 = vpop.f32.mrf.mxu0
        %v2333 = vadd.f32 %v2266, %v2332
        %v2334 = vpop.f32.mrf.mxu0
        %2335 = vdwg.mxu0
        %v2336 = vmul.f32 %v2330, 0.5
        %v2337 = vmul.f32 %v2333, 0.5
        %v2338 = vmul.f32 %v2330, 0.70710677
        %v2339 = vmul.f32 %v2333, 0.70710677
        %v2340 = verf.f32.pop %v2338
        %v2341 = verf.f32.pop %v2339
        %v2342 = vadd.f32 %v2340, 1.0
        %v2343 = vadd.f32 %v2341, 1.0
        %v2344 = vmul.f32 %v2336, %v2342
        %v2345 = vmul.f32 %v2337, %v2343
        %v2346 = vpack.c.bf16 %v2345, %v2344
        %v2347 = vld [vmem:[%s750] sm:$0xf]
        %v2348 = vld [vmem:[%s750 + $0x4] sm:$0xf]
        %v2349 = vld [vmem:[%s750 + $0x8] sm:$0xf]
        %v2350 = vld [vmem:[%s750 + $0xc] sm:$0xf]
        %v2351 = vld [vmem:[%s750 + $0x10] sm:$0xf]
        %v2352 = vld [vmem:[%s750 + $0x14] sm:$0xf]
        %v2353 = vld [vmem:[%s750 + $0x18] sm:$0xf]
        %v2354 = vld [vmem:[%s750 + $0x1c] sm:$0xf]
        %v2355 = vld [vmem:[%s750 + $0x20] sm:$0xf]
        %v2356 = vld [vmem:[%s750 + $0x24] sm:$0xf]
        %v2357 = vld [vmem:[%s750 + $0x28] sm:$0xf]
        %v2358 = vld [vmem:[%s750 + $0x2c] sm:$0xf]
        %v2359 = vld [vmem:[%s750 + $0x30] sm:$0xf]
        %v2360 = vld [vmem:[%s750 + $0x34] sm:$0xf]
        %v2361 = vld [vmem:[%s750 + $0x38] sm:$0xf]
        %v2362 = vld [vmem:[%s750 + $0x3c] sm:$0xf]
        %v2363 = vld [vmem:[%s753] sm:$0x1]
        %v2365 = vlaneseq
        %v2366 = vshrl.u32 %v2365, 7
        %v2367 = vsub.s32 0, %v2366
        %v2368 = vrot.slane %v2363, %v2367
        %v2386 = vunpack.c.l.b16 %v2347
        %v2387 = vunpack.c.l.b16 %v2348
        %v2388 = vunpack.c.l.b16 %v2349
        %v2389 = vunpack.c.l.b16 %v2350
        %v2390 = vunpack.c.l.b16 %v2351
        %v2391 = vunpack.c.l.b16 %v2352
        %v2392 = vunpack.c.l.b16 %v2353
        %v2393 = vunpack.c.l.b16 %v2354
        %v2394 = vunpack.c.l.b16 %v2355
        %v2395 = vunpack.c.l.b16 %v2356
        %v2396 = vunpack.c.l.b16 %v2357
        %v2397 = vunpack.c.l.b16 %v2358
        %v2398 = vunpack.c.l.b16 %v2359
        %v2399 = vunpack.c.l.b16 %v2360
        %v2400 = vunpack.c.l.b16 %v2361
        %v2401 = vunpack.c.l.b16 %v2362
        %v2402 = vpack.c.b16 %v2387, %v2386
        %v2403 = vpack.c.b16 %v2389, %v2388
        %v2404 = vpack.c.b16 %v2391, %v2390
        %v2405 = vpack.c.b16 %v2393, %v2392
        %v2406 = vpack.c.b16 %v2395, %v2394
        %v2407 = vpack.c.b16 %v2397, %v2396
        %v2408 = vpack.c.b16 %v2399, %v2398
        %v2409 = vpack.c.b16 %v2401, %v2400
        %2418 = vmatprep.subr.bf16.mxu0 0
        %2419 = vmatpush1.bf16.msra.mxu0 %v2409
        %2420 = vmatprep.subr.bf16.mxu0 0
        %2421 = vmatpush1.bf16.msra.mxu0 %v2408
        %2422 = vmatprep.subr.bf16.mxu0 0
        %2423 = vmatpush1.bf16.msra.mxu0 %v2407
        %2424 = vmatprep.subr.bf16.mxu0 0
        %2425 = vmatpush1.bf16.msra.mxu0 %v2406
        %2426 = vmatprep.subr.bf16.mxu0 0
        %2427 = vmatpush1.bf16.msra.mxu0 %v2405
        %2428 = vmatprep.subr.bf16.mxu0 0
        %2429 = vmatpush1.bf16.msra.mxu0 %v2404
        %2430 = vmatprep.subr.bf16.mxu0 0
        %2431 = vmatpush1.bf16.msra.mxu0 %v2403
        %2432 = vmatprep.subr.bf16.mxu0 0
        %2433 = vmatpush1.bf16.msra.mxu0 %v2402
        %2434 = vmatprep.subr.bf16.mxu0 0
        %2435 = vmatpush2.bf16.msra.mxu0 0
        %2436 = vmatprep.subr.bf16.mxu0 0
        %2437 = vmatpush2.bf16.msra.mxu0 0
        %2438 = vmatprep.subr.bf16.mxu0 0
        %2439 = vmatpush2.bf16.msra.mxu0 0
        %2440 = vmatprep.subr.bf16.mxu0 0
        %2441 = vmatpush2.bf16.msra.mxu0 0
        %2442 = vmatprep.subr.bf16.mxu0 0
        %2443 = vmatpush2.bf16.msra.mxu0 0
        %2444 = vmatprep.subr.bf16.mxu0 0
        %2445 = vmatpush2.bf16.msra.mxu0 0
        %2446 = vmatprep.subr.bf16.mxu0 0
        %2447 = vmatpush2.bf16.msra.mxu0 0
        %2448 = vmatprep.subr.bf16.mxu0 0
        %2449 = vmatpush2.bf16.msra.mxu0 0
        %2450 = vmatprep.mubr.bf16.mxu0 0
        %2451 = vmatmul.mubr.bf16.gmra.mxu0 %v2346
        %v2452 = vpop.f32.mrf.mxu0
        %v2453 = vadd.f32 %v2368, %v2452
        %v2454 = vpop.f32.mrf.mxu0
        %v2455 = vpop.f32.mrf.mxu0
        %v2456 = vadd.f32 %v2368, %v2455
        %v2457 = vpop.f32.mrf.mxu0
        %2458 = vdwg.mxu0
        %v2459 = vadd.f32 %v2206, %v2453
        %v2460 = vadd.f32 %v2207, %v2456
        %2461 = vst.msk [vmem:[#allocation2] sm:$0xff] %vm769, %v2459
        %2462 = vst.msk [vmem:[#allocation2 + $0x8] sm:$0xff] %vm769, %v2460
        %p2463 = scmp.eq.s32.totalorder %s39, 1
        // Predicated region
        $region101: #{tpu_custom_call.1} parent=79 // pred_check
          %p2464 = pneg %p2463
        $region102: #{tpu_custom_call.1} parent=79 // pred_check_branch
          %2466 = sbr.rel (%p2464) target = $region104
        $region103: #{tpu_custom_call.1} parent=79 // pred_region
          %v2467 = vld [vmem:[%s13] sm:$0x1]
          %v2468 = vld [vmem:[%s14] sm:$0x1]
          %v2469 = vsel %vm769, %v2459, 0.0
          %2470 = vadd.xlane.f32.xlu0 %v2469
          %v2471 = vpop.xlane.xlu0 %2470
          %v2472 = vsel %vm769, %v2460, 0.0
          %2473 = vadd.xlane.f32.xlu0 %v2472
          %v2474 = vpop.xlane.xlu0 %2473
          %v2475 = vmul.f32 %v2471, %v776
          %v2476 = vmul.f32 %v2474, %v776
          %v2477 = vsub.f32 %v2459, %v2475
          %v2478 = vsub.f32 %v2460, %v2476
          %v2479 = vmul.f32 %v2477, %v2477
          %v2480 = vmul.f32 %v2478, %v2478
          %v2481 = vsel %vm769, %v2479, 0.0
          %2482 = vadd.xlane.f32.xlu0 %v2481
          %v2483 = vpop.xlane.xlu0 %2482
          %v2484 = vsel %vm769, %v2480, 0.0
          %2485 = vadd.xlane.f32.xlu0 %v2484
          %v2486 = vpop.xlane.xlu0 %2485
          %v2487 = vmul.f32 %v2483, %v776
          %v2488 = vmul.f32 %v2486, %v776
          %v2489 = vadd.f32 %v2487, 1e-05
          %v2490 = vadd.f32 %v2488, 1e-05
          %v2491 = vrsqrt.pop %v2489
          %v2492 = vrsqrt.pop %v2490
          %v2493 = vmul.f32 %v2477, %v2491
          %v2494 = vmul.f32 %v2478, %v2492
          %v2496 = vlaneseq
          %v2497 = vshrl.u32 %v2496, 7
          %v2498 = vsub.s32 0, %v2497
          %v2499 = vrot.slane %v2467, %v2498
          %v2501 = vmul.f32 %v2493, %v2499
          %v2502 = vmul.f32 %v2494, %v2499
          %v2504 = vlaneseq
          %v2505 = vshrl.u32 %v2504, 7
          %v2506 = vsub.s32 0, %v2505
          %v2507 = vrot.slane %v2468, %v2506
          %v2509 = vadd.f32 %v2501, %v2507
          %v2510 = vadd.f32 %v2502, %v2507
          %v2511 = vpack.c.bf16 %v2509, %v2509
          %v2512 = vpack.c.bf16 %v2510, %v2510
          %vm2513 = vcmask 519168
          %2514 = vst.msk [vmem:[#allocation11] sm:$0xf] %vm2513, %v2511
          %2515 = vst.msk [vmem:[#allocation11 + $0x4] sm:$0xf] %vm2513, %v2512
        $region104: #{tpu_custom_call.1} parent=79 // pred_fallthru
          _
        // Predicated region
        $region105: #{tpu_custom_call.1} parent=79 // pred_check
          %p2516 = pneg %p444
        $region106: #{tpu_custom_call.1} parent=79 // pred_check_branch
          %2518 = sbr.rel (%p2516) target = $region108
        $region107: #{tpu_custom_call.1} parent=79 // pred_region
          %s2519 = smul.u32 2, %s38
          %s2521 = ssub.s32 128, 128
          %2522 = vsyncadd [#allocation5], %s2521
          %s2523 = smul.addr %s2519, 64
          %s2524 = scalar_lea.hbm %s15, %s2523
          %s2525 = sshll.u32 [#allocation11], 4
          %s2526 = int_to_ptr.vmem [resolvable:$true] %s2525
          %2531 = dma.vmem_to_hbm [thread:$0]  %s2526, 128, %s2524, [#allocation5], 64, 64, 4
        $region108: #{tpu_custom_call.1} parent=79 // pred_fallthru
          _
        // Predicated region
        $region109: #{tpu_custom_call.1} parent=79 // pred_check
          %p2532 = pneg %p444
        $region110: #{tpu_custom_call.1} parent=79 // pred_check_branch
          %2534 = sbr.rel (%p2532) target = $region112
        $region111: #{tpu_custom_call.1} parent=79 // pred_region
          %2535 = dma.done [#allocation5], 128
        $region112: #{tpu_custom_call.1} parent=79 // pred_fallthru
          _
      $region80: #{tpu_custom_call.1} parent=5 // pred_fallthru
        _
      %p2536 = scmp.le.s32.totalorder 2, %s29
      // Predicated region
      $region113: #{tpu_custom_call.1} parent=5 // pred_check
        %p2537 = pneg %p2536
      $region114: #{tpu_custom_call.1} parent=5 // pred_check_branch
        %2539 = sbr.rel (%p2537) target = $region116
      $region115: #{tpu_custom_call.1} parent=5 // pred_region
        %s2540 = ssub.s32 %s29, 2
      $region116: #{tpu_custom_call.1} parent=5 // pred_fallthru
        _
    $region6: #{tpu_custom_call.1} parent=1 // loop_footer
      %s33 = sadd.s32 1, %s29
    $region7: #{tpu_custom_call.1} parent=1 // loop_footer_branch
      %28 = sbr.rel target = $region3
    $region8: #{tpu_custom_call.1} parent=1 // loop_exit
      _
    %2541 = vsyncpa [#allocation4], 1
    %s2542 = scalar_lea.sflag [#allocation4], 1
    %2543 = vsyncpa %s2542, 1
    %2544 = vsyncpa [#allocation7], 1
    %s2545 = scalar_lea.sflag [#allocation7], 1
    %2546 = vsyncpa %s2545, 1
    %2547 = vsyncpa [#allocation10], 1
    %s2548 = scalar_lea.sflag [#allocation10], 1
    %2549 = vsyncpa %s2548, 1
    %2550 = vsyncpa [#allocation5], 1
    %s2551 = scalar_lea.sflag [#allocation5], 1
    %2552 = vsyncpa %s2551, 1

</llo_original>
